<compile_context>
chip_gen: v7x
topology: tpu7x:2x2x1
jax: 0.10.0
libtpu: 0.0.40
codegen_flags: <defaults>
</compile_context>

<pallas_src>
from functools import partial

import numpy as np

import jax
import jax.numpy as jnp
from jax.experimental import pallas as pl
from jax.experimental.pallas import tpu as pltpu


# ----------------------------------------------------------------------------
# Pallas kernel: fc_in, fully-unrolled RK4 ODE integration and fc_out, all in
# VMEM (shapes are small, so full-array blocks / no grid tiling).
# ----------------------------------------------------------------------------
def _neural_ode_kernel(dts,        # tuple of Python floats (compile-time)
                       x_ref,      # (B, Din)     VMEM  (last-seq rows only)
                       win_ref,    # (Din, H)     VMEM
                       bin_ref,    # (1, H)       VMEM
                       wode_ref,   # (H, H)       VMEM
                       bode_ref,   # (1, H)       VMEM
                       wout_ref,   # (H, Dout)    VMEM
                       bout_ref,   # (1, Dout)    VMEM
                       out_ref):   # (B, Dout)    VMEM
    x = x_ref[...]
    B = x.shape[0]
    H = wode_ref.shape[1]

    # h0 = fc_in(x)  (only on the rows that actually reach fc_out)
    h = jnp.dot(x, win_ref[...], preferred_element_type=jnp.float32) + bin_ref[...]

    w_ode = wode_ref[...]
    # Hoist the bias broadcast out of the integration loop (no CSE of
    # broadcast_in_dim -> otherwise 4 * n_steps broadcasts on the crit path).
    b_ode = jnp.broadcast_to(bode_ref[...], (B, H))

    def f(v):
        # ODEFunc.forward: relu(fc(v))   (t-independent)
        return jnp.maximum(
            jnp.dot(v, w_ode, preferred_element_type=jnp.float32) + b_ode, 0.0)

    # Fully-unrolled classical RK4 over the fixed time grid.  dt, dt/2 and dt/6
    # are Python floats -> folded into vector immediates at compile time.
    for dt in dts:
        half_dt = 0.5 * dt
        dt_over_6 = dt / 6.0
        k1 = f(h)
        k2 = f(h + half_dt * k1)
        k3 = f(h + half_dt * k2)
        k4 = f(h + dt * k3)
        h = h + dt_over_6 * (k1 + 2.0 * (k2 + k3) + k4)

    # fc_out
    out_ref[...] = (jnp.dot(h, wout_ref[...], preferred_element_type=jnp.float32)
                    + bout_ref[...])


def neural_ode_forward(x, params, t):
    """x: (B, S, Din) float32 -> (B, Dout) float32."""
    B, S, Din = x.shape
    H = params["w_in"].shape[1]
    Dout = params["w_out"].shape[1]

    # Only the last sequence step of every batch reaches fc_out and the ODE
    # evolves each row independently, so integrating only the last-seq rows is
    # mathematically identical to the PyTorch forward (S x less work).
    x_last = x[:, -1, :].astype(jnp.float32)

    # Host-side (compile-time) precompute of the RK4 step sizes.
    t_np = np.asarray(jax.device_get(t), dtype=np.float32)
    dts = tuple(float(d) for d in (t_np[1:] - t_np[:-1]))
    n_steps = len(dts)

    flops = (2 * B * Din * H                   # fc_in
             + 4 * n_steps * 2 * B * H * H     # RK4: 4 matmuls / step
             + 2 * B * H * Dout)               # fc_out
    bytes_accessed = 4 * (B * Din + Din * H + H + H * H + H
                          + H * Dout + Dout + B * Dout)

    kernel = partial(_neural_ode_kernel, dts)
    return pl.pallas_call(
        kernel,
        out_shape=jax.ShapeDtypeStruct((B, Dout), jnp.float32),
        in_specs=[pl.BlockSpec(memory_space=pltpu.MemorySpace.VMEM)] * 7,
        out_specs=pl.BlockSpec(memory_space=pltpu.MemorySpace.VMEM),
        cost_estimate=pl.CostEstimate(flops=flops, transcendentals=0,
                                      bytes_accessed=bytes_accessed),
    )(x_last,
      params["w_in"], params["b_in"],
      params["w_ode"], params["b_ode"],
      params["w_out"], params["b_out"])


# ----------------------------------------------------------------------------
# Pure-JAX reference that mirrors the PyTorch forward literally (fc_in on ALL
# B*S rows, integrate all rows, then take the last seq step) with the same
# fixed-grid RK4 -- so it also validates the "integrate only last-seq rows"
# optimization.
# ----------------------------------------------------------------------------
def reference_forward(x, params, t):
    B, S, Din = x.shape
    h = x.reshape(B * S, Din) @ params["w_in"] + params["b_in"]

    def f(h):
        return jnp.maximum(h @ params["w_ode"] + params["b_ode"], 0.0)

    for i in range(t.shape[0] - 1):
        dt = t[i + 1] - t[i]
        k1 = f(h)
        k2 = f(h + 0.5 * dt * k1)
        k3 = f(h + 0.5 * dt * k2)
        k4 = f(h + dt * k3)
        h = h + (dt / 6.0) * (k1 + 2.0 * k2 + 2.0 * k3 + k4)

    h_last = h.reshape(B, S, -1)[:, -1, :]
    return h_last @ params["w_out"] + params["b_out"]


def init_params(key, input_dim, hidden_dim, output_dim):
    """Deterministic init mimicking nn.Linear (uniform +/- 1/sqrt(fan_in))."""
    ks = jax.random.split(key, 6)

    def lin(kw, kb, fan_in, fan_out):
        bound = 1.0 / jnp.sqrt(fan_in)
        w = jax.random.uniform(kw, (fan_in, fan_out), jnp.float32, -bound, bound)
        b = jax.random.uniform(kb, (1, fan_out), jnp.float32, -bound, bound)
        return w, b

    w_in, b_in = lin(ks[0], ks[1], input_dim, hidden_dim)
    w_ode, b_ode = lin(ks[2], ks[3], hidden_dim, hidden_dim)
    w_out, b_out = lin(ks[4], ks[5], hidden_dim, output_dim)
    return dict(w_in=w_in, b_in=b_in, w_ode=w_ode, b_ode=b_ode,
                w_out=w_out, b_out=b_out)


if __name__ == "__main__":
    # Small shapes consistent with the module's forward.
    batch, seq_len, input_dim = 2, 8, 16
    hidden_dim, output_dim = 32, 8

    key = jax.random.PRNGKey(0)
    k_x, k_p = jax.random.split(key)

    x = jax.random.normal(k_x, (batch, seq_len, input_dim), jnp.float32)
    params = init_params(k_p, input_dim, hidden_dim, output_dim)
    t = jnp.linspace(0.0, 1.0, 10, dtype=jnp.float32)  # default_t

    out = neural_ode_forward(x, params, t)
    out = jax.block_until_ready(out)

    ref = reference_forward(x, params, t)
    assert out.shape == (batch, output_dim)
    assert jnp.allclose(out, ref, atol=1e-4, rtol=1e-4), \
        f"max err {jnp.max(jnp.abs(out - ref))}"

    print("KERNEL_OK")
</pallas_src>

<mosaic_0001>
module attributes {stable_mosaic.version = 11 : i64} {
  func.func @_neural_ode_kernel(%arg0: memref<2x16xf32, #tpu.memory_space<vmem>>, %arg1: memref<16x32xf32, #tpu.memory_space<vmem>>, %arg2: memref<1x32xf32, #tpu.memory_space<vmem>>, %arg3: memref<32x32xf32, #tpu.memory_space<vmem>>, %arg4: memref<1x32xf32, #tpu.memory_space<vmem>>, %arg5: memref<32x8xf32, #tpu.memory_space<vmem>>, %arg6: memref<1x8xf32, #tpu.memory_space<vmem>>, %arg7: memref<2x8xf32, #tpu.memory_space<vmem>>) attributes {dimension_semantics = [], scalar_prefetch = 0 : i64, scratch_operands = 0 : i64, tpu.core_type = #tpu.core_type<tc>} {
    %c0 = arith.constant 0 : index
    %c0_0 = arith.constant 0 : index
    %0 = vector.load %arg0[%c0, %c0_0] : memref<2x16xf32, #tpu.memory_space<vmem>>, vector<2x16xf32>
    %c0_1 = arith.constant 0 : index
    %c0_2 = arith.constant 0 : index
    %1 = vector.load %arg1[%c0_1, %c0_2] : memref<16x32xf32, #tpu.memory_space<vmem>>, vector<16x32xf32>
    %cst = arith.constant dense<0.000000e+00> : vector<2x32xf32>
    %2 = tpu.matmul %0, %1, %cst {dimension_numbers = #tpu.dot_dimension_numbers<[1], [0], [0], [1], [0, 0, 1, 1], [], []>} : vector<2x16xf32>, vector<16x32xf32>, vector<2x32xf32> -> vector<2x32xf32>
    %c0_3 = arith.constant 0 : index
    %c0_4 = arith.constant 0 : index
    %3 = vector.load %arg2[%c0_3, %c0_4] : memref<1x32xf32, #tpu.memory_space<vmem>>, vector<1x32xf32>
    %4 = vector.broadcast %3 : vector<1x32xf32> to vector<2x32xf32>
    %5 = arith.addf %2, %4 : vector<2x32xf32>
    %c0_5 = arith.constant 0 : index
    %c0_6 = arith.constant 0 : index
    %6 = vector.load %arg3[%c0_5, %c0_6] : memref<32x32xf32, #tpu.memory_space<vmem>>, vector<32x32xf32>
    %c0_7 = arith.constant 0 : index
    %c0_8 = arith.constant 0 : index
    %7 = vector.load %arg4[%c0_7, %c0_8] : memref<1x32xf32, #tpu.memory_space<vmem>>, vector<1x32xf32>
    %8 = vector.shape_cast %7 : vector<1x32xf32> to vector<1x32xf32>
    %9 = vector.broadcast %8 : vector<1x32xf32> to vector<2x32xf32>
    %cst_9 = arith.constant dense<0.000000e+00> : vector<2x32xf32>
    %10 = tpu.matmul %5, %6, %cst_9 {dimension_numbers = #tpu.dot_dimension_numbers<[1], [0], [0], [1], [0, 0, 1, 1], [], []>} : vector<2x32xf32>, vector<32x32xf32>, vector<2x32xf32> -> vector<2x32xf32>
    %11 = arith.addf %10, %9 : vector<2x32xf32>
    %cst_10 = arith.constant 0.000000e+00 : f32
    %12 = vector.broadcast %cst_10 : f32 to vector<2x32xf32>
    %13 = arith.maximumf %11, %12 : vector<2x32xf32>
    %cst_11 = arith.constant 0.055555556 : f32
    %14 = vector.broadcast %cst_11 : f32 to vector<2x32xf32>
    %15 = arith.mulf %14, %13 : vector<2x32xf32>
    %16 = arith.addf %5, %15 : vector<2x32xf32>
    %cst_12 = arith.constant dense<0.000000e+00> : vector<2x32xf32>
    %17 = tpu.matmul %16, %6, %cst_12 {dimension_numbers = #tpu.dot_dimension_numbers<[1], [0], [0], [1], [0, 0, 1, 1], [], []>} : vector<2x32xf32>, vector<32x32xf32>, vector<2x32xf32> -> vector<2x32xf32>
    %18 = arith.addf %17, %9 : vector<2x32xf32>
    %cst_13 = arith.constant 0.000000e+00 : f32
    %19 = vector.broadcast %cst_13 : f32 to vector<2x32xf32>
    %20 = arith.maximumf %18, %19 : vector<2x32xf32>
    %cst_14 = arith.constant 0.055555556 : f32
    %21 = vector.broadcast %cst_14 : f32 to vector<2x32xf32>
    %22 = arith.mulf %21, %20 : vector<2x32xf32>
    %23 = arith.addf %5, %22 : vector<2x32xf32>
    %cst_15 = arith.constant dense<0.000000e+00> : vector<2x32xf32>
    %24 = tpu.matmul %23, %6, %cst_15 {dimension_numbers = #tpu.dot_dimension_numbers<[1], [0], [0], [1], [0, 0, 1, 1], [], []>} : vector<2x32xf32>, vector<32x32xf32>, vector<2x32xf32> -> vector<2x32xf32>
    %25 = arith.addf %24, %9 : vector<2x32xf32>
    %cst_16 = arith.constant 0.000000e+00 : f32
    %26 = vector.broadcast %cst_16 : f32 to vector<2x32xf32>
    %27 = arith.maximumf %25, %26 : vector<2x32xf32>
    %cst_17 = arith.constant 0.111111112 : f32
    %28 = vector.broadcast %cst_17 : f32 to vector<2x32xf32>
    %29 = arith.mulf %28, %27 : vector<2x32xf32>
    %30 = arith.addf %5, %29 : vector<2x32xf32>
    %cst_18 = arith.constant dense<0.000000e+00> : vector<2x32xf32>
    %31 = tpu.matmul %30, %6, %cst_18 {dimension_numbers = #tpu.dot_dimension_numbers<[1], [0], [0], [1], [0, 0, 1, 1], [], []>} : vector<2x32xf32>, vector<32x32xf32>, vector<2x32xf32> -> vector<2x32xf32>
    %32 = arith.addf %31, %9 : vector<2x32xf32>
    %cst_19 = arith.constant 0.000000e+00 : f32
    %33 = vector.broadcast %cst_19 : f32 to vector<2x32xf32>
    %34 = arith.maximumf %32, %33 : vector<2x32xf32>
    %35 = arith.addf %20, %27 : vector<2x32xf32>
    %cst_20 = arith.constant 2.000000e+00 : f32
    %36 = vector.broadcast %cst_20 : f32 to vector<2x32xf32>
    %37 = arith.mulf %36, %35 : vector<2x32xf32>
    %38 = arith.addf %13, %37 : vector<2x32xf32>
    %39 = arith.addf %38, %34 : vector<2x32xf32>
    %cst_21 = arith.constant 0.0185185187 : f32
    %40 = vector.broadcast %cst_21 : f32 to vector<2x32xf32>
    %41 = arith.mulf %40, %39 : vector<2x32xf32>
    %42 = arith.addf %5, %41 : vector<2x32xf32>
    %cst_22 = arith.constant dense<0.000000e+00> : vector<2x32xf32>
    %43 = tpu.matmul %42, %6, %cst_22 {dimension_numbers = #tpu.dot_dimension_numbers<[1], [0], [0], [1], [0, 0, 1, 1], [], []>} : vector<2x32xf32>, vector<32x32xf32>, vector<2x32xf32> -> vector<2x32xf32>
    %44 = arith.addf %43, %9 : vector<2x32xf32>
    %cst_23 = arith.constant 0.000000e+00 : f32
    %45 = vector.broadcast %cst_23 : f32 to vector<2x32xf32>
    %46 = arith.maximumf %44, %45 : vector<2x32xf32>
    %cst_24 = arith.constant 0.055555556 : f32
    %47 = vector.broadcast %cst_24 : f32 to vector<2x32xf32>
    %48 = arith.mulf %47, %46 : vector<2x32xf32>
    %49 = arith.addf %42, %48 : vector<2x32xf32>
    %cst_25 = arith.constant dense<0.000000e+00> : vector<2x32xf32>
    %50 = tpu.matmul %49, %6, %cst_25 {dimension_numbers = #tpu.dot_dimension_numbers<[1], [0], [0], [1], [0, 0, 1, 1], [], []>} : vector<2x32xf32>, vector<32x32xf32>, vector<2x32xf32> -> vector<2x32xf32>
    %51 = arith.addf %50, %9 : vector<2x32xf32>
    %cst_26 = arith.constant 0.000000e+00 : f32
    %52 = vector.broadcast %cst_26 : f32 to vector<2x32xf32>
    %53 = arith.maximumf %51, %52 : vector<2x32xf32>
    %cst_27 = arith.constant 0.055555556 : f32
    %54 = vector.broadcast %cst_27 : f32 to vector<2x32xf32>
    %55 = arith.mulf %54, %53 : vector<2x32xf32>
    %56 = arith.addf %42, %55 : vector<2x32xf32>
    %cst_28 = arith.constant dense<0.000000e+00> : vector<2x32xf32>
    %57 = tpu.matmul %56, %6, %cst_28 {dimension_numbers = #tpu.dot_dimension_numbers<[1], [0], [0], [1], [0, 0, 1, 1], [], []>} : vector<2x32xf32>, vector<32x32xf32>, vector<2x32xf32> -> vector<2x32xf32>
    %58 = arith.addf %57, %9 : vector<2x32xf32>
    %cst_29 = arith.constant 0.000000e+00 : f32
    %59 = vector.broadcast %cst_29 : f32 to vector<2x32xf32>
    %60 = arith.maximumf %58, %59 : vector<2x32xf32>
    %cst_30 = arith.constant 0.111111112 : f32
    %61 = vector.broadcast %cst_30 : f32 to vector<2x32xf32>
    %62 = arith.mulf %61, %60 : vector<2x32xf32>
    %63 = arith.addf %42, %62 : vector<2x32xf32>
    %cst_31 = arith.constant dense<0.000000e+00> : vector<2x32xf32>
    %64 = tpu.matmul %63, %6, %cst_31 {dimension_numbers = #tpu.dot_dimension_numbers<[1], [0], [0], [1], [0, 0, 1, 1], [], []>} : vector<2x32xf32>, vector<32x32xf32>, vector<2x32xf32> -> vector<2x32xf32>
    %65 = arith.addf %64, %9 : vector<2x32xf32>
    %cst_32 = arith.constant 0.000000e+00 : f32
    %66 = vector.broadcast %cst_32 : f32 to vector<2x32xf32>
    %67 = arith.maximumf %65, %66 : vector<2x32xf32>
    %68 = arith.addf %53, %60 : vector<2x32xf32>
    %cst_33 = arith.constant 2.000000e+00 : f32
    %69 = vector.broadcast %cst_33 : f32 to vector<2x32xf32>
    %70 = arith.mulf %69, %68 : vector<2x32xf32>
    %71 = arith.addf %46, %70 : vector<2x32xf32>
    %72 = arith.addf %71, %67 : vector<2x32xf32>
    %cst_34 = arith.constant 0.0185185187 : f32
    %73 = vector.broadcast %cst_34 : f32 to vector<2x32xf32>
    %74 = arith.mulf %73, %72 : vector<2x32xf32>
    %75 = arith.addf %42, %74 : vector<2x32xf32>
    %cst_35 = arith.constant dense<0.000000e+00> : vector<2x32xf32>
    %76 = tpu.matmul %75, %6, %cst_35 {dimension_numbers = #tpu.dot_dimension_numbers<[1], [0], [0], [1], [0, 0, 1, 1], [], []>} : vector<2x32xf32>, vector<32x32xf32>, vector<2x32xf32> -> vector<2x32xf32>
    %77 = arith.addf %76, %9 : vector<2x32xf32>
    %cst_36 = arith.constant 0.000000e+00 : f32
    %78 = vector.broadcast %cst_36 : f32 to vector<2x32xf32>
    %79 = arith.maximumf %77, %78 : vector<2x32xf32>
    %cst_37 = arith.constant 0.0555555597 : f32
    %80 = vector.broadcast %cst_37 : f32 to vector<2x32xf32>
    %81 = arith.mulf %80, %79 : vector<2x32xf32>
    %82 = arith.addf %75, %81 : vector<2x32xf32>
    %cst_38 = arith.constant dense<0.000000e+00> : vector<2x32xf32>
    %83 = tpu.matmul %82, %6, %cst_38 {dimension_numbers = #tpu.dot_dimension_numbers<[1], [0], [0], [1], [0, 0, 1, 1], [], []>} : vector<2x32xf32>, vector<32x32xf32>, vector<2x32xf32> -> vector<2x32xf32>
    %84 = arith.addf %83, %9 : vector<2x32xf32>
    %cst_39 = arith.constant 0.000000e+00 : f32
    %85 = vector.broadcast %cst_39 : f32 to vector<2x32xf32>
    %86 = arith.maximumf %84, %85 : vector<2x32xf32>
    %cst_40 = arith.constant 0.0555555597 : f32
    %87 = vector.broadcast %cst_40 : f32 to vector<2x32xf32>
    %88 = arith.mulf %87, %86 : vector<2x32xf32>
    %89 = arith.addf %75, %88 : vector<2x32xf32>
    %cst_41 = arith.constant dense<0.000000e+00> : vector<2x32xf32>
    %90 = tpu.matmul %89, %6, %cst_41 {dimension_numbers = #tpu.dot_dimension_numbers<[1], [0], [0], [1], [0, 0, 1, 1], [], []>} : vector<2x32xf32>, vector<32x32xf32>, vector<2x32xf32> -> vector<2x32xf32>
    %91 = arith.addf %90, %9 : vector<2x32xf32>
    %cst_42 = arith.constant 0.000000e+00 : f32
    %92 = vector.broadcast %cst_42 : f32 to vector<2x32xf32>
    %93 = arith.maximumf %91, %92 : vector<2x32xf32>
    %cst_43 = arith.constant 0.111111119 : f32
    %94 = vector.broadcast %cst_43 : f32 to vector<2x32xf32>
    %95 = arith.mulf %94, %93 : vector<2x32xf32>
    %96 = arith.addf %75, %95 : vector<2x32xf32>
    %cst_44 = arith.constant dense<0.000000e+00> : vector<2x32xf32>
    %97 = tpu.matmul %96, %6, %cst_44 {dimension_numbers = #tpu.dot_dimension_numbers<[1], [0], [0], [1], [0, 0, 1, 1], [], []>} : vector<2x32xf32>, vector<32x32xf32>, vector<2x32xf32> -> vector<2x32xf32>
    %98 = arith.addf %97, %9 : vector<2x32xf32>
    %cst_45 = arith.constant 0.000000e+00 : f32
    %99 = vector.broadcast %cst_45 : f32 to vector<2x32xf32>
    %100 = arith.maximumf %98, %99 : vector<2x32xf32>
    %101 = arith.addf %86, %93 : vector<2x32xf32>
    %cst_46 = arith.constant 2.000000e+00 : f32
    %102 = vector.broadcast %cst_46 : f32 to vector<2x32xf32>
    %103 = arith.mulf %102, %101 : vector<2x32xf32>
    %104 = arith.addf %79, %103 : vector<2x32xf32>
    %105 = arith.addf %104, %100 : vector<2x32xf32>
    %cst_47 = arith.constant 0.0185185205 : f32
    %106 = vector.broadcast %cst_47 : f32 to vector<2x32xf32>
    %107 = arith.mulf %106, %105 : vector<2x32xf32>
    %108 = arith.addf %75, %107 : vector<2x32xf32>
    %cst_48 = arith.constant dense<0.000000e+00> : vector<2x32xf32>
    %109 = tpu.matmul %108, %6, %cst_48 {dimension_numbers = #tpu.dot_dimension_numbers<[1], [0], [0], [1], [0, 0, 1, 1], [], []>} : vector<2x32xf32>, vector<32x32xf32>, vector<2x32xf32> -> vector<2x32xf32>
    %110 = arith.addf %109, %9 : vector<2x32xf32>
    %cst_49 = arith.constant 0.000000e+00 : f32
    %111 = vector.broadcast %cst_49 : f32 to vector<2x32xf32>
    %112 = arith.maximumf %110, %111 : vector<2x32xf32>
    %cst_50 = arith.constant 0.0555555522 : f32
    %113 = vector.broadcast %cst_50 : f32 to vector<2x32xf32>
    %114 = arith.mulf %113, %112 : vector<2x32xf32>
    %115 = arith.addf %108, %114 : vector<2x32xf32>
    %cst_51 = arith.constant dense<0.000000e+00> : vector<2x32xf32>
    %116 = tpu.matmul %115, %6, %cst_51 {dimension_numbers = #tpu.dot_dimension_numbers<[1], [0], [0], [1], [0, 0, 1, 1], [], []>} : vector<2x32xf32>, vector<32x32xf32>, vector<2x32xf32> -> vector<2x32xf32>
    %117 = arith.addf %116, %9 : vector<2x32xf32>
    %cst_52 = arith.constant 0.000000e+00 : f32
    %118 = vector.broadcast %cst_52 : f32 to vector<2x32xf32>
    %119 = arith.maximumf %117, %118 : vector<2x32xf32>
    %cst_53 = arith.constant 0.0555555522 : f32
    %120 = vector.broadcast %cst_53 : f32 to vector<2x32xf32>
    %121 = arith.mulf %120, %119 : vector<2x32xf32>
    %122 = arith.addf %108, %121 : vector<2x32xf32>
    %cst_54 = arith.constant dense<0.000000e+00> : vector<2x32xf32>
    %123 = tpu.matmul %122, %6, %cst_54 {dimension_numbers = #tpu.dot_dimension_numbers<[1], [0], [0], [1], [0, 0, 1, 1], [], []>} : vector<2x32xf32>, vector<32x32xf32>, vector<2x32xf32> -> vector<2x32xf32>
    %124 = arith.addf %123, %9 : vector<2x32xf32>
    %cst_55 = arith.constant 0.000000e+00 : f32
    %125 = vector.broadcast %cst_55 : f32 to vector<2x32xf32>
    %126 = arith.maximumf %124, %125 : vector<2x32xf32>
    %cst_56 = arith.constant 0.111111104 : f32
    %127 = vector.broadcast %cst_56 : f32 to vector<2x32xf32>
    %128 = arith.mulf %127, %126 : vector<2x32xf32>
    %129 = arith.addf %108, %128 : vector<2x32xf32>
    %cst_57 = arith.constant dense<0.000000e+00> : vector<2x32xf32>
    %130 = tpu.matmul %129, %6, %cst_57 {dimension_numbers = #tpu.dot_dimension_numbers<[1], [0], [0], [1], [0, 0, 1, 1], [], []>} : vector<2x32xf32>, vector<32x32xf32>, vector<2x32xf32> -> vector<2x32xf32>
    %131 = arith.addf %130, %9 : vector<2x32xf32>
    %cst_58 = arith.constant 0.000000e+00 : f32
    %132 = vector.broadcast %cst_58 : f32 to vector<2x32xf32>
    %133 = arith.maximumf %131, %132 : vector<2x32xf32>
    %134 = arith.addf %119, %126 : vector<2x32xf32>
    %cst_59 = arith.constant 2.000000e+00 : f32
    %135 = vector.broadcast %cst_59 : f32 to vector<2x32xf32>
    %136 = arith.mulf %135, %134 : vector<2x32xf32>
    %137 = arith.addf %112, %136 : vector<2x32xf32>
    %138 = arith.addf %137, %133 : vector<2x32xf32>
    %cst_60 = arith.constant 0.0185185168 : f32
    %139 = vector.broadcast %cst_60 : f32 to vector<2x32xf32>
    %140 = arith.mulf %139, %138 : vector<2x32xf32>
    %141 = arith.addf %108, %140 : vector<2x32xf32>
    %cst_61 = arith.constant dense<0.000000e+00> : vector<2x32xf32>
    %142 = tpu.matmul %141, %6, %cst_61 {dimension_numbers = #tpu.dot_dimension_numbers<[1], [0], [0], [1], [0, 0, 1, 1], [], []>} : vector<2x32xf32>, vector<32x32xf32>, vector<2x32xf32> -> vector<2x32xf32>
    %143 = arith.addf %142, %9 : vector<2x32xf32>
    %cst_62 = arith.constant 0.000000e+00 : f32
    %144 = vector.broadcast %cst_62 : f32 to vector<2x32xf32>
    %145 = arith.maximumf %143, %144 : vector<2x32xf32>
    %cst_63 = arith.constant 0.0555555671 : f32
    %146 = vector.broadcast %cst_63 : f32 to vector<2x32xf32>
    %147 = arith.mulf %146, %145 : vector<2x32xf32>
    %148 = arith.addf %141, %147 : vector<2x32xf32>
    %cst_64 = arith.constant dense<0.000000e+00> : vector<2x32xf32>
    %149 = tpu.matmul %148, %6, %cst_64 {dimension_numbers = #tpu.dot_dimension_numbers<[1], [0], [0], [1], [0, 0, 1, 1], [], []>} : vector<2x32xf32>, vector<32x32xf32>, vector<2x32xf32> -> vector<2x32xf32>
    %150 = arith.addf %149, %9 : vector<2x32xf32>
    %cst_65 = arith.constant 0.000000e+00 : f32
    %151 = vector.broadcast %cst_65 : f32 to vector<2x32xf32>
    %152 = arith.maximumf %150, %151 : vector<2x32xf32>
    %cst_66 = arith.constant 0.0555555671 : f32
    %153 = vector.broadcast %cst_66 : f32 to vector<2x32xf32>
    %154 = arith.mulf %153, %152 : vector<2x32xf32>
    %155 = arith.addf %141, %154 : vector<2x32xf32>
    %cst_67 = arith.constant dense<0.000000e+00> : vector<2x32xf32>
    %156 = tpu.matmul %155, %6, %cst_67 {dimension_numbers = #tpu.dot_dimension_numbers<[1], [0], [0], [1], [0, 0, 1, 1], [], []>} : vector<2x32xf32>, vector<32x32xf32>, vector<2x32xf32> -> vector<2x32xf32>
    %157 = arith.addf %156, %9 : vector<2x32xf32>
    %cst_68 = arith.constant 0.000000e+00 : f32
    %158 = vector.broadcast %cst_68 : f32 to vector<2x32xf32>
    %159 = arith.maximumf %157, %158 : vector<2x32xf32>
    %cst_69 = arith.constant 0.111111134 : f32
    %160 = vector.broadcast %cst_69 : f32 to vector<2x32xf32>
    %161 = arith.mulf %160, %159 : vector<2x32xf32>
    %162 = arith.addf %141, %161 : vector<2x32xf32>
    %cst_70 = arith.constant dense<0.000000e+00> : vector<2x32xf32>
    %163 = tpu.matmul %162, %6, %cst_70 {dimension_numbers = #tpu.dot_dimension_numbers<[1], [0], [0], [1], [0, 0, 1, 1], [], []>} : vector<2x32xf32>, vector<32x32xf32>, vector<2x32xf32> -> vector<2x32xf32>
    %164 = arith.addf %163, %9 : vector<2x32xf32>
    %cst_71 = arith.constant 0.000000e+00 : f32
    %165 = vector.broadcast %cst_71 : f32 to vector<2x32xf32>
    %166 = arith.maximumf %164, %165 : vector<2x32xf32>
    %167 = arith.addf %152, %159 : vector<2x32xf32>
    %cst_72 = arith.constant 2.000000e+00 : f32
    %168 = vector.broadcast %cst_72 : f32 to vector<2x32xf32>
    %169 = arith.mulf %168, %167 : vector<2x32xf32>
    %170 = arith.addf %145, %169 : vector<2x32xf32>
    %171 = arith.addf %170, %166 : vector<2x32xf32>
    %cst_73 = arith.constant 0.0185185224 : f32
    %172 = vector.broadcast %cst_73 : f32 to vector<2x32xf32>
    %173 = arith.mulf %172, %171 : vector<2x32xf32>
    %174 = arith.addf %141, %173 : vector<2x32xf32>
    %cst_74 = arith.constant dense<0.000000e+00> : vector<2x32xf32>
    %175 = tpu.matmul %174, %6, %cst_74 {dimension_numbers = #tpu.dot_dimension_numbers<[1], [0], [0], [1], [0, 0, 1, 1], [], []>} : vector<2x32xf32>, vector<32x32xf32>, vector<2x32xf32> -> vector<2x32xf32>
    %176 = arith.addf %175, %9 : vector<2x32xf32>
    %cst_75 = arith.constant 0.000000e+00 : f32
    %177 = vector.broadcast %cst_75 : f32 to vector<2x32xf32>
    %178 = arith.maximumf %176, %177 : vector<2x32xf32>
    %cst_76 = arith.constant 0.0555555522 : f32
    %179 = vector.broadcast %cst_76 : f32 to vector<2x32xf32>
    %180 = arith.mulf %179, %178 : vector<2x32xf32>
    %181 = arith.addf %174, %180 : vector<2x32xf32>
    %cst_77 = arith.constant dense<0.000000e+00> : vector<2x32xf32>
    %182 = tpu.matmul %181, %6, %cst_77 {dimension_numbers = #tpu.dot_dimension_numbers<[1], [0], [0], [1], [0, 0, 1, 1], [], []>} : vector<2x32xf32>, vector<32x32xf32>, vector<2x32xf32> -> vector<2x32xf32>
    %183 = arith.addf %182, %9 : vector<2x32xf32>
    %cst_78 = arith.constant 0.000000e+00 : f32
    %184 = vector.broadcast %cst_78 : f32 to vector<2x32xf32>
    %185 = arith.maximumf %183, %184 : vector<2x32xf32>
    %cst_79 = arith.constant 0.0555555522 : f32
    %186 = vector.broadcast %cst_79 : f32 to vector<2x32xf32>
    %187 = arith.mulf %186, %185 : vector<2x32xf32>
    %188 = arith.addf %174, %187 : vector<2x32xf32>
    %cst_80 = arith.constant dense<0.000000e+00> : vector<2x32xf32>
    %189 = tpu.matmul %188, %6, %cst_80 {dimension_numbers = #tpu.dot_dimension_numbers<[1], [0], [0], [1], [0, 0, 1, 1], [], []>} : vector<2x32xf32>, vector<32x32xf32>, vector<2x32xf32> -> vector<2x32xf32>
    %190 = arith.addf %189, %9 : vector<2x32xf32>
    %cst_81 = arith.constant 0.000000e+00 : f32
    %191 = vector.broadcast %cst_81 : f32 to vector<2x32xf32>
    %192 = arith.maximumf %190, %191 : vector<2x32xf32>
    %cst_82 = arith.constant 0.111111104 : f32
    %193 = vector.broadcast %cst_82 : f32 to vector<2x32xf32>
    %194 = arith.mulf %193, %192 : vector<2x32xf32>
    %195 = arith.addf %174, %194 : vector<2x32xf32>
    %cst_83 = arith.constant dense<0.000000e+00> : vector<2x32xf32>
    %196 = tpu.matmul %195, %6, %cst_83 {dimension_numbers = #tpu.dot_dimension_numbers<[1], [0], [0], [1], [0, 0, 1, 1], [], []>} : vector<2x32xf32>, vector<32x32xf32>, vector<2x32xf32> -> vector<2x32xf32>
    %197 = arith.addf %196, %9 : vector<2x32xf32>
    %cst_84 = arith.constant 0.000000e+00 : f32
    %198 = vector.broadcast %cst_84 : f32 to vector<2x32xf32>
    %199 = arith.maximumf %197, %198 : vector<2x32xf32>
    %200 = arith.addf %185, %192 : vector<2x32xf32>
    %cst_85 = arith.constant 2.000000e+00 : f32
    %201 = vector.broadcast %cst_85 : f32 to vector<2x32xf32>
    %202 = arith.mulf %201, %200 : vector<2x32xf32>
    %203 = arith.addf %178, %202 : vector<2x32xf32>
    %204 = arith.addf %203, %199 : vector<2x32xf32>
    %cst_86 = arith.constant 0.0185185168 : f32
    %205 = vector.broadcast %cst_86 : f32 to vector<2x32xf32>
    %206 = arith.mulf %205, %204 : vector<2x32xf32>
    %207 = arith.addf %174, %206 : vector<2x32xf32>
    %cst_87 = arith.constant dense<0.000000e+00> : vector<2x32xf32>
    %208 = tpu.matmul %207, %6, %cst_87 {dimension_numbers = #tpu.dot_dimension_numbers<[1], [0], [0], [1], [0, 0, 1, 1], [], []>} : vector<2x32xf32>, vector<32x32xf32>, vector<2x32xf32> -> vector<2x32xf32>
    %209 = arith.addf %208, %9 : vector<2x32xf32>
    %cst_88 = arith.constant 0.000000e+00 : f32
    %210 = vector.broadcast %cst_88 : f32 to vector<2x32xf32>
    %211 = arith.maximumf %209, %210 : vector<2x32xf32>
    %cst_89 = arith.constant 0.0555555522 : f32
    %212 = vector.broadcast %cst_89 : f32 to vector<2x32xf32>
    %213 = arith.mulf %212, %211 : vector<2x32xf32>
    %214 = arith.addf %207, %213 : vector<2x32xf32>
    %cst_90 = arith.constant dense<0.000000e+00> : vector<2x32xf32>
    %215 = tpu.matmul %214, %6, %cst_90 {dimension_numbers = #tpu.dot_dimension_numbers<[1], [0], [0], [1], [0, 0, 1, 1], [], []>} : vector<2x32xf32>, vector<32x32xf32>, vector<2x32xf32> -> vector<2x32xf32>
    %216 = arith.addf %215, %9 : vector<2x32xf32>
    %cst_91 = arith.constant 0.000000e+00 : f32
    %217 = vector.broadcast %cst_91 : f32 to vector<2x32xf32>
    %218 = arith.maximumf %216, %217 : vector<2x32xf32>
    %cst_92 = arith.constant 0.0555555522 : f32
    %219 = vector.broadcast %cst_92 : f32 to vector<2x32xf32>
    %220 = arith.mulf %219, %218 : vector<2x32xf32>
    %221 = arith.addf %207, %220 : vector<2x32xf32>
    %cst_93 = arith.constant dense<0.000000e+00> : vector<2x32xf32>
    %222 = tpu.matmul %221, %6, %cst_93 {dimension_numbers = #tpu.dot_dimension_numbers<[1], [0], [0], [1], [0, 0, 1, 1], [], []>} : vector<2x32xf32>, vector<32x32xf32>, vector<2x32xf32> -> vector<2x32xf32>
    %223 = arith.addf %222, %9 : vector<2x32xf32>
    %cst_94 = arith.constant 0.000000e+00 : f32
    %224 = vector.broadcast %cst_94 : f32 to vector<2x32xf32>
    %225 = arith.maximumf %223, %224 : vector<2x32xf32>
    %cst_95 = arith.constant 0.111111104 : f32
    %226 = vector.broadcast %cst_95 : f32 to vector<2x32xf32>
    %227 = arith.mulf %226, %225 : vector<2x32xf32>
    %228 = arith.addf %207, %227 : vector<2x32xf32>
    %cst_96 = arith.constant dense<0.000000e+00> : vector<2x32xf32>
    %229 = tpu.matmul %228, %6, %cst_96 {dimension_numbers = #tpu.dot_dimension_numbers<[1], [0], [0], [1], [0, 0, 1, 1], [], []>} : vector<2x32xf32>, vector<32x32xf32>, vector<2x32xf32> -> vector<2x32xf32>
    %230 = arith.addf %229, %9 : vector<2x32xf32>
    %cst_97 = arith.constant 0.000000e+00 : f32
    %231 = vector.broadcast %cst_97 : f32 to vector<2x32xf32>
    %232 = arith.maximumf %230, %231 : vector<2x32xf32>
    %233 = arith.addf %218, %225 : vector<2x32xf32>
    %cst_98 = arith.constant 2.000000e+00 : f32
    %234 = vector.broadcast %cst_98 : f32 to vector<2x32xf32>
    %235 = arith.mulf %234, %233 : vector<2x32xf32>
    %236 = arith.addf %211, %235 : vector<2x32xf32>
    %237 = arith.addf %236, %232 : vector<2x32xf32>
    %cst_99 = arith.constant 0.0185185168 : f32
    %238 = vector.broadcast %cst_99 : f32 to vector<2x32xf32>
    %239 = arith.mulf %238, %237 : vector<2x32xf32>
    %240 = arith.addf %207, %239 : vector<2x32xf32>
    %cst_100 = arith.constant dense<0.000000e+00> : vector<2x32xf32>
    %241 = tpu.matmul %240, %6, %cst_100 {dimension_numbers = #tpu.dot_dimension_numbers<[1], [0], [0], [1], [0, 0, 1, 1], [], []>} : vector<2x32xf32>, vector<32x32xf32>, vector<2x32xf32> -> vector<2x32xf32>
    %242 = arith.addf %241, %9 : vector<2x32xf32>
    %cst_101 = arith.constant 0.000000e+00 : f32
    %243 = vector.broadcast %cst_101 : f32 to vector<2x32xf32>
    %244 = arith.maximumf %242, %243 : vector<2x32xf32>
    %cst_102 = arith.constant 0.0555555522 : f32
    %245 = vector.broadcast %cst_102 : f32 to vector<2x32xf32>
    %246 = arith.mulf %245, %244 : vector<2x32xf32>
    %247 = arith.addf %240, %246 : vector<2x32xf32>
    %cst_103 = arith.constant dense<0.000000e+00> : vector<2x32xf32>
    %248 = tpu.matmul %247, %6, %cst_103 {dimension_numbers = #tpu.dot_dimension_numbers<[1], [0], [0], [1], [0, 0, 1, 1], [], []>} : vector<2x32xf32>, vector<32x32xf32>, vector<2x32xf32> -> vector<2x32xf32>
    %249 = arith.addf %248, %9 : vector<2x32xf32>
    %cst_104 = arith.constant 0.000000e+00 : f32
    %250 = vector.broadcast %cst_104 : f32 to vector<2x32xf32>
    %251 = arith.maximumf %249, %250 : vector<2x32xf32>
    %cst_105 = arith.constant 0.0555555522 : f32
    %252 = vector.broadcast %cst_105 : f32 to vector<2x32xf32>
    %253 = arith.mulf %252, %251 : vector<2x32xf32>
    %254 = arith.addf %240, %253 : vector<2x32xf32>
    %cst_106 = arith.constant dense<0.000000e+00> : vector<2x32xf32>
    %255 = tpu.matmul %254, %6, %cst_106 {dimension_numbers = #tpu.dot_dimension_numbers<[1], [0], [0], [1], [0, 0, 1, 1], [], []>} : vector<2x32xf32>, vector<32x32xf32>, vector<2x32xf32> -> vector<2x32xf32>
    %256 = arith.addf %255, %9 : vector<2x32xf32>
    %cst_107 = arith.constant 0.000000e+00 : f32
    %257 = vector.broadcast %cst_107 : f32 to vector<2x32xf32>
    %258 = arith.maximumf %256, %257 : vector<2x32xf32>
    %cst_108 = arith.constant 0.111111104 : f32
    %259 = vector.broadcast %cst_108 : f32 to vector<2x32xf32>
    %260 = arith.mulf %259, %258 : vector<2x32xf32>
    %261 = arith.addf %240, %260 : vector<2x32xf32>
    %cst_109 = arith.constant dense<0.000000e+00> : vector<2x32xf32>
    %262 = tpu.matmul %261, %6, %cst_109 {dimension_numbers = #tpu.dot_dimension_numbers<[1], [0], [0], [1], [0, 0, 1, 1], [], []>} : vector<2x32xf32>, vector<32x32xf32>, vector<2x32xf32> -> vector<2x32xf32>
    %263 = arith.addf %262, %9 : vector<2x32xf32>
    %cst_110 = arith.constant 0.000000e+00 : f32
    %264 = vector.broadcast %cst_110 : f32 to vector<2x32xf32>
    %265 = arith.maximumf %263, %264 : vector<2x32xf32>
    %266 = arith.addf %251, %258 : vector<2x32xf32>
    %cst_111 = arith.constant 2.000000e+00 : f32
    %267 = vector.broadcast %cst_111 : f32 to vector<2x32xf32>
    %268 = arith.mulf %267, %266 : vector<2x32xf32>
    %269 = arith.addf %244, %268 : vector<2x32xf32>
    %270 = arith.addf %269, %265 : vector<2x32xf32>
    %cst_112 = arith.constant 0.0185185168 : f32
    %271 = vector.broadcast %cst_112 : f32 to vector<2x32xf32>
    %272 = arith.mulf %271, %270 : vector<2x32xf32>
    %273 = arith.addf %240, %272 : vector<2x32xf32>
    %cst_113 = arith.constant dense<0.000000e+00> : vector<2x32xf32>
    %274 = tpu.matmul %273, %6, %cst_113 {dimension_numbers = #tpu.dot_dimension_numbers<[1], [0], [0], [1], [0, 0, 1, 1], [], []>} : vector<2x32xf32>, vector<32x32xf32>, vector<2x32xf32> -> vector<2x32xf32>
    %275 = arith.addf %274, %9 : vector<2x32xf32>
    %cst_114 = arith.constant 0.000000e+00 : f32
    %276 = vector.broadcast %cst_114 : f32 to vector<2x32xf32>
    %277 = arith.maximumf %275, %276 : vector<2x32xf32>
    %cst_115 = arith.constant 0.0555555522 : f32
    %278 = vector.broadcast %cst_115 : f32 to vector<2x32xf32>
    %279 = arith.mulf %278, %277 : vector<2x32xf32>
    %280 = arith.addf %273, %279 : vector<2x32xf32>
    %cst_116 = arith.constant dense<0.000000e+00> : vector<2x32xf32>
    %281 = tpu.matmul %280, %6, %cst_116 {dimension_numbers = #tpu.dot_dimension_numbers<[1], [0], [0], [1], [0, 0, 1, 1], [], []>} : vector<2x32xf32>, vector<32x32xf32>, vector<2x32xf32> -> vector<2x32xf32>
    %282 = arith.addf %281, %9 : vector<2x32xf32>
    %cst_117 = arith.constant 0.000000e+00 : f32
    %283 = vector.broadcast %cst_117 : f32 to vector<2x32xf32>
    %284 = arith.maximumf %282, %283 : vector<2x32xf32>
    %cst_118 = arith.constant 0.0555555522 : f32
    %285 = vector.broadcast %cst_118 : f32 to vector<2x32xf32>
    %286 = arith.mulf %285, %284 : vector<2x32xf32>
    %287 = arith.addf %273, %286 : vector<2x32xf32>
    %cst_119 = arith.constant dense<0.000000e+00> : vector<2x32xf32>
    %288 = tpu.matmul %287, %6, %cst_119 {dimension_numbers = #tpu.dot_dimension_numbers<[1], [0], [0], [1], [0, 0, 1, 1], [], []>} : vector<2x32xf32>, vector<32x32xf32>, vector<2x32xf32> -> vector<2x32xf32>
    %289 = arith.addf %288, %9 : vector<2x32xf32>
    %cst_120 = arith.constant 0.000000e+00 : f32
    %290 = vector.broadcast %cst_120 : f32 to vector<2x32xf32>
    %291 = arith.maximumf %289, %290 : vector<2x32xf32>
    %cst_121 = arith.constant 0.111111104 : f32
    %292 = vector.broadcast %cst_121 : f32 to vector<2x32xf32>
    %293 = arith.mulf %292, %291 : vector<2x32xf32>
    %294 = arith.addf %273, %293 : vector<2x32xf32>
    %cst_122 = arith.constant dense<0.000000e+00> : vector<2x32xf32>
    %295 = tpu.matmul %294, %6, %cst_122 {dimension_numbers = #tpu.dot_dimension_numbers<[1], [0], [0], [1], [0, 0, 1, 1], [], []>} : vector<2x32xf32>, vector<32x32xf32>, vector<2x32xf32> -> vector<2x32xf32>
    %296 = arith.addf %295, %9 : vector<2x32xf32>
    %cst_123 = arith.constant 0.000000e+00 : f32
    %297 = vector.broadcast %cst_123 : f32 to vector<2x32xf32>
    %298 = arith.maximumf %296, %297 : vector<2x32xf32>
    %299 = arith.addf %284, %291 : vector<2x32xf32>
    %cst_124 = arith.constant 2.000000e+00 : f32
    %300 = vector.broadcast %cst_124 : f32 to vector<2x32xf32>
    %301 = arith.mulf %300, %299 : vector<2x32xf32>
    %302 = arith.addf %277, %301 : vector<2x32xf32>
    %303 = arith.addf %302, %298 : vector<2x32xf32>
    %cst_125 = arith.constant 0.0185185168 : f32
    %304 = vector.broadcast %cst_125 : f32 to vector<2x32xf32>
    %305 = arith.mulf %304, %303 : vector<2x32xf32>
    %306 = arith.addf %273, %305 : vector<2x32xf32>
    %c0_126 = arith.constant 0 : index
    %c0_127 = arith.constant 0 : index
    %307 = vector.load %arg5[%c0_126, %c0_127] : memref<32x8xf32, #tpu.memory_space<vmem>>, vector<32x8xf32>
    %cst_128 = arith.constant dense<0.000000e+00> : vector<2x8xf32>
    %308 = tpu.matmul %306, %307, %cst_128 {dimension_numbers = #tpu.dot_dimension_numbers<[1], [0], [0], [1], [0, 0, 1, 1], [], []>} : vector<2x32xf32>, vector<32x8xf32>, vector<2x8xf32> -> vector<2x8xf32>
    %c0_129 = arith.constant 0 : index
    %c0_130 = arith.constant 0 : index
    %309 = vector.load %arg6[%c0_129, %c0_130] : memref<1x8xf32, #tpu.memory_space<vmem>>, vector<1x8xf32>
    %310 = vector.broadcast %309 : vector<1x8xf32> to vector<2x8xf32>
    %311 = arith.addf %308, %310 : vector<2x8xf32>
    %c0_131 = arith.constant 0 : index
    %c0_132 = arith.constant 0 : index
    %312 = vector.load %arg7[%c0_131, %c0_132] : memref<2x8xf32, #tpu.memory_space<vmem>>, vector<2x8xf32>
    tpu.vector_store %arg7[%c0_131, %c0_132], %311 {strides = array<i32>} : memref<2x8xf32, #tpu.memory_space<vmem>>, vector<2x8xf32>,
    return
  }
}

</mosaic_0001>

<llo_original>
// kernel: tpu_custom_call.1
$region0: #{tpu_custom_call.1}
  #allocation0 [shape = 'u32[]', space=smem, size = 0x4, offset = 0x4, fixed_abs, tag = 'smem constant byte address 0x4 - core index']
  #allocation1 [shape = 'u32[144,128]{1,0:T(1,128)}', space=vmem, size = 0x12000, scoped, tag = 'internal scratch']
  %s0 = inlined_call_operand.vmem [shape: f32[2,16], index: 0, kind: input, shape index: {}]
  %s1 = inlined_call_operand.vmem [shape: f32[16,32], index: 1, kind: input, shape index: {}]
  %s2 = inlined_call_operand.hbm [shape: f32[1,32], index: 2, kind: input, shape index: {}]
  %s3 = inlined_call_operand.vmem [shape: f32[32,32], index: 3, kind: input, shape index: {}]
  %s4 = inlined_call_operand.hbm [shape: f32[1,32], index: 4, kind: input, shape index: {}]
  %s5 = inlined_call_operand.vmem [shape: f32[32,8], index: 5, kind: input, shape index: {}]
  %s6 = inlined_call_operand.vmem [shape: f32[1,8], index: 6, kind: input, shape index: {}]
  %s7 = inlined_call_operand.hbm [shape: f32[2,8], index: 7, kind: output, shape index: {}]
  %s8 = sld [smem:[#allocation0]]
  $region46: #{tpu_custom_call.1} parent=0
    _
  %s10 = ssub.s32 1, %s8
  %s11 = scalar_select 0, %s10, %s8
  $region1: #{tpu_custom_call.1} parent=0
    #allocation2 [shape = 'u8[512]{0}', space=vmem, size = 0x400, scoped, tag = 'input window, operand 2, single buffered']
    #allocation3 [shape = 's32[1]{0}', space=sflag, size = 0x4, scoped, tag = 'scoped memory for tpu_custom_call.1']
    #allocation4 [shape = 's32[1]{0}', space=sflag, size = 0x4, scoped, tag = 'scoped memory for tpu_custom_call.1']
    #allocation5 [shape = 'u8[512]{0}', space=vmem, size = 0x400, scoped, tag = 'input window, operand 4, single buffered']
    #allocation6 [shape = 's32[1]{0}', space=sflag, size = 0x4, scoped, tag = 'scoped memory for tpu_custom_call.1']
    #allocation7 [shape = 'u8[1024]{0}', space=vmem, size = 0x400, scoped, tag = 'output window, operand 0, single buffered']
    %12 = vsyncpa [#allocation3], 0
    %13 = vsyncpa [#allocation6], 0
    %14 = vsyncpa [#allocation4], 0
    // Predicated region
    $region2: #{tpu_custom_call.1} parent=1 // pred_check
      _
    $region3: #{tpu_custom_call.1} parent=1 // pred_check_branch
      %16 = sbr.rel (0) target = $region5
    $region4: #{tpu_custom_call.1} parent=1 // pred_region
      _
    $region5: #{tpu_custom_call.1} parent=1 // pred_fallthru
      _
    // Predicated region
    $region6: #{tpu_custom_call.1} parent=1 // pred_check
      _
    $region7: #{tpu_custom_call.1} parent=1 // pred_check_branch
      %18 = sbr.rel (0) target = $region9
    $region8: #{tpu_custom_call.1} parent=1 // pred_region
      _
    $region9: #{tpu_custom_call.1} parent=1 // pred_fallthru
      _
    // Predicated region
    $region10: #{tpu_custom_call.1} parent=1 // pred_check
      _
    $region11: #{tpu_custom_call.1} parent=1 // pred_check_branch
      %20 = sbr.rel (0) target = $region13
    $region12: #{tpu_custom_call.1} parent=1 // pred_region
      %s22 = ssub.s32 16, 16
      %23 = vsyncadd [#allocation3], %s22
      %s25 = sshll.u32 [#allocation2], 4
      %s26 = int_to_ptr.vmem [resolvable:$true] %s25
      %28 = dma.hbm_to_vmem [thread:$0]  %s2, 16, %s26, [#allocation3]
    $region13: #{tpu_custom_call.1} parent=1 // pred_fallthru
      _
    // Predicated region
    $region14: #{tpu_custom_call.1} parent=1 // pred_check
      _
    $region15: #{tpu_custom_call.1} parent=1 // pred_check_branch
      %30 = sbr.rel (0) target = $region17
    $region16: #{tpu_custom_call.1} parent=1 // pred_region
      _
    $region17: #{tpu_custom_call.1} parent=1 // pred_fallthru
      _
    // Predicated region
    $region18: #{tpu_custom_call.1} parent=1 // pred_check
      _
    $region19: #{tpu_custom_call.1} parent=1 // pred_check_branch
      %32 = sbr.rel (0) target = $region21
    $region20: #{tpu_custom_call.1} parent=1 // pred_region
      %s34 = ssub.s32 16, 16
      %35 = vsyncadd [#allocation6], %s34
      %s37 = sshll.u32 [#allocation5], 4
      %s38 = int_to_ptr.vmem [resolvable:$true] %s37
      %40 = dma.hbm_to_vmem [thread:$0]  %s4, 16, %s38, [#allocation6]
    $region21: #{tpu_custom_call.1} parent=1 // pred_fallthru
      _
    // Predicated region
    $region22: #{tpu_custom_call.1} parent=1 // pred_check
      _
    $region23: #{tpu_custom_call.1} parent=1 // pred_check_branch
      %42 = sbr.rel (0) target = $region25
    $region24: #{tpu_custom_call.1} parent=1 // pred_region
      _
    $region25: #{tpu_custom_call.1} parent=1 // pred_fallthru
      _
    // Predicated region
    $region26: #{tpu_custom_call.1} parent=1 // pred_check
      _
    $region27: #{tpu_custom_call.1} parent=1 // pred_check_branch
      %44 = sbr.rel (0) target = $region29
    $region28: #{tpu_custom_call.1} parent=1 // pred_region
      _
    $region29: #{tpu_custom_call.1} parent=1 // pred_fallthru
      _
    // Predicated region
    $region30: #{tpu_custom_call.1} parent=1 // pred_check
      _
    $region31: #{tpu_custom_call.1} parent=1 // pred_check_branch
      %46 = sbr.rel (0) target = $region33
    $region32: #{tpu_custom_call.1} parent=1 // pred_region
      %47 = dma.done [#allocation3], 16
    $region33: #{tpu_custom_call.1} parent=1 // pred_fallthru
      _
    // Predicated region
    $region34: #{tpu_custom_call.1} parent=1 // pred_check
      _
    $region35: #{tpu_custom_call.1} parent=1 // pred_check_branch
      %49 = sbr.rel (0) target = $region37
    $region36: #{tpu_custom_call.1} parent=1 // pred_region
      %50 = dma.done [#allocation6], 16
    $region37: #{tpu_custom_call.1} parent=1 // pred_fallthru
      _
    %v51 = vld [vmem:[%s0] sm:$0x3]
    %v52 = vld [vmem:[%s1] sm:$0xff]
    %v53 = vld [vmem:[%s1 + $0x8] sm:$0xff]
    %v54 = vld [vmem:[#allocation2] sm:$0x1]
    %v56 = vlaneseq
    %v57 = vshrl.u32 %v56, 7
    %v58 = vsub.s32 0, %v57
    %v59 = vrot.slane %v54, %v58
    %vm61 = vcmask 130048
    %v63 = vsel %vm61, %v51, 0
    %65 = vmatprep.subr.mxu0 0.0
    %66 = vmatpush1.msra.mxu0 %v52
    %67 = vmatprep.subr.mxu0 0.0
    %68 = vmatpush1.msra.mxu0 %v53
    %69 = vmatprep.subr.mxu0 0.0
    %70 = vmatpush1.msra.mxu0 0.0
    %71 = vmatprep.subr.mxu0 0.0
    %72 = vmatpush1.msra.mxu0 0.0
    %73 = vmatprep.subr.mxu0 0.0
    %74 = vmatpush1.msra.mxu0 0.0
    %75 = vmatprep.subr.mxu0 0.0
    %76 = vmatpush1.msra.mxu0 0.0
    %77 = vmatprep.subr.mxu0 0.0
    %78 = vmatpush1.msra.mxu0 0.0
    %79 = vmatprep.subr.mxu0 0.0
    %80 = vmatpush1.msra.mxu0 0.0
    %81 = vmatprep.subr.mxu0 0.0
    %82 = vmatpush1.msra.mxu0 0.0
    %83 = vmatprep.subr.mxu0 0.0
    %84 = vmatpush1.msra.mxu0 0.0
    %85 = vmatprep.subr.mxu0 0.0
    %86 = vmatpush1.msra.mxu0 0.0
    %87 = vmatprep.subr.mxu0 0.0
    %88 = vmatpush1.msra.mxu0 0.0
    %89 = vmatprep.subr.mxu0 0.0
    %90 = vmatpush1.msra.mxu0 0.0
    %91 = vmatprep.subr.mxu0 0.0
    %92 = vmatpush1.msra.mxu0 0.0
    %93 = vmatprep.subr.mxu0 0.0
    %94 = vmatpush1.msra.mxu0 0.0
    %95 = vmatprep.subr.mxu0 0.0
    %96 = vmatpush1.msra.mxu0 0.0
    %97 = vmatprep.subr.mxu0 0.0
    %98 = vmatpush1.msra.mxu0 0.0
    %99 = vmatprep.subr.mxu0 0.0
    %100 = vmatpush1.msra.mxu0 0.0
    %101 = vmatprep.subr.mxu0 0.0
    %102 = vmatpush1.msra.mxu0 0.0
    %103 = vmatprep.subr.mxu0 0.0
    %104 = vmatpush1.msra.mxu0 0.0
    %105 = vmatprep.subr.mxu0 0.0
    %106 = vmatpush1.msra.mxu0 0.0
    %107 = vmatprep.subr.mxu0 0.0
    %108 = vmatpush1.msra.mxu0 0.0
    %109 = vmatprep.subr.mxu0 0.0
    %110 = vmatpush1.msra.mxu0 0.0
    %111 = vmatprep.subr.mxu0 0.0
    %112 = vmatpush1.msra.mxu0 0.0
    %113 = vmatprep.subr.mxu0 0.0
    %114 = vmatpush1.msra.mxu0 0.0
    %115 = vmatprep.subr.mxu0 0.0
    %116 = vmatpush1.msra.mxu0 0.0
    %117 = vmatprep.subr.mxu0 0.0
    %118 = vmatpush1.msra.mxu0 0.0
    %119 = vmatprep.subr.mxu0 0.0
    %120 = vmatpush1.msra.mxu0 0.0
    %121 = vmatprep.subr.mxu0 0.0
    %122 = vmatpush1.msra.mxu0 0.0
    %123 = vmatprep.subr.mxu0 0.0
    %124 = vmatpush1.msra.mxu0 0.0
    %125 = vmatprep.subr.mxu0 0.0
    %126 = vmatpush1.msra.mxu0 0.0
    %127 = vmatprep.subr.mxu0 0.0
    %128 = vmatpush1.msra.mxu0 0.0
    %129 = vmatprep.mubr.f32.mxu0 0.0
    %130 = vmatmul.mubr.f32.gmra.mrb[0].mxu0 %v63
    %v131 = vpop.f32.mrb[0].mxu0
    %v132 = vadd.f32 %v59, %v131
    %v133 = vpop.f32.mrb[0].mxu0
    %134 = vdwg.mxu0
    %v135 = vld [vmem:[%s3] sm:$0xff]
    %v136 = vld [vmem:[%s3 + $0x8] sm:$0xff]
    %v137 = vld [vmem:[%s3 + $0x10] sm:$0xff]
    %v138 = vld [vmem:[%s3 + $0x18] sm:$0xff]
    %v139 = vld [vmem:[#allocation5] sm:$0x1]
    %v141 = vlaneseq
    %v142 = vshrl.u32 %v141, 7
    %v143 = vsub.s32 0, %v142
    %v144 = vrot.slane %v139, %v143
    %vm146 = vcmask 261120
    %v148 = vsel %vm146, %v132, 0
    %150 = vmatprep.subr.mxu0 0.0
    %151 = vmatpush1.msra.mxu0 %v135
    %152 = vmatprep.subr.mxu0 0.0
    %153 = vmatpush1.msra.mxu0 %v136
    %154 = vmatprep.subr.mxu0 0.0
    %155 = vmatpush1.msra.mxu0 %v137
    %156 = vmatprep.subr.mxu0 0.0
    %157 = vmatpush1.msra.mxu0 %v138
    %158 = vmatprep.subr.mxu0 0.0
    %159 = vmatpush1.msra.mxu0 0.0
    %160 = vmatprep.subr.mxu0 0.0
    %161 = vmatpush1.msra.mxu0 0.0
    %162 = vmatprep.subr.mxu0 0.0
    %163 = vmatpush1.msra.mxu0 0.0
    %164 = vmatprep.subr.mxu0 0.0
    %165 = vmatpush1.msra.mxu0 0.0
    %166 = vmatprep.subr.mxu0 0.0
    %167 = vmatpush1.msra.mxu0 0.0
    %168 = vmatprep.subr.mxu0 0.0
    %169 = vmatpush1.msra.mxu0 0.0
    %170 = vmatprep.subr.mxu0 0.0
    %171 = vmatpush1.msra.mxu0 0.0
    %172 = vmatprep.subr.mxu0 0.0
    %173 = vmatpush1.msra.mxu0 0.0
    %174 = vmatprep.subr.mxu0 0.0
    %175 = vmatpush1.msra.mxu0 0.0
    %176 = vmatprep.subr.mxu0 0.0
    %177 = vmatpush1.msra.mxu0 0.0
    %178 = vmatprep.subr.mxu0 0.0
    %179 = vmatpush1.msra.mxu0 0.0
    %180 = vmatprep.subr.mxu0 0.0
    %181 = vmatpush1.msra.mxu0 0.0
    %182 = vmatprep.subr.mxu0 0.0
    %183 = vmatpush1.msra.mxu0 0.0
    %184 = vmatprep.subr.mxu0 0.0
    %185 = vmatpush1.msra.mxu0 0.0
    %186 = vmatprep.subr.mxu0 0.0
    %187 = vmatpush1.msra.mxu0 0.0
    %188 = vmatprep.subr.mxu0 0.0
    %189 = vmatpush1.msra.mxu0 0.0
    %190 = vmatprep.subr.mxu0 0.0
    %191 = vmatpush1.msra.mxu0 0.0
    %192 = vmatprep.subr.mxu0 0.0
    %193 = vmatpush1.msra.mxu0 0.0
    %194 = vmatprep.subr.mxu0 0.0
    %195 = vmatpush1.msra.mxu0 0.0
    %196 = vmatprep.subr.mxu0 0.0
    %197 = vmatpush1.msra.mxu0 0.0
    %198 = vmatprep.subr.mxu0 0.0
    %199 = vmatpush1.msra.mxu0 0.0
    %200 = vmatprep.subr.mxu0 0.0
    %201 = vmatpush1.msra.mxu0 0.0
    %202 = vmatprep.subr.mxu0 0.0
    %203 = vmatpush1.msra.mxu0 0.0
    %204 = vmatprep.subr.mxu0 0.0
    %205 = vmatpush1.msra.mxu0 0.0
    %206 = vmatprep.subr.mxu0 0.0
    %207 = vmatpush1.msra.mxu0 0.0
    %208 = vmatprep.subr.mxu0 0.0
    %209 = vmatpush1.msra.mxu0 0.0
    %210 = vmatprep.subr.mxu0 0.0
    %211 = vmatpush1.msra.mxu0 0.0
    %212 = vmatprep.subr.mxu0 0.0
    %213 = vmatpush1.msra.mxu0 0.0
    %214 = vmatprep.mubr.f32.mxu0 0.0
    %215 = vmatmul.mubr.f32.gmra.mrb[0].mxu0 %v148
    %v216 = vpop.f32.mrb[0].mxu0
    %v217 = vadd.f32 %v144, %v216
    %v218 = vpop.f32.mrb[0].mxu0
    %219 = vdwg.mxu0
    %v220 = vmax.f32 %v217, 0.0
    %v221 = vmul.f32 %v220, 0.055555556
    %v222 = vadd.f32 %v132, %v221
    %v224 = vsel %vm146, %v222, 0
    %226 = vmatprep.subr.mxu0 0.0
    %227 = vmatpush1.msra.mxu0 %v135
    %228 = vmatprep.subr.mxu0 0.0
    %229 = vmatpush1.msra.mxu0 %v136
    %230 = vmatprep.subr.mxu0 0.0
    %231 = vmatpush1.msra.mxu0 %v137
    %232 = vmatprep.subr.mxu0 0.0
    %233 = vmatpush1.msra.mxu0 %v138
    %234 = vmatprep.subr.mxu0 0.0
    %235 = vmatpush1.msra.mxu0 0.0
    %236 = vmatprep.subr.mxu0 0.0
    %237 = vmatpush1.msra.mxu0 0.0
    %238 = vmatprep.subr.mxu0 0.0
    %239 = vmatpush1.msra.mxu0 0.0
    %240 = vmatprep.subr.mxu0 0.0
    %241 = vmatpush1.msra.mxu0 0.0
    %242 = vmatprep.subr.mxu0 0.0
    %243 = vmatpush1.msra.mxu0 0.0
    %244 = vmatprep.subr.mxu0 0.0
    %245 = vmatpush1.msra.mxu0 0.0
    %246 = vmatprep.subr.mxu0 0.0
    %247 = vmatpush1.msra.mxu0 0.0
    %248 = vmatprep.subr.mxu0 0.0
    %249 = vmatpush1.msra.mxu0 0.0
    %250 = vmatprep.subr.mxu0 0.0
    %251 = vmatpush1.msra.mxu0 0.0
    %252 = vmatprep.subr.mxu0 0.0
    %253 = vmatpush1.msra.mxu0 0.0
    %254 = vmatprep.subr.mxu0 0.0
    %255 = vmatpush1.msra.mxu0 0.0
    %256 = vmatprep.subr.mxu0 0.0
    %257 = vmatpush1.msra.mxu0 0.0
    %258 = vmatprep.subr.mxu0 0.0
    %259 = vmatpush1.msra.mxu0 0.0
    %260 = vmatprep.subr.mxu0 0.0
    %261 = vmatpush1.msra.mxu0 0.0
    %262 = vmatprep.subr.mxu0 0.0
    %263 = vmatpush1.msra.mxu0 0.0
    %264 = vmatprep.subr.mxu0 0.0
    %265 = vmatpush1.msra.mxu0 0.0
    %266 = vmatprep.subr.mxu0 0.0
    %267 = vmatpush1.msra.mxu0 0.0
    %268 = vmatprep.subr.mxu0 0.0
    %269 = vmatpush1.msra.mxu0 0.0
    %270 = vmatprep.subr.mxu0 0.0
    %271 = vmatpush1.msra.mxu0 0.0
    %272 = vmatprep.subr.mxu0 0.0
    %273 = vmatpush1.msra.mxu0 0.0
    %274 = vmatprep.subr.mxu0 0.0
    %275 = vmatpush1.msra.mxu0 0.0
    %276 = vmatprep.subr.mxu0 0.0
    %277 = vmatpush1.msra.mxu0 0.0
    %278 = vmatprep.subr.mxu0 0.0
    %279 = vmatpush1.msra.mxu0 0.0
    %280 = vmatprep.subr.mxu0 0.0
    %281 = vmatpush1.msra.mxu0 0.0
    %282 = vmatprep.subr.mxu0 0.0
    %283 = vmatpush1.msra.mxu0 0.0
    %284 = vmatprep.subr.mxu0 0.0
    %285 = vmatpush1.msra.mxu0 0.0
    %286 = vmatprep.subr.mxu0 0.0
    %287 = vmatpush1.msra.mxu0 0.0
    %288 = vmatprep.subr.mxu0 0.0
    %289 = vmatpush1.msra.mxu0 0.0
    %290 = vmatprep.mubr.f32.mxu0 0.0
    %291 = vmatmul.mubr.f32.gmra.mrb[0].mxu0 %v224
    %v292 = vpop.f32.mrb[0].mxu0
    %v293 = vadd.f32 %v144, %v292
    %v294 = vpop.f32.mrb[0].mxu0
    %295 = vdwg.mxu0
    %v296 = vmax.f32 %v293, 0.0
    %v297 = vmul.f32 %v296, 0.055555556
    %v298 = vadd.f32 %v132, %v297
    %v300 = vsel %vm146, %v298, 0
    %302 = vmatprep.subr.mxu0 0.0
    %303 = vmatpush1.msra.mxu0 %v135
    %304 = vmatprep.subr.mxu0 0.0
    %305 = vmatpush1.msra.mxu0 %v136
    %306 = vmatprep.subr.mxu0 0.0
    %307 = vmatpush1.msra.mxu0 %v137
    %308 = vmatprep.subr.mxu0 0.0
    %309 = vmatpush1.msra.mxu0 %v138
    %310 = vmatprep.subr.mxu0 0.0
    %311 = vmatpush1.msra.mxu0 0.0
    %312 = vmatprep.subr.mxu0 0.0
    %313 = vmatpush1.msra.mxu0 0.0
    %314 = vmatprep.subr.mxu0 0.0
    %315 = vmatpush1.msra.mxu0 0.0
    %316 = vmatprep.subr.mxu0 0.0
    %317 = vmatpush1.msra.mxu0 0.0
    %318 = vmatprep.subr.mxu0 0.0
    %319 = vmatpush1.msra.mxu0 0.0
    %320 = vmatprep.subr.mxu0 0.0
    %321 = vmatpush1.msra.mxu0 0.0
    %322 = vmatprep.subr.mxu0 0.0
    %323 = vmatpush1.msra.mxu0 0.0
    %324 = vmatprep.subr.mxu0 0.0
    %325 = vmatpush1.msra.mxu0 0.0
    %326 = vmatprep.subr.mxu0 0.0
    %327 = vmatpush1.msra.mxu0 0.0
    %328 = vmatprep.subr.mxu0 0.0
    %329 = vmatpush1.msra.mxu0 0.0
    %330 = vmatprep.subr.mxu0 0.0
    %331 = vmatpush1.msra.mxu0 0.0
    %332 = vmatprep.subr.mxu0 0.0
    %333 = vmatpush1.msra.mxu0 0.0
    %334 = vmatprep.subr.mxu0 0.0
    %335 = vmatpush1.msra.mxu0 0.0
    %336 = vmatprep.subr.mxu0 0.0
    %337 = vmatpush1.msra.mxu0 0.0
    %338 = vmatprep.subr.mxu0 0.0
    %339 = vmatpush1.msra.mxu0 0.0
    %340 = vmatprep.subr.mxu0 0.0
    %341 = vmatpush1.msra.mxu0 0.0
    %342 = vmatprep.subr.mxu0 0.0
    %343 = vmatpush1.msra.mxu0 0.0
    %344 = vmatprep.subr.mxu0 0.0
    %345 = vmatpush1.msra.mxu0 0.0
    %346 = vmatprep.subr.mxu0 0.0
    %347 = vmatpush1.msra.mxu0 0.0
    %348 = vmatprep.subr.mxu0 0.0
    %349 = vmatpush1.msra.mxu0 0.0
    %350 = vmatprep.subr.mxu0 0.0
    %351 = vmatpush1.msra.mxu0 0.0
    %352 = vmatprep.subr.mxu0 0.0
    %353 = vmatpush1.msra.mxu0 0.0
    %354 = vmatprep.subr.mxu0 0.0
    %355 = vmatpush1.msra.mxu0 0.0
    %356 = vmatprep.subr.mxu0 0.0
    %357 = vmatpush1.msra.mxu0 0.0
    %358 = vmatprep.subr.mxu0 0.0
    %359 = vmatpush1.msra.mxu0 0.0
    %360 = vmatprep.subr.mxu0 0.0
    %361 = vmatpush1.msra.mxu0 0.0
    %362 = vmatprep.subr.mxu0 0.0
    %363 = vmatpush1.msra.mxu0 0.0
    %364 = vmatprep.subr.mxu0 0.0
    %365 = vmatpush1.msra.mxu0 0.0
    %366 = vmatprep.mubr.f32.mxu0 0.0
    %367 = vmatmul.mubr.f32.gmra.mrb[0].mxu0 %v300
    %v368 = vpop.f32.mrb[0].mxu0
    %v369 = vadd.f32 %v144, %v368
    %v370 = vpop.f32.mrb[0].mxu0
    %371 = vdwg.mxu0
    %v372 = vmax.f32 %v369, 0.0
    %v373 = vmul.f32 %v372, 0.11111111
    %v374 = vadd.f32 %v132, %v373
    %v376 = vsel %vm146, %v374, 0
    %378 = vmatprep.subr.mxu0 0.0
    %379 = vmatpush1.msra.mxu0 %v135
    %380 = vmatprep.subr.mxu0 0.0
    %381 = vmatpush1.msra.mxu0 %v136
    %382 = vmatprep.subr.mxu0 0.0
    %383 = vmatpush1.msra.mxu0 %v137
    %384 = vmatprep.subr.mxu0 0.0
    %385 = vmatpush1.msra.mxu0 %v138
    %386 = vmatprep.subr.mxu0 0.0
    %387 = vmatpush1.msra.mxu0 0.0
    %388 = vmatprep.subr.mxu0 0.0
    %389 = vmatpush1.msra.mxu0 0.0
    %390 = vmatprep.subr.mxu0 0.0
    %391 = vmatpush1.msra.mxu0 0.0
    %392 = vmatprep.subr.mxu0 0.0
    %393 = vmatpush1.msra.mxu0 0.0
    %394 = vmatprep.subr.mxu0 0.0
    %395 = vmatpush1.msra.mxu0 0.0
    %396 = vmatprep.subr.mxu0 0.0
    %397 = vmatpush1.msra.mxu0 0.0
    %398 = vmatprep.subr.mxu0 0.0
    %399 = vmatpush1.msra.mxu0 0.0
    %400 = vmatprep.subr.mxu0 0.0
    %401 = vmatpush1.msra.mxu0 0.0
    %402 = vmatprep.subr.mxu0 0.0
    %403 = vmatpush1.msra.mxu0 0.0
    %404 = vmatprep.subr.mxu0 0.0
    %405 = vmatpush1.msra.mxu0 0.0
    %406 = vmatprep.subr.mxu0 0.0
    %407 = vmatpush1.msra.mxu0 0.0
    %408 = vmatprep.subr.mxu0 0.0
    %409 = vmatpush1.msra.mxu0 0.0
    %410 = vmatprep.subr.mxu0 0.0
    %411 = vmatpush1.msra.mxu0 0.0
    %412 = vmatprep.subr.mxu0 0.0
    %413 = vmatpush1.msra.mxu0 0.0
    %414 = vmatprep.subr.mxu0 0.0
    %415 = vmatpush1.msra.mxu0 0.0
    %416 = vmatprep.subr.mxu0 0.0
    %417 = vmatpush1.msra.mxu0 0.0
    %418 = vmatprep.subr.mxu0 0.0
    %419 = vmatpush1.msra.mxu0 0.0
    %420 = vmatprep.subr.mxu0 0.0
    %421 = vmatpush1.msra.mxu0 0.0
    %422 = vmatprep.subr.mxu0 0.0
    %423 = vmatpush1.msra.mxu0 0.0
    %424 = vmatprep.subr.mxu0 0.0
    %425 = vmatpush1.msra.mxu0 0.0
    %426 = vmatprep.subr.mxu0 0.0
    %427 = vmatpush1.msra.mxu0 0.0
    %428 = vmatprep.subr.mxu0 0.0
    %429 = vmatpush1.msra.mxu0 0.0
    %430 = vmatprep.subr.mxu0 0.0
    %431 = vmatpush1.msra.mxu0 0.0
    %432 = vmatprep.subr.mxu0 0.0
    %433 = vmatpush1.msra.mxu0 0.0
    %434 = vmatprep.subr.mxu0 0.0
    %435 = vmatpush1.msra.mxu0 0.0
    %436 = vmatprep.subr.mxu0 0.0
    %437 = vmatpush1.msra.mxu0 0.0
    %438 = vmatprep.subr.mxu0 0.0
    %439 = vmatpush1.msra.mxu0 0.0
    %440 = vmatprep.subr.mxu0 0.0
    %441 = vmatpush1.msra.mxu0 0.0
    %442 = vmatprep.mubr.f32.mxu0 0.0
    %443 = vmatmul.mubr.f32.gmra.mrb[0].mxu0 %v376
    %v444 = vpop.f32.mrb[0].mxu0
    %v445 = vadd.f32 %v144, %v444
    %v446 = vpop.f32.mrb[0].mxu0
    %447 = vdwg.mxu0
    %v448 = vmax.f32 %v445, 0.0
    %v449 = vadd.f32 %v296, %v372
    %v450 = vmul.f32 %v449, 2.0
    %v451 = vadd.f32 %v220, %v450
    %v452 = vadd.f32 %v451, %v448
    %v453 = vmul.f32 %v452, 0.018518519
    %v454 = vadd.f32 %v132, %v453
    %v456 = vsel %vm146, %v454, 0
    %458 = vmatprep.subr.mxu0 0.0
    %459 = vmatpush1.msra.mxu0 %v135
    %460 = vmatprep.subr.mxu0 0.0
    %461 = vmatpush1.msra.mxu0 %v136
    %462 = vmatprep.subr.mxu0 0.0
    %463 = vmatpush1.msra.mxu0 %v137
    %464 = vmatprep.subr.mxu0 0.0
    %465 = vmatpush1.msra.mxu0 %v138
    %466 = vmatprep.subr.mxu0 0.0
    %467 = vmatpush1.msra.mxu0 0.0
    %468 = vmatprep.subr.mxu0 0.0
    %469 = vmatpush1.msra.mxu0 0.0
    %470 = vmatprep.subr.mxu0 0.0
    %471 = vmatpush1.msra.mxu0 0.0
    %472 = vmatprep.subr.mxu0 0.0
    %473 = vmatpush1.msra.mxu0 0.0
    %474 = vmatprep.subr.mxu0 0.0
    %475 = vmatpush1.msra.mxu0 0.0
    %476 = vmatprep.subr.mxu0 0.0
    %477 = vmatpush1.msra.mxu0 0.0
    %478 = vmatprep.subr.mxu0 0.0
    %479 = vmatpush1.msra.mxu0 0.0
    %480 = vmatprep.subr.mxu0 0.0
    %481 = vmatpush1.msra.mxu0 0.0
    %482 = vmatprep.subr.mxu0 0.0
    %483 = vmatpush1.msra.mxu0 0.0
    %484 = vmatprep.subr.mxu0 0.0
    %485 = vmatpush1.msra.mxu0 0.0
    %486 = vmatprep.subr.mxu0 0.0
    %487 = vmatpush1.msra.mxu0 0.0
    %488 = vmatprep.subr.mxu0 0.0
    %489 = vmatpush1.msra.mxu0 0.0
    %490 = vmatprep.subr.mxu0 0.0
    %491 = vmatpush1.msra.mxu0 0.0
    %492 = vmatprep.subr.mxu0 0.0
    %493 = vmatpush1.msra.mxu0 0.0
    %494 = vmatprep.subr.mxu0 0.0
    %495 = vmatpush1.msra.mxu0 0.0
    %496 = vmatprep.subr.mxu0 0.0
    %497 = vmatpush1.msra.mxu0 0.0
    %498 = vmatprep.subr.mxu0 0.0
    %499 = vmatpush1.msra.mxu0 0.0
    %500 = vmatprep.subr.mxu0 0.0
    %501 = vmatpush1.msra.mxu0 0.0
    %502 = vmatprep.subr.mxu0 0.0
    %503 = vmatpush1.msra.mxu0 0.0
    %504 = vmatprep.subr.mxu0 0.0
    %505 = vmatpush1.msra.mxu0 0.0
    %506 = vmatprep.subr.mxu0 0.0
    %507 = vmatpush1.msra.mxu0 0.0
    %508 = vmatprep.subr.mxu0 0.0
    %509 = vmatpush1.msra.mxu0 0.0
    %510 = vmatprep.subr.mxu0 0.0
    %511 = vmatpush1.msra.mxu0 0.0
    %512 = vmatprep.subr.mxu0 0.0
    %513 = vmatpush1.msra.mxu0 0.0
    %514 = vmatprep.subr.mxu0 0.0
    %515 = vmatpush1.msra.mxu0 0.0
    %516 = vmatprep.subr.mxu0 0.0
    %517 = vmatpush1.msra.mxu0 0.0
    %518 = vmatprep.subr.mxu0 0.0
    %519 = vmatpush1.msra.mxu0 0.0
    %520 = vmatprep.subr.mxu0 0.0
    %521 = vmatpush1.msra.mxu0 0.0
    %522 = vmatprep.mubr.f32.mxu0 0.0
    %523 = vmatmul.mubr.f32.gmra.mrb[0].mxu0 %v456
    %v524 = vpop.f32.mrb[0].mxu0
    %v525 = vadd.f32 %v144, %v524
    %v526 = vpop.f32.mrb[0].mxu0
    %527 = vdwg.mxu0
    %v528 = vmax.f32 %v525, 0.0
    %v529 = vmul.f32 %v528, 0.055555556
    %v530 = vadd.f32 %v454, %v529
    %v532 = vsel %vm146, %v530, 0
    %534 = vmatprep.subr.mxu0 0.0
    %535 = vmatpush1.msra.mxu0 %v135
    %536 = vmatprep.subr.mxu0 0.0
    %537 = vmatpush1.msra.mxu0 %v136
    %538 = vmatprep.subr.mxu0 0.0
    %539 = vmatpush1.msra.mxu0 %v137
    %540 = vmatprep.subr.mxu0 0.0
    %541 = vmatpush1.msra.mxu0 %v138
    %542 = vmatprep.subr.mxu0 0.0
    %543 = vmatpush1.msra.mxu0 0.0
    %544 = vmatprep.subr.mxu0 0.0
    %545 = vmatpush1.msra.mxu0 0.0
    %546 = vmatprep.subr.mxu0 0.0
    %547 = vmatpush1.msra.mxu0 0.0
    %548 = vmatprep.subr.mxu0 0.0
    %549 = vmatpush1.msra.mxu0 0.0
    %550 = vmatprep.subr.mxu0 0.0
    %551 = vmatpush1.msra.mxu0 0.0
    %552 = vmatprep.subr.mxu0 0.0
    %553 = vmatpush1.msra.mxu0 0.0
    %554 = vmatprep.subr.mxu0 0.0
    %555 = vmatpush1.msra.mxu0 0.0
    %556 = vmatprep.subr.mxu0 0.0
    %557 = vmatpush1.msra.mxu0 0.0
    %558 = vmatprep.subr.mxu0 0.0
    %559 = vmatpush1.msra.mxu0 0.0
    %560 = vmatprep.subr.mxu0 0.0
    %561 = vmatpush1.msra.mxu0 0.0
    %562 = vmatprep.subr.mxu0 0.0
    %563 = vmatpush1.msra.mxu0 0.0
    %564 = vmatprep.subr.mxu0 0.0
    %565 = vmatpush1.msra.mxu0 0.0
    %566 = vmatprep.subr.mxu0 0.0
    %567 = vmatpush1.msra.mxu0 0.0
    %568 = vmatprep.subr.mxu0 0.0
    %569 = vmatpush1.msra.mxu0 0.0
    %570 = vmatprep.subr.mxu0 0.0
    %571 = vmatpush1.msra.mxu0 0.0
    %572 = vmatprep.subr.mxu0 0.0
    %573 = vmatpush1.msra.mxu0 0.0
    %574 = vmatprep.subr.mxu0 0.0
    %575 = vmatpush1.msra.mxu0 0.0
    %576 = vmatprep.subr.mxu0 0.0
    %577 = vmatpush1.msra.mxu0 0.0
    %578 = vmatprep.subr.mxu0 0.0
    %579 = vmatpush1.msra.mxu0 0.0
    %580 = vmatprep.subr.mxu0 0.0
    %581 = vmatpush1.msra.mxu0 0.0
    %582 = vmatprep.subr.mxu0 0.0
    %583 = vmatpush1.msra.mxu0 0.0
    %584 = vmatprep.subr.mxu0 0.0
    %585 = vmatpush1.msra.mxu0 0.0
    %586 = vmatprep.subr.mxu0 0.0
    %587 = vmatpush1.msra.mxu0 0.0
    %588 = vmatprep.subr.mxu0 0.0
    %589 = vmatpush1.msra.mxu0 0.0
    %590 = vmatprep.subr.mxu0 0.0
    %591 = vmatpush1.msra.mxu0 0.0
    %592 = vmatprep.subr.mxu0 0.0
    %593 = vmatpush1.msra.mxu0 0.0
    %594 = vmatprep.subr.mxu0 0.0
    %595 = vmatpush1.msra.mxu0 0.0
    %596 = vmatprep.subr.mxu0 0.0
    %597 = vmatpush1.msra.mxu0 0.0
    %598 = vmatprep.mubr.f32.mxu0 0.0
    %599 = vmatmul.mubr.f32.gmra.mrb[0].mxu0 %v532
    %v600 = vpop.f32.mrb[0].mxu0
    %v601 = vadd.f32 %v144, %v600
    %v602 = vpop.f32.mrb[0].mxu0
    %603 = vdwg.mxu0
    %v604 = vmax.f32 %v601, 0.0
    %v605 = vmul.f32 %v604, 0.055555556
    %v606 = vadd.f32 %v454, %v605
    %v608 = vsel %vm146, %v606, 0
    %610 = vmatprep.subr.mxu0 0.0
    %611 = vmatpush1.msra.mxu0 %v135
    %612 = vmatprep.subr.mxu0 0.0
    %613 = vmatpush1.msra.mxu0 %v136
    %614 = vmatprep.subr.mxu0 0.0
    %615 = vmatpush1.msra.mxu0 %v137
    %616 = vmatprep.subr.mxu0 0.0
    %617 = vmatpush1.msra.mxu0 %v138
    %618 = vmatprep.subr.mxu0 0.0
    %619 = vmatpush1.msra.mxu0 0.0
    %620 = vmatprep.subr.mxu0 0.0
    %621 = vmatpush1.msra.mxu0 0.0
    %622 = vmatprep.subr.mxu0 0.0
    %623 = vmatpush1.msra.mxu0 0.0
    %624 = vmatprep.subr.mxu0 0.0
    %625 = vmatpush1.msra.mxu0 0.0
    %626 = vmatprep.subr.mxu0 0.0
    %627 = vmatpush1.msra.mxu0 0.0
    %628 = vmatprep.subr.mxu0 0.0
    %629 = vmatpush1.msra.mxu0 0.0
    %630 = vmatprep.subr.mxu0 0.0
    %631 = vmatpush1.msra.mxu0 0.0
    %632 = vmatprep.subr.mxu0 0.0
    %633 = vmatpush1.msra.mxu0 0.0
    %634 = vmatprep.subr.mxu0 0.0
    %635 = vmatpush1.msra.mxu0 0.0
    %636 = vmatprep.subr.mxu0 0.0
    %637 = vmatpush1.msra.mxu0 0.0
    %638 = vmatprep.subr.mxu0 0.0
    %639 = vmatpush1.msra.mxu0 0.0
    %640 = vmatprep.subr.mxu0 0.0
    %641 = vmatpush1.msra.mxu0 0.0
    %642 = vmatprep.subr.mxu0 0.0
    %643 = vmatpush1.msra.mxu0 0.0
    %644 = vmatprep.subr.mxu0 0.0
    %645 = vmatpush1.msra.mxu0 0.0
    %646 = vmatprep.subr.mxu0 0.0
    %647 = vmatpush1.msra.mxu0 0.0
    %648 = vmatprep.subr.mxu0 0.0
    %649 = vmatpush1.msra.mxu0 0.0
    %650 = vmatprep.subr.mxu0 0.0
    %651 = vmatpush1.msra.mxu0 0.0
    %652 = vmatprep.subr.mxu0 0.0
    %653 = vmatpush1.msra.mxu0 0.0
    %654 = vmatprep.subr.mxu0 0.0
    %655 = vmatpush1.msra.mxu0 0.0
    %656 = vmatprep.subr.mxu0 0.0
    %657 = vmatpush1.msra.mxu0 0.0
    %658 = vmatprep.subr.mxu0 0.0
    %659 = vmatpush1.msra.mxu0 0.0
    %660 = vmatprep.subr.mxu0 0.0
    %661 = vmatpush1.msra.mxu0 0.0
    %662 = vmatprep.subr.mxu0 0.0
    %663 = vmatpush1.msra.mxu0 0.0
    %664 = vmatprep.subr.mxu0 0.0
    %665 = vmatpush1.msra.mxu0 0.0
    %666 = vmatprep.subr.mxu0 0.0
    %667 = vmatpush1.msra.mxu0 0.0
    %668 = vmatprep.subr.mxu0 0.0
    %669 = vmatpush1.msra.mxu0 0.0
    %670 = vmatprep.subr.mxu0 0.0
    %671 = vmatpush1.msra.mxu0 0.0
    %672 = vmatprep.subr.mxu0 0.0
    %673 = vmatpush1.msra.mxu0 0.0
    %674 = vmatprep.mubr.f32.mxu0 0.0
    %675 = vmatmul.mubr.f32.gmra.mrb[0].mxu0 %v608
    %v676 = vpop.f32.mrb[0].mxu0
    %v677 = vadd.f32 %v144, %v676
    %v678 = vpop.f32.mrb[0].mxu0
    %679 = vdwg.mxu0
    %v680 = vmax.f32 %v677, 0.0
    %v681 = vmul.f32 %v680, 0.11111111
    %v682 = vadd.f32 %v454, %v681
    %v684 = vsel %vm146, %v682, 0
    %686 = vmatprep.subr.mxu0 0.0
    %687 = vmatpush1.msra.mxu0 %v135
    %688 = vmatprep.subr.mxu0 0.0
    %689 = vmatpush1.msra.mxu0 %v136
    %690 = vmatprep.subr.mxu0 0.0
    %691 = vmatpush1.msra.mxu0 %v137
    %692 = vmatprep.subr.mxu0 0.0
    %693 = vmatpush1.msra.mxu0 %v138
    %694 = vmatprep.subr.mxu0 0.0
    %695 = vmatpush1.msra.mxu0 0.0
    %696 = vmatprep.subr.mxu0 0.0
    %697 = vmatpush1.msra.mxu0 0.0
    %698 = vmatprep.subr.mxu0 0.0
    %699 = vmatpush1.msra.mxu0 0.0
    %700 = vmatprep.subr.mxu0 0.0
    %701 = vmatpush1.msra.mxu0 0.0
    %702 = vmatprep.subr.mxu0 0.0
    %703 = vmatpush1.msra.mxu0 0.0
    %704 = vmatprep.subr.mxu0 0.0
    %705 = vmatpush1.msra.mxu0 0.0
    %706 = vmatprep.subr.mxu0 0.0
    %707 = vmatpush1.msra.mxu0 0.0
    %708 = vmatprep.subr.mxu0 0.0
    %709 = vmatpush1.msra.mxu0 0.0
    %710 = vmatprep.subr.mxu0 0.0
    %711 = vmatpush1.msra.mxu0 0.0
    %712 = vmatprep.subr.mxu0 0.0
    %713 = vmatpush1.msra.mxu0 0.0
    %714 = vmatprep.subr.mxu0 0.0
    %715 = vmatpush1.msra.mxu0 0.0
    %716 = vmatprep.subr.mxu0 0.0
    %717 = vmatpush1.msra.mxu0 0.0
    %718 = vmatprep.subr.mxu0 0.0
    %719 = vmatpush1.msra.mxu0 0.0
    %720 = vmatprep.subr.mxu0 0.0
    %721 = vmatpush1.msra.mxu0 0.0
    %722 = vmatprep.subr.mxu0 0.0
    %723 = vmatpush1.msra.mxu0 0.0
    %724 = vmatprep.subr.mxu0 0.0
    %725 = vmatpush1.msra.mxu0 0.0
    %726 = vmatprep.subr.mxu0 0.0
    %727 = vmatpush1.msra.mxu0 0.0
    %728 = vmatprep.subr.mxu0 0.0
    %729 = vmatpush1.msra.mxu0 0.0
    %730 = vmatprep.subr.mxu0 0.0
    %731 = vmatpush1.msra.mxu0 0.0
    %732 = vmatprep.subr.mxu0 0.0
    %733 = vmatpush1.msra.mxu0 0.0
    %734 = vmatprep.subr.mxu0 0.0
    %735 = vmatpush1.msra.mxu0 0.0
    %736 = vmatprep.subr.mxu0 0.0
    %737 = vmatpush1.msra.mxu0 0.0
    %738 = vmatprep.subr.mxu0 0.0
    %739 = vmatpush1.msra.mxu0 0.0
    %740 = vmatprep.subr.mxu0 0.0
    %741 = vmatpush1.msra.mxu0 0.0
    %742 = vmatprep.subr.mxu0 0.0
    %743 = vmatpush1.msra.mxu0 0.0
    %744 = vmatprep.subr.mxu0 0.0
    %745 = vmatpush1.msra.mxu0 0.0
    %746 = vmatprep.subr.mxu0 0.0
    %747 = vmatpush1.msra.mxu0 0.0
    %748 = vmatprep.subr.mxu0 0.0
    %749 = vmatpush1.msra.mxu0 0.0
    %750 = vmatprep.mubr.f32.mxu0 0.0
    %751 = vmatmul.mubr.f32.gmra.mrb[0].mxu0 %v684
    %v752 = vpop.f32.mrb[0].mxu0
    %v753 = vadd.f32 %v144, %v752
    %v754 = vpop.f32.mrb[0].mxu0
    %755 = vdwg.mxu0
    %v756 = vmax.f32 %v753, 0.0
    %v757 = vadd.f32 %v604, %v680
    %v758 = vmul.f32 %v757, 2.0
    %v759 = vadd.f32 %v528, %v758
    %v760 = vadd.f32 %v759, %v756
    %v761 = vmul.f32 %v760, 0.018518519
    %v762 = vadd.f32 %v454, %v761
    %v764 = vsel %vm146, %v762, 0
    %766 = vmatprep.subr.mxu0 0.0
    %767 = vmatpush1.msra.mxu0 %v135
    %768 = vmatprep.subr.mxu0 0.0
    %769 = vmatpush1.msra.mxu0 %v136
    %770 = vmatprep.subr.mxu0 0.0
    %771 = vmatpush1.msra.mxu0 %v137
    %772 = vmatprep.subr.mxu0 0.0
    %773 = vmatpush1.msra.mxu0 %v138
    %774 = vmatprep.subr.mxu0 0.0
    %775 = vmatpush1.msra.mxu0 0.0
    %776 = vmatprep.subr.mxu0 0.0
    %777 = vmatpush1.msra.mxu0 0.0
    %778 = vmatprep.subr.mxu0 0.0
    %779 = vmatpush1.msra.mxu0 0.0
    %780 = vmatprep.subr.mxu0 0.0
    %781 = vmatpush1.msra.mxu0 0.0
    %782 = vmatprep.subr.mxu0 0.0
    %783 = vmatpush1.msra.mxu0 0.0
    %784 = vmatprep.subr.mxu0 0.0
    %785 = vmatpush1.msra.mxu0 0.0
    %786 = vmatprep.subr.mxu0 0.0
    %787 = vmatpush1.msra.mxu0 0.0
    %788 = vmatprep.subr.mxu0 0.0
    %789 = vmatpush1.msra.mxu0 0.0
    %790 = vmatprep.subr.mxu0 0.0
    %791 = vmatpush1.msra.mxu0 0.0
    %792 = vmatprep.subr.mxu0 0.0
    %793 = vmatpush1.msra.mxu0 0.0
    %794 = vmatprep.subr.mxu0 0.0
    %795 = vmatpush1.msra.mxu0 0.0
    %796 = vmatprep.subr.mxu0 0.0
    %797 = vmatpush1.msra.mxu0 0.0
    %798 = vmatprep.subr.mxu0 0.0
    %799 = vmatpush1.msra.mxu0 0.0
    %800 = vmatprep.subr.mxu0 0.0
    %801 = vmatpush1.msra.mxu0 0.0
    %802 = vmatprep.subr.mxu0 0.0
    %803 = vmatpush1.msra.mxu0 0.0
    %804 = vmatprep.subr.mxu0 0.0
    %805 = vmatpush1.msra.mxu0 0.0
    %806 = vmatprep.subr.mxu0 0.0
    %807 = vmatpush1.msra.mxu0 0.0
    %808 = vmatprep.subr.mxu0 0.0
    %809 = vmatpush1.msra.mxu0 0.0
    %810 = vmatprep.subr.mxu0 0.0
    %811 = vmatpush1.msra.mxu0 0.0
    %812 = vmatprep.subr.mxu0 0.0
    %813 = vmatpush1.msra.mxu0 0.0
    %814 = vmatprep.subr.mxu0 0.0
    %815 = vmatpush1.msra.mxu0 0.0
    %816 = vmatprep.subr.mxu0 0.0
    %817 = vmatpush1.msra.mxu0 0.0
    %818 = vmatprep.subr.mxu0 0.0
    %819 = vmatpush1.msra.mxu0 0.0
    %820 = vmatprep.subr.mxu0 0.0
    %821 = vmatpush1.msra.mxu0 0.0
    %822 = vmatprep.subr.mxu0 0.0
    %823 = vmatpush1.msra.mxu0 0.0
    %824 = vmatprep.subr.mxu0 0.0
    %825 = vmatpush1.msra.mxu0 0.0
    %826 = vmatprep.subr.mxu0 0.0
    %827 = vmatpush1.msra.mxu0 0.0
    %828 = vmatprep.subr.mxu0 0.0
    %829 = vmatpush1.msra.mxu0 0.0
    %830 = vmatprep.mubr.f32.mxu0 0.0
    %831 = vmatmul.mubr.f32.gmra.mrb[0].mxu0 %v764
    %v832 = vpop.f32.mrb[0].mxu0
    %v833 = vadd.f32 %v144, %v832
    %v834 = vpop.f32.mrb[0].mxu0
    %835 = vdwg.mxu0
    %v836 = vmax.f32 %v833, 0.0
    %v837 = vmul.f32 %v836, 0.05555556
    %v838 = vadd.f32 %v762, %v837
    %v840 = vsel %vm146, %v838, 0
    %842 = vmatprep.subr.mxu0 0.0
    %843 = vmatpush1.msra.mxu0 %v135
    %844 = vmatprep.subr.mxu0 0.0
    %845 = vmatpush1.msra.mxu0 %v136
    %846 = vmatprep.subr.mxu0 0.0
    %847 = vmatpush1.msra.mxu0 %v137
    %848 = vmatprep.subr.mxu0 0.0
    %849 = vmatpush1.msra.mxu0 %v138
    %850 = vmatprep.subr.mxu0 0.0
    %851 = vmatpush1.msra.mxu0 0.0
    %852 = vmatprep.subr.mxu0 0.0
    %853 = vmatpush1.msra.mxu0 0.0
    %854 = vmatprep.subr.mxu0 0.0
    %855 = vmatpush1.msra.mxu0 0.0
    %856 = vmatprep.subr.mxu0 0.0
    %857 = vmatpush1.msra.mxu0 0.0
    %858 = vmatprep.subr.mxu0 0.0
    %859 = vmatpush1.msra.mxu0 0.0
    %860 = vmatprep.subr.mxu0 0.0
    %861 = vmatpush1.msra.mxu0 0.0
    %862 = vmatprep.subr.mxu0 0.0
    %863 = vmatpush1.msra.mxu0 0.0
    %864 = vmatprep.subr.mxu0 0.0
    %865 = vmatpush1.msra.mxu0 0.0
    %866 = vmatprep.subr.mxu0 0.0
    %867 = vmatpush1.msra.mxu0 0.0
    %868 = vmatprep.subr.mxu0 0.0
    %869 = vmatpush1.msra.mxu0 0.0
    %870 = vmatprep.subr.mxu0 0.0
    %871 = vmatpush1.msra.mxu0 0.0
    %872 = vmatprep.subr.mxu0 0.0
    %873 = vmatpush1.msra.mxu0 0.0
    %874 = vmatprep.subr.mxu0 0.0
    %875 = vmatpush1.msra.mxu0 0.0
    %876 = vmatprep.subr.mxu0 0.0
    %877 = vmatpush1.msra.mxu0 0.0
    %878 = vmatprep.subr.mxu0 0.0
    %879 = vmatpush1.msra.mxu0 0.0
    %880 = vmatprep.subr.mxu0 0.0
    %881 = vmatpush1.msra.mxu0 0.0
    %882 = vmatprep.subr.mxu0 0.0
    %883 = vmatpush1.msra.mxu0 0.0
    %884 = vmatprep.subr.mxu0 0.0
    %885 = vmatpush1.msra.mxu0 0.0
    %886 = vmatprep.subr.mxu0 0.0
    %887 = vmatpush1.msra.mxu0 0.0
    %888 = vmatprep.subr.mxu0 0.0
    %889 = vmatpush1.msra.mxu0 0.0
    %890 = vmatprep.subr.mxu0 0.0
    %891 = vmatpush1.msra.mxu0 0.0
    %892 = vmatprep.subr.mxu0 0.0
    %893 = vmatpush1.msra.mxu0 0.0
    %894 = vmatprep.subr.mxu0 0.0
    %895 = vmatpush1.msra.mxu0 0.0
    %896 = vmatprep.subr.mxu0 0.0
    %897 = vmatpush1.msra.mxu0 0.0
    %898 = vmatprep.subr.mxu0 0.0
    %899 = vmatpush1.msra.mxu0 0.0
    %900 = vmatprep.subr.mxu0 0.0
    %901 = vmatpush1.msra.mxu0 0.0
    %902 = vmatprep.subr.mxu0 0.0
    %903 = vmatpush1.msra.mxu0 0.0
    %904 = vmatprep.subr.mxu0 0.0
    %905 = vmatpush1.msra.mxu0 0.0
    %906 = vmatprep.mubr.f32.mxu0 0.0
    %907 = vmatmul.mubr.f32.gmra.mrb[0].mxu0 %v840
    %v908 = vpop.f32.mrb[0].mxu0
    %v909 = vadd.f32 %v144, %v908
    %v910 = vpop.f32.mrb[0].mxu0
    %911 = vdwg.mxu0
    %v912 = vmax.f32 %v909, 0.0
    %v913 = vmul.f32 %v912, 0.05555556
    %v914 = vadd.f32 %v762, %v913
    %v916 = vsel %vm146, %v914, 0
    %918 = vmatprep.subr.mxu0 0.0
    %919 = vmatpush1.msra.mxu0 %v135
    %920 = vmatprep.subr.mxu0 0.0
    %921 = vmatpush1.msra.mxu0 %v136
    %922 = vmatprep.subr.mxu0 0.0
    %923 = vmatpush1.msra.mxu0 %v137
    %924 = vmatprep.subr.mxu0 0.0
    %925 = vmatpush1.msra.mxu0 %v138
    %926 = vmatprep.subr.mxu0 0.0
    %927 = vmatpush1.msra.mxu0 0.0
    %928 = vmatprep.subr.mxu0 0.0
    %929 = vmatpush1.msra.mxu0 0.0
    %930 = vmatprep.subr.mxu0 0.0
    %931 = vmatpush1.msra.mxu0 0.0
    %932 = vmatprep.subr.mxu0 0.0
    %933 = vmatpush1.msra.mxu0 0.0
    %934 = vmatprep.subr.mxu0 0.0
    %935 = vmatpush1.msra.mxu0 0.0
    %936 = vmatprep.subr.mxu0 0.0
    %937 = vmatpush1.msra.mxu0 0.0
    %938 = vmatprep.subr.mxu0 0.0
    %939 = vmatpush1.msra.mxu0 0.0
    %940 = vmatprep.subr.mxu0 0.0
    %941 = vmatpush1.msra.mxu0 0.0
    %942 = vmatprep.subr.mxu0 0.0
    %943 = vmatpush1.msra.mxu0 0.0
    %944 = vmatprep.subr.mxu0 0.0
    %945 = vmatpush1.msra.mxu0 0.0
    %946 = vmatprep.subr.mxu0 0.0
    %947 = vmatpush1.msra.mxu0 0.0
    %948 = vmatprep.subr.mxu0 0.0
    %949 = vmatpush1.msra.mxu0 0.0
    %950 = vmatprep.subr.mxu0 0.0
    %951 = vmatpush1.msra.mxu0 0.0
    %952 = vmatprep.subr.mxu0 0.0
    %953 = vmatpush1.msra.mxu0 0.0
    %954 = vmatprep.subr.mxu0 0.0
    %955 = vmatpush1.msra.mxu0 0.0
    %956 = vmatprep.subr.mxu0 0.0
    %957 = vmatpush1.msra.mxu0 0.0
    %958 = vmatprep.subr.mxu0 0.0
    %959 = vmatpush1.msra.mxu0 0.0
    %960 = vmatprep.subr.mxu0 0.0
    %961 = vmatpush1.msra.mxu0 0.0
    %962 = vmatprep.subr.mxu0 0.0
    %963 = vmatpush1.msra.mxu0 0.0
    %964 = vmatprep.subr.mxu0 0.0
    %965 = vmatpush1.msra.mxu0 0.0
    %966 = vmatprep.subr.mxu0 0.0
    %967 = vmatpush1.msra.mxu0 0.0
    %968 = vmatprep.subr.mxu0 0.0
    %969 = vmatpush1.msra.mxu0 0.0
    %970 = vmatprep.subr.mxu0 0.0
    %971 = vmatpush1.msra.mxu0 0.0
    %972 = vmatprep.subr.mxu0 0.0
    %973 = vmatpush1.msra.mxu0 0.0
    %974 = vmatprep.subr.mxu0 0.0
    %975 = vmatpush1.msra.mxu0 0.0
    %976 = vmatprep.subr.mxu0 0.0
    %977 = vmatpush1.msra.mxu0 0.0
    %978 = vmatprep.subr.mxu0 0.0
    %979 = vmatpush1.msra.mxu0 0.0
    %980 = vmatprep.subr.mxu0 0.0
    %981 = vmatpush1.msra.mxu0 0.0
    %982 = vmatprep.mubr.f32.mxu0 0.0
    %983 = vmatmul.mubr.f32.gmra.mrb[0].mxu0 %v916
    %v984 = vpop.f32.mrb[0].mxu0
    %v985 = vadd.f32 %v144, %v984
    %v986 = vpop.f32.mrb[0].mxu0
    %987 = vdwg.mxu0
    %v988 = vmax.f32 %v985, 0.0
    %v989 = vmul.f32 %v988, 0.11111112
    %v990 = vadd.f32 %v762, %v989
    %v992 = vsel %vm146, %v990, 0
    %994 = vmatprep.subr.mxu0 0.0
    %995 = vmatpush1.msra.mxu0 %v135
    %996 = vmatprep.subr.mxu0 0.0
    %997 = vmatpush1.msra.mxu0 %v136
    %998 = vmatprep.subr.mxu0 0.0
    %999 = vmatpush1.msra.mxu0 %v137
    %1000 = vmatprep.subr.mxu0 0.0
    %1001 = vmatpush1.msra.mxu0 %v138
    %1002 = vmatprep.subr.mxu0 0.0
    %1003 = vmatpush1.msra.mxu0 0.0
    %1004 = vmatprep.subr.mxu0 0.0
    %1005 = vmatpush1.msra.mxu0 0.0
    %1006 = vmatprep.subr.mxu0 0.0
    %1007 = vmatpush1.msra.mxu0 0.0
    %1008 = vmatprep.subr.mxu0 0.0
    %1009 = vmatpush1.msra.mxu0 0.0
    %1010 = vmatprep.subr.mxu0 0.0
    %1011 = vmatpush1.msra.mxu0 0.0
    %1012 = vmatprep.subr.mxu0 0.0
    %1013 = vmatpush1.msra.mxu0 0.0
    %1014 = vmatprep.subr.mxu0 0.0
    %1015 = vmatpush1.msra.mxu0 0.0
    %1016 = vmatprep.subr.mxu0 0.0
    %1017 = vmatpush1.msra.mxu0 0.0
    %1018 = vmatprep.subr.mxu0 0.0
    %1019 = vmatpush1.msra.mxu0 0.0
    %1020 = vmatprep.subr.mxu0 0.0
    %1021 = vmatpush1.msra.mxu0 0.0
    %1022 = vmatprep.subr.mxu0 0.0
    %1023 = vmatpush1.msra.mxu0 0.0
    %1024 = vmatprep.subr.mxu0 0.0
    %1025 = vmatpush1.msra.mxu0 0.0
    %1026 = vmatprep.subr.mxu0 0.0
    %1027 = vmatpush1.msra.mxu0 0.0
    %1028 = vmatprep.subr.mxu0 0.0
    %1029 = vmatpush1.msra.mxu0 0.0
    %1030 = vmatprep.subr.mxu0 0.0
    %1031 = vmatpush1.msra.mxu0 0.0
    %1032 = vmatprep.subr.mxu0 0.0
    %1033 = vmatpush1.msra.mxu0 0.0
    %1034 = vmatprep.subr.mxu0 0.0
    %1035 = vmatpush1.msra.mxu0 0.0
    %1036 = vmatprep.subr.mxu0 0.0
    %1037 = vmatpush1.msra.mxu0 0.0
    %1038 = vmatprep.subr.mxu0 0.0
    %1039 = vmatpush1.msra.mxu0 0.0
    %1040 = vmatprep.subr.mxu0 0.0
    %1041 = vmatpush1.msra.mxu0 0.0
    %1042 = vmatprep.subr.mxu0 0.0
    %1043 = vmatpush1.msra.mxu0 0.0
    %1044 = vmatprep.subr.mxu0 0.0
    %1045 = vmatpush1.msra.mxu0 0.0
    %1046 = vmatprep.subr.mxu0 0.0
    %1047 = vmatpush1.msra.mxu0 0.0
    %1048 = vmatprep.subr.mxu0 0.0
    %1049 = vmatpush1.msra.mxu0 0.0
    %1050 = vmatprep.subr.mxu0 0.0
    %1051 = vmatpush1.msra.mxu0 0.0
    %1052 = vmatprep.subr.mxu0 0.0
    %1053 = vmatpush1.msra.mxu0 0.0
    %1054 = vmatprep.subr.mxu0 0.0
    %1055 = vmatpush1.msra.mxu0 0.0
    %1056 = vmatprep.subr.mxu0 0.0
    %1057 = vmatpush1.msra.mxu0 0.0
    %1058 = vmatprep.mubr.f32.mxu0 0.0
    %1059 = vmatmul.mubr.f32.gmra.mrb[0].mxu0 %v992
    %v1060 = vpop.f32.mrb[0].mxu0
    %v1061 = vadd.f32 %v144, %v1060
    %v1062 = vpop.f32.mrb[0].mxu0
    %1063 = vdwg.mxu0
    %v1064 = vmax.f32 %v1061, 0.0
    %v1065 = vadd.f32 %v912, %v988
    %v1066 = vmul.f32 %v1065, 2.0
    %v1067 = vadd.f32 %v836, %v1066
    %v1068 = vadd.f32 %v1067, %v1064
    %v1069 = vmul.f32 %v1068, 0.01851852
    %v1070 = vadd.f32 %v762, %v1069
    %v1072 = vsel %vm146, %v1070, 0
    %1074 = vmatprep.subr.mxu0 0.0
    %1075 = vmatpush1.msra.mxu0 %v135
    %1076 = vmatprep.subr.mxu0 0.0
    %1077 = vmatpush1.msra.mxu0 %v136
    %1078 = vmatprep.subr.mxu0 0.0
    %1079 = vmatpush1.msra.mxu0 %v137
    %1080 = vmatprep.subr.mxu0 0.0
    %1081 = vmatpush1.msra.mxu0 %v138
    %1082 = vmatprep.subr.mxu0 0.0
    %1083 = vmatpush1.msra.mxu0 0.0
    %1084 = vmatprep.subr.mxu0 0.0
    %1085 = vmatpush1.msra.mxu0 0.0
    %1086 = vmatprep.subr.mxu0 0.0
    %1087 = vmatpush1.msra.mxu0 0.0
    %1088 = vmatprep.subr.mxu0 0.0
    %1089 = vmatpush1.msra.mxu0 0.0
    %1090 = vmatprep.subr.mxu0 0.0
    %1091 = vmatpush1.msra.mxu0 0.0
    %1092 = vmatprep.subr.mxu0 0.0
    %1093 = vmatpush1.msra.mxu0 0.0
    %1094 = vmatprep.subr.mxu0 0.0
    %1095 = vmatpush1.msra.mxu0 0.0
    %1096 = vmatprep.subr.mxu0 0.0
    %1097 = vmatpush1.msra.mxu0 0.0
    %1098 = vmatprep.subr.mxu0 0.0
    %1099 = vmatpush1.msra.mxu0 0.0
    %1100 = vmatprep.subr.mxu0 0.0
    %1101 = vmatpush1.msra.mxu0 0.0
    %1102 = vmatprep.subr.mxu0 0.0
    %1103 = vmatpush1.msra.mxu0 0.0
    %1104 = vmatprep.subr.mxu0 0.0
    %1105 = vmatpush1.msra.mxu0 0.0
    %1106 = vmatprep.subr.mxu0 0.0
    %1107 = vmatpush1.msra.mxu0 0.0
    %1108 = vmatprep.subr.mxu0 0.0
    %1109 = vmatpush1.msra.mxu0 0.0
    %1110 = vmatprep.subr.mxu0 0.0
    %1111 = vmatpush1.msra.mxu0 0.0
    %1112 = vmatprep.subr.mxu0 0.0
    %1113 = vmatpush1.msra.mxu0 0.0
    %1114 = vmatprep.subr.mxu0 0.0
    %1115 = vmatpush1.msra.mxu0 0.0
    %1116 = vmatprep.subr.mxu0 0.0
    %1117 = vmatpush1.msra.mxu0 0.0
    %1118 = vmatprep.subr.mxu0 0.0
    %1119 = vmatpush1.msra.mxu0 0.0
    %1120 = vmatprep.subr.mxu0 0.0
    %1121 = vmatpush1.msra.mxu0 0.0
    %1122 = vmatprep.subr.mxu0 0.0
    %1123 = vmatpush1.msra.mxu0 0.0
    %1124 = vmatprep.subr.mxu0 0.0
    %1125 = vmatpush1.msra.mxu0 0.0
    %1126 = vmatprep.subr.mxu0 0.0
    %1127 = vmatpush1.msra.mxu0 0.0
    %1128 = vmatprep.subr.mxu0 0.0
    %1129 = vmatpush1.msra.mxu0 0.0
    %1130 = vmatprep.subr.mxu0 0.0
    %1131 = vmatpush1.msra.mxu0 0.0
    %1132 = vmatprep.subr.mxu0 0.0
    %1133 = vmatpush1.msra.mxu0 0.0
    %1134 = vmatprep.subr.mxu0 0.0
    %1135 = vmatpush1.msra.mxu0 0.0
    %1136 = vmatprep.subr.mxu0 0.0
    %1137 = vmatpush1.msra.mxu0 0.0
    %1138 = vmatprep.mubr.f32.mxu0 0.0
    %1139 = vmatmul.mubr.f32.gmra.mrb[0].mxu0 %v1072
    %v1140 = vpop.f32.mrb[0].mxu0
    %v1141 = vadd.f32 %v144, %v1140
    %v1142 = vpop.f32.mrb[0].mxu0
    %1143 = vdwg.mxu0
    %v1144 = vmax.f32 %v1141, 0.0
    %v1145 = vmul.f32 %v1144, 0.055555552
    %v1146 = vadd.f32 %v1070, %v1145
    %v1148 = vsel %vm146, %v1146, 0
    %1150 = vmatprep.subr.mxu0 0.0
    %1151 = vmatpush1.msra.mxu0 %v135
    %1152 = vmatprep.subr.mxu0 0.0
    %1153 = vmatpush1.msra.mxu0 %v136
    %1154 = vmatprep.subr.mxu0 0.0
    %1155 = vmatpush1.msra.mxu0 %v137
    %1156 = vmatprep.subr.mxu0 0.0
    %1157 = vmatpush1.msra.mxu0 %v138
    %1158 = vmatprep.subr.mxu0 0.0
    %1159 = vmatpush1.msra.mxu0 0.0
    %1160 = vmatprep.subr.mxu0 0.0
    %1161 = vmatpush1.msra.mxu0 0.0
    %1162 = vmatprep.subr.mxu0 0.0
    %1163 = vmatpush1.msra.mxu0 0.0
    %1164 = vmatprep.subr.mxu0 0.0
    %1165 = vmatpush1.msra.mxu0 0.0
    %1166 = vmatprep.subr.mxu0 0.0
    %1167 = vmatpush1.msra.mxu0 0.0
    %1168 = vmatprep.subr.mxu0 0.0
    %1169 = vmatpush1.msra.mxu0 0.0
    %1170 = vmatprep.subr.mxu0 0.0
    %1171 = vmatpush1.msra.mxu0 0.0
    %1172 = vmatprep.subr.mxu0 0.0
    %1173 = vmatpush1.msra.mxu0 0.0
    %1174 = vmatprep.subr.mxu0 0.0
    %1175 = vmatpush1.msra.mxu0 0.0
    %1176 = vmatprep.subr.mxu0 0.0
    %1177 = vmatpush1.msra.mxu0 0.0
    %1178 = vmatprep.subr.mxu0 0.0
    %1179 = vmatpush1.msra.mxu0 0.0
    %1180 = vmatprep.subr.mxu0 0.0
    %1181 = vmatpush1.msra.mxu0 0.0
    %1182 = vmatprep.subr.mxu0 0.0
    %1183 = vmatpush1.msra.mxu0 0.0
    %1184 = vmatprep.subr.mxu0 0.0
    %1185 = vmatpush1.msra.mxu0 0.0
    %1186 = vmatprep.subr.mxu0 0.0
    %1187 = vmatpush1.msra.mxu0 0.0
    %1188 = vmatprep.subr.mxu0 0.0
    %1189 = vmatpush1.msra.mxu0 0.0
    %1190 = vmatprep.subr.mxu0 0.0
    %1191 = vmatpush1.msra.mxu0 0.0
    %1192 = vmatprep.subr.mxu0 0.0
    %1193 = vmatpush1.msra.mxu0 0.0
    %1194 = vmatprep.subr.mxu0 0.0
    %1195 = vmatpush1.msra.mxu0 0.0
    %1196 = vmatprep.subr.mxu0 0.0
    %1197 = vmatpush1.msra.mxu0 0.0
    %1198 = vmatprep.subr.mxu0 0.0
    %1199 = vmatpush1.msra.mxu0 0.0
    %1200 = vmatprep.subr.mxu0 0.0
    %1201 = vmatpush1.msra.mxu0 0.0
    %1202 = vmatprep.subr.mxu0 0.0
    %1203 = vmatpush1.msra.mxu0 0.0
    %1204 = vmatprep.subr.mxu0 0.0
    %1205 = vmatpush1.msra.mxu0 0.0
    %1206 = vmatprep.subr.mxu0 0.0
    %1207 = vmatpush1.msra.mxu0 0.0
    %1208 = vmatprep.subr.mxu0 0.0
    %1209 = vmatpush1.msra.mxu0 0.0
    %1210 = vmatprep.subr.mxu0 0.0
    %1211 = vmatpush1.msra.mxu0 0.0
    %1212 = vmatprep.subr.mxu0 0.0
    %1213 = vmatpush1.msra.mxu0 0.0
    %1214 = vmatprep.mubr.f32.mxu0 0.0
    %1215 = vmatmul.mubr.f32.gmra.mrb[0].mxu0 %v1148
    %v1216 = vpop.f32.mrb[0].mxu0
    %v1217 = vadd.f32 %v144, %v1216
    %v1218 = vpop.f32.mrb[0].mxu0
    %1219 = vdwg.mxu0
    %v1220 = vmax.f32 %v1217, 0.0
    %v1221 = vmul.f32 %v1220, 0.055555552
    %v1222 = vadd.f32 %v1070, %v1221
    %v1224 = vsel %vm146, %v1222, 0
    %1226 = vmatprep.subr.mxu0 0.0
    %1227 = vmatpush1.msra.mxu0 %v135
    %1228 = vmatprep.subr.mxu0 0.0
    %1229 = vmatpush1.msra.mxu0 %v136
    %1230 = vmatprep.subr.mxu0 0.0
    %1231 = vmatpush1.msra.mxu0 %v137
    %1232 = vmatprep.subr.mxu0 0.0
    %1233 = vmatpush1.msra.mxu0 %v138
    %1234 = vmatprep.subr.mxu0 0.0
    %1235 = vmatpush1.msra.mxu0 0.0
    %1236 = vmatprep.subr.mxu0 0.0
    %1237 = vmatpush1.msra.mxu0 0.0
    %1238 = vmatprep.subr.mxu0 0.0
    %1239 = vmatpush1.msra.mxu0 0.0
    %1240 = vmatprep.subr.mxu0 0.0
    %1241 = vmatpush1.msra.mxu0 0.0
    %1242 = vmatprep.subr.mxu0 0.0
    %1243 = vmatpush1.msra.mxu0 0.0
    %1244 = vmatprep.subr.mxu0 0.0
    %1245 = vmatpush1.msra.mxu0 0.0
    %1246 = vmatprep.subr.mxu0 0.0
    %1247 = vmatpush1.msra.mxu0 0.0
    %1248 = vmatprep.subr.mxu0 0.0
    %1249 = vmatpush1.msra.mxu0 0.0
    %1250 = vmatprep.subr.mxu0 0.0
    %1251 = vmatpush1.msra.mxu0 0.0
    %1252 = vmatprep.subr.mxu0 0.0
    %1253 = vmatpush1.msra.mxu0 0.0
    %1254 = vmatprep.subr.mxu0 0.0
    %1255 = vmatpush1.msra.mxu0 0.0
    %1256 = vmatprep.subr.mxu0 0.0
    %1257 = vmatpush1.msra.mxu0 0.0
    %1258 = vmatprep.subr.mxu0 0.0
    %1259 = vmatpush1.msra.mxu0 0.0
    %1260 = vmatprep.subr.mxu0 0.0
    %1261 = vmatpush1.msra.mxu0 0.0
    %1262 = vmatprep.subr.mxu0 0.0
    %1263 = vmatpush1.msra.mxu0 0.0
    %1264 = vmatprep.subr.mxu0 0.0
    %1265 = vmatpush1.msra.mxu0 0.0
    %1266 = vmatprep.subr.mxu0 0.0
    %1267 = vmatpush1.msra.mxu0 0.0
    %1268 = vmatprep.subr.mxu0 0.0
    %1269 = vmatpush1.msra.mxu0 0.0
    %1270 = vmatprep.subr.mxu0 0.0
    %1271 = vmatpush1.msra.mxu0 0.0
    %1272 = vmatprep.subr.mxu0 0.0
    %1273 = vmatpush1.msra.mxu0 0.0
    %1274 = vmatprep.subr.mxu0 0.0
    %1275 = vmatpush1.msra.mxu0 0.0
    %1276 = vmatprep.subr.mxu0 0.0
    %1277 = vmatpush1.msra.mxu0 0.0
    %1278 = vmatprep.subr.mxu0 0.0
    %1279 = vmatpush1.msra.mxu0 0.0
    %1280 = vmatprep.subr.mxu0 0.0
    %1281 = vmatpush1.msra.mxu0 0.0
    %1282 = vmatprep.subr.mxu0 0.0
    %1283 = vmatpush1.msra.mxu0 0.0
    %1284 = vmatprep.subr.mxu0 0.0
    %1285 = vmatpush1.msra.mxu0 0.0
    %1286 = vmatprep.subr.mxu0 0.0
    %1287 = vmatpush1.msra.mxu0 0.0
    %1288 = vmatprep.subr.mxu0 0.0
    %1289 = vmatpush1.msra.mxu0 0.0
    %1290 = vmatprep.mubr.f32.mxu0 0.0
    %1291 = vmatmul.mubr.f32.gmra.mrb[0].mxu0 %v1224
    %v1292 = vpop.f32.mrb[0].mxu0
    %v1293 = vadd.f32 %v144, %v1292
    %v1294 = vpop.f32.mrb[0].mxu0
    %1295 = vdwg.mxu0
    %v1296 = vmax.f32 %v1293, 0.0
    %v1297 = vmul.f32 %v1296, 0.111111104
    %v1298 = vadd.f32 %v1070, %v1297
    %v1300 = vsel %vm146, %v1298, 0
    %1302 = vmatprep.subr.mxu0 0.0
    %1303 = vmatpush1.msra.mxu0 %v135
    %1304 = vmatprep.subr.mxu0 0.0
    %1305 = vmatpush1.msra.mxu0 %v136
    %1306 = vmatprep.subr.mxu0 0.0
    %1307 = vmatpush1.msra.mxu0 %v137
    %1308 = vmatprep.subr.mxu0 0.0
    %1309 = vmatpush1.msra.mxu0 %v138
    %1310 = vmatprep.subr.mxu0 0.0
    %1311 = vmatpush1.msra.mxu0 0.0
    %1312 = vmatprep.subr.mxu0 0.0
    %1313 = vmatpush1.msra.mxu0 0.0
    %1314 = vmatprep.subr.mxu0 0.0
    %1315 = vmatpush1.msra.mxu0 0.0
    %1316 = vmatprep.subr.mxu0 0.0
    %1317 = vmatpush1.msra.mxu0 0.0
    %1318 = vmatprep.subr.mxu0 0.0
    %1319 = vmatpush1.msra.mxu0 0.0
    %1320 = vmatprep.subr.mxu0 0.0
    %1321 = vmatpush1.msra.mxu0 0.0
    %1322 = vmatprep.subr.mxu0 0.0
    %1323 = vmatpush1.msra.mxu0 0.0
    %1324 = vmatprep.subr.mxu0 0.0
    %1325 = vmatpush1.msra.mxu0 0.0
    %1326 = vmatprep.subr.mxu0 0.0
    %1327 = vmatpush1.msra.mxu0 0.0
    %1328 = vmatprep.subr.mxu0 0.0
    %1329 = vmatpush1.msra.mxu0 0.0
    %1330 = vmatprep.subr.mxu0 0.0
    %1331 = vmatpush1.msra.mxu0 0.0
    %1332 = vmatprep.subr.mxu0 0.0
    %1333 = vmatpush1.msra.mxu0 0.0
    %1334 = vmatprep.subr.mxu0 0.0
    %1335 = vmatpush1.msra.mxu0 0.0
    %1336 = vmatprep.subr.mxu0 0.0
    %1337 = vmatpush1.msra.mxu0 0.0
    %1338 = vmatprep.subr.mxu0 0.0
    %1339 = vmatpush1.msra.mxu0 0.0
    %1340 = vmatprep.subr.mxu0 0.0
    %1341 = vmatpush1.msra.mxu0 0.0
    %1342 = vmatprep.subr.mxu0 0.0
    %1343 = vmatpush1.msra.mxu0 0.0
    %1344 = vmatprep.subr.mxu0 0.0
    %1345 = vmatpush1.msra.mxu0 0.0
    %1346 = vmatprep.subr.mxu0 0.0
    %1347 = vmatpush1.msra.mxu0 0.0
    %1348 = vmatprep.subr.mxu0 0.0
    %1349 = vmatpush1.msra.mxu0 0.0
    %1350 = vmatprep.subr.mxu0 0.0
    %1351 = vmatpush1.msra.mxu0 0.0
    %1352 = vmatprep.subr.mxu0 0.0
    %1353 = vmatpush1.msra.mxu0 0.0
    %1354 = vmatprep.subr.mxu0 0.0
    %1355 = vmatpush1.msra.mxu0 0.0
    %1356 = vmatprep.subr.mxu0 0.0
    %1357 = vmatpush1.msra.mxu0 0.0
    %1358 = vmatprep.subr.mxu0 0.0
    %1359 = vmatpush1.msra.mxu0 0.0
    %1360 = vmatprep.subr.mxu0 0.0
    %1361 = vmatpush1.msra.mxu0 0.0
    %1362 = vmatprep.subr.mxu0 0.0
    %1363 = vmatpush1.msra.mxu0 0.0
    %1364 = vmatprep.subr.mxu0 0.0
    %1365 = vmatpush1.msra.mxu0 0.0
    %1366 = vmatprep.mubr.f32.mxu0 0.0
    %1367 = vmatmul.mubr.f32.gmra.mrb[0].mxu0 %v1300
    %v1368 = vpop.f32.mrb[0].mxu0
    %v1369 = vadd.f32 %v144, %v1368
    %v1370 = vpop.f32.mrb[0].mxu0
    %1371 = vdwg.mxu0
    %v1372 = vmax.f32 %v1369, 0.0
    %v1373 = vadd.f32 %v1220, %v1296
    %v1374 = vmul.f32 %v1373, 2.0
    %v1375 = vadd.f32 %v1144, %v1374
    %v1376 = vadd.f32 %v1375, %v1372
    %v1377 = vmul.f32 %v1376, 0.018518517
    %v1378 = vadd.f32 %v1070, %v1377
    %v1380 = vsel %vm146, %v1378, 0
    %1382 = vmatprep.subr.mxu0 0.0
    %1383 = vmatpush1.msra.mxu0 %v135
    %1384 = vmatprep.subr.mxu0 0.0
    %1385 = vmatpush1.msra.mxu0 %v136
    %1386 = vmatprep.subr.mxu0 0.0
    %1387 = vmatpush1.msra.mxu0 %v137
    %1388 = vmatprep.subr.mxu0 0.0
    %1389 = vmatpush1.msra.mxu0 %v138
    %1390 = vmatprep.subr.mxu0 0.0
    %1391 = vmatpush1.msra.mxu0 0.0
    %1392 = vmatprep.subr.mxu0 0.0
    %1393 = vmatpush1.msra.mxu0 0.0
    %1394 = vmatprep.subr.mxu0 0.0
    %1395 = vmatpush1.msra.mxu0 0.0
    %1396 = vmatprep.subr.mxu0 0.0
    %1397 = vmatpush1.msra.mxu0 0.0
    %1398 = vmatprep.subr.mxu0 0.0
    %1399 = vmatpush1.msra.mxu0 0.0
    %1400 = vmatprep.subr.mxu0 0.0
    %1401 = vmatpush1.msra.mxu0 0.0
    %1402 = vmatprep.subr.mxu0 0.0
    %1403 = vmatpush1.msra.mxu0 0.0
    %1404 = vmatprep.subr.mxu0 0.0
    %1405 = vmatpush1.msra.mxu0 0.0
    %1406 = vmatprep.subr.mxu0 0.0
    %1407 = vmatpush1.msra.mxu0 0.0
    %1408 = vmatprep.subr.mxu0 0.0
    %1409 = vmatpush1.msra.mxu0 0.0
    %1410 = vmatprep.subr.mxu0 0.0
    %1411 = vmatpush1.msra.mxu0 0.0
    %1412 = vmatprep.subr.mxu0 0.0
    %1413 = vmatpush1.msra.mxu0 0.0
    %1414 = vmatprep.subr.mxu0 0.0
    %1415 = vmatpush1.msra.mxu0 0.0
    %1416 = vmatprep.subr.mxu0 0.0
    %1417 = vmatpush1.msra.mxu0 0.0
    %1418 = vmatprep.subr.mxu0 0.0
    %1419 = vmatpush1.msra.mxu0 0.0
    %1420 = vmatprep.subr.mxu0 0.0
    %1421 = vmatpush1.msra.mxu0 0.0
    %1422 = vmatprep.subr.mxu0 0.0
    %1423 = vmatpush1.msra.mxu0 0.0
    %1424 = vmatprep.subr.mxu0 0.0
    %1425 = vmatpush1.msra.mxu0 0.0
    %1426 = vmatprep.subr.mxu0 0.0
    %1427 = vmatpush1.msra.mxu0 0.0
    %1428 = vmatprep.subr.mxu0 0.0
    %1429 = vmatpush1.msra.mxu0 0.0
    %1430 = vmatprep.subr.mxu0 0.0
    %1431 = vmatpush1.msra.mxu0 0.0
    %1432 = vmatprep.subr.mxu0 0.0
    %1433 = vmatpush1.msra.mxu0 0.0
    %1434 = vmatprep.subr.mxu0 0.0
    %1435 = vmatpush1.msra.mxu0 0.0
    %1436 = vmatprep.subr.mxu0 0.0
    %1437 = vmatpush1.msra.mxu0 0.0
    %1438 = vmatprep.subr.mxu0 0.0
    %1439 = vmatpush1.msra.mxu0 0.0
    %1440 = vmatprep.subr.mxu0 0.0
    %1441 = vmatpush1.msra.mxu0 0.0
    %1442 = vmatprep.subr.mxu0 0.0
    %1443 = vmatpush1.msra.mxu0 0.0
    %1444 = vmatprep.subr.mxu0 0.0
    %1445 = vmatpush1.msra.mxu0 0.0
    %1446 = vmatprep.mubr.f32.mxu0 0.0
    %1447 = vmatmul.mubr.f32.gmra.mrb[0].mxu0 %v1380
    %v1448 = vpop.f32.mrb[0].mxu0
    %v1449 = vadd.f32 %v144, %v1448
    %v1450 = vpop.f32.mrb[0].mxu0
    %1451 = vdwg.mxu0
    %v1452 = vmax.f32 %v1449, 0.0
    %v1453 = vmul.f32 %v1452, 0.055555567
    %v1454 = vadd.f32 %v1378, %v1453
    %v1456 = vsel %vm146, %v1454, 0
    %1458 = vmatprep.subr.mxu0 0.0
    %1459 = vmatpush1.msra.mxu0 %v135
    %1460 = vmatprep.subr.mxu0 0.0
    %1461 = vmatpush1.msra.mxu0 %v136
    %1462 = vmatprep.subr.mxu0 0.0
    %1463 = vmatpush1.msra.mxu0 %v137
    %1464 = vmatprep.subr.mxu0 0.0
    %1465 = vmatpush1.msra.mxu0 %v138
    %1466 = vmatprep.subr.mxu0 0.0
    %1467 = vmatpush1.msra.mxu0 0.0
    %1468 = vmatprep.subr.mxu0 0.0
    %1469 = vmatpush1.msra.mxu0 0.0
    %1470 = vmatprep.subr.mxu0 0.0
    %1471 = vmatpush1.msra.mxu0 0.0
    %1472 = vmatprep.subr.mxu0 0.0
    %1473 = vmatpush1.msra.mxu0 0.0
    %1474 = vmatprep.subr.mxu0 0.0
    %1475 = vmatpush1.msra.mxu0 0.0
    %1476 = vmatprep.subr.mxu0 0.0
    %1477 = vmatpush1.msra.mxu0 0.0
    %1478 = vmatprep.subr.mxu0 0.0
    %1479 = vmatpush1.msra.mxu0 0.0
    %1480 = vmatprep.subr.mxu0 0.0
    %1481 = vmatpush1.msra.mxu0 0.0
    %1482 = vmatprep.subr.mxu0 0.0
    %1483 = vmatpush1.msra.mxu0 0.0
    %1484 = vmatprep.subr.mxu0 0.0
    %1485 = vmatpush1.msra.mxu0 0.0
    %1486 = vmatprep.subr.mxu0 0.0
    %1487 = vmatpush1.msra.mxu0 0.0
    %1488 = vmatprep.subr.mxu0 0.0
    %1489 = vmatpush1.msra.mxu0 0.0
    %1490 = vmatprep.subr.mxu0 0.0
    %1491 = vmatpush1.msra.mxu0 0.0
    %1492 = vmatprep.subr.mxu0 0.0
    %1493 = vmatpush1.msra.mxu0 0.0
    %1494 = vmatprep.subr.mxu0 0.0
    %1495 = vmatpush1.msra.mxu0 0.0
    %1496 = vmatprep.subr.mxu0 0.0
    %1497 = vmatpush1.msra.mxu0 0.0
    %1498 = vmatprep.subr.mxu0 0.0
    %1499 = vmatpush1.msra.mxu0 0.0
    %1500 = vmatprep.subr.mxu0 0.0
    %1501 = vmatpush1.msra.mxu0 0.0
    %1502 = vmatprep.subr.mxu0 0.0
    %1503 = vmatpush1.msra.mxu0 0.0
    %1504 = vmatprep.subr.mxu0 0.0
    %1505 = vmatpush1.msra.mxu0 0.0
    %1506 = vmatprep.subr.mxu0 0.0
    %1507 = vmatpush1.msra.mxu0 0.0
    %1508 = vmatprep.subr.mxu0 0.0
    %1509 = vmatpush1.msra.mxu0 0.0
    %1510 = vmatprep.subr.mxu0 0.0
    %1511 = vmatpush1.msra.mxu0 0.0
    %1512 = vmatprep.subr.mxu0 0.0
    %1513 = vmatpush1.msra.mxu0 0.0
    %1514 = vmatprep.subr.mxu0 0.0
    %1515 = vmatpush1.msra.mxu0 0.0
    %1516 = vmatprep.subr.mxu0 0.0
    %1517 = vmatpush1.msra.mxu0 0.0
    %1518 = vmatprep.subr.mxu0 0.0
    %1519 = vmatpush1.msra.mxu0 0.0
    %1520 = vmatprep.subr.mxu0 0.0
    %1521 = vmatpush1.msra.mxu0 0.0
    %1522 = vmatprep.mubr.f32.mxu0 0.0
    %1523 = vmatmul.mubr.f32.gmra.mrb[0].mxu0 %v1456
    %v1524 = vpop.f32.mrb[0].mxu0
    %v1525 = vadd.f32 %v144, %v1524
    %v1526 = vpop.f32.mrb[0].mxu0
    %1527 = vdwg.mxu0
    %v1528 = vmax.f32 %v1525, 0.0
    %v1529 = vmul.f32 %v1528, 0.055555567
    %v1530 = vadd.f32 %v1378, %v1529
    %v1532 = vsel %vm146, %v1530, 0
    %1534 = vmatprep.subr.mxu0 0.0
    %1535 = vmatpush1.msra.mxu0 %v135
    %1536 = vmatprep.subr.mxu0 0.0
    %1537 = vmatpush1.msra.mxu0 %v136
    %1538 = vmatprep.subr.mxu0 0.0
    %1539 = vmatpush1.msra.mxu0 %v137
    %1540 = vmatprep.subr.mxu0 0.0
    %1541 = vmatpush1.msra.mxu0 %v138
    %1542 = vmatprep.subr.mxu0 0.0
    %1543 = vmatpush1.msra.mxu0 0.0
    %1544 = vmatprep.subr.mxu0 0.0
    %1545 = vmatpush1.msra.mxu0 0.0
    %1546 = vmatprep.subr.mxu0 0.0
    %1547 = vmatpush1.msra.mxu0 0.0
    %1548 = vmatprep.subr.mxu0 0.0
    %1549 = vmatpush1.msra.mxu0 0.0
    %1550 = vmatprep.subr.mxu0 0.0
    %1551 = vmatpush1.msra.mxu0 0.0
    %1552 = vmatprep.subr.mxu0 0.0
    %1553 = vmatpush1.msra.mxu0 0.0
    %1554 = vmatprep.subr.mxu0 0.0
    %1555 = vmatpush1.msra.mxu0 0.0
    %1556 = vmatprep.subr.mxu0 0.0
    %1557 = vmatpush1.msra.mxu0 0.0
    %1558 = vmatprep.subr.mxu0 0.0
    %1559 = vmatpush1.msra.mxu0 0.0
    %1560 = vmatprep.subr.mxu0 0.0
    %1561 = vmatpush1.msra.mxu0 0.0
    %1562 = vmatprep.subr.mxu0 0.0
    %1563 = vmatpush1.msra.mxu0 0.0
    %1564 = vmatprep.subr.mxu0 0.0
    %1565 = vmatpush1.msra.mxu0 0.0
    %1566 = vmatprep.subr.mxu0 0.0
    %1567 = vmatpush1.msra.mxu0 0.0
    %1568 = vmatprep.subr.mxu0 0.0
    %1569 = vmatpush1.msra.mxu0 0.0
    %1570 = vmatprep.subr.mxu0 0.0
    %1571 = vmatpush1.msra.mxu0 0.0
    %1572 = vmatprep.subr.mxu0 0.0
    %1573 = vmatpush1.msra.mxu0 0.0
    %1574 = vmatprep.subr.mxu0 0.0
    %1575 = vmatpush1.msra.mxu0 0.0
    %1576 = vmatprep.subr.mxu0 0.0
    %1577 = vmatpush1.msra.mxu0 0.0
    %1578 = vmatprep.subr.mxu0 0.0
    %1579 = vmatpush1.msra.mxu0 0.0
    %1580 = vmatprep.subr.mxu0 0.0
    %1581 = vmatpush1.msra.mxu0 0.0
    %1582 = vmatprep.subr.mxu0 0.0
    %1583 = vmatpush1.msra.mxu0 0.0
    %1584 = vmatprep.subr.mxu0 0.0
    %1585 = vmatpush1.msra.mxu0 0.0
    %1586 = vmatprep.subr.mxu0 0.0
    %1587 = vmatpush1.msra.mxu0 0.0
    %1588 = vmatprep.subr.mxu0 0.0
    %1589 = vmatpush1.msra.mxu0 0.0
    %1590 = vmatprep.subr.mxu0 0.0
    %1591 = vmatpush1.msra.mxu0 0.0
    %1592 = vmatprep.subr.mxu0 0.0
    %1593 = vmatpush1.msra.mxu0 0.0
    %1594 = vmatprep.subr.mxu0 0.0
    %1595 = vmatpush1.msra.mxu0 0.0
    %1596 = vmatprep.subr.mxu0 0.0
    %1597 = vmatpush1.msra.mxu0 0.0
    %1598 = vmatprep.mubr.f32.mxu0 0.0
    %1599 = vmatmul.mubr.f32.gmra.mrb[0].mxu0 %v1532
    %v1600 = vpop.f32.mrb[0].mxu0
    %v1601 = vadd.f32 %v144, %v1600
    %v1602 = vpop.f32.mrb[0].mxu0
    %1603 = vdwg.mxu0
    %v1604 = vmax.f32 %v1601, 0.0
    %v1605 = vmul.f32 %v1604, 0.111111134
    %v1606 = vadd.f32 %v1378, %v1605
    %v1608 = vsel %vm146, %v1606, 0
    %1610 = vmatprep.subr.mxu0 0.0
    %1611 = vmatpush1.msra.mxu0 %v135
    %1612 = vmatprep.subr.mxu0 0.0
    %1613 = vmatpush1.msra.mxu0 %v136
    %1614 = vmatprep.subr.mxu0 0.0
    %1615 = vmatpush1.msra.mxu0 %v137
    %1616 = vmatprep.subr.mxu0 0.0
    %1617 = vmatpush1.msra.mxu0 %v138
    %1618 = vmatprep.subr.mxu0 0.0
    %1619 = vmatpush1.msra.mxu0 0.0
    %1620 = vmatprep.subr.mxu0 0.0
    %1621 = vmatpush1.msra.mxu0 0.0
    %1622 = vmatprep.subr.mxu0 0.0
    %1623 = vmatpush1.msra.mxu0 0.0
    %1624 = vmatprep.subr.mxu0 0.0
    %1625 = vmatpush1.msra.mxu0 0.0
    %1626 = vmatprep.subr.mxu0 0.0
    %1627 = vmatpush1.msra.mxu0 0.0
    %1628 = vmatprep.subr.mxu0 0.0
    %1629 = vmatpush1.msra.mxu0 0.0
    %1630 = vmatprep.subr.mxu0 0.0
    %1631 = vmatpush1.msra.mxu0 0.0
    %1632 = vmatprep.subr.mxu0 0.0
    %1633 = vmatpush1.msra.mxu0 0.0
    %1634 = vmatprep.subr.mxu0 0.0
    %1635 = vmatpush1.msra.mxu0 0.0
    %1636 = vmatprep.subr.mxu0 0.0
    %1637 = vmatpush1.msra.mxu0 0.0
    %1638 = vmatprep.subr.mxu0 0.0
    %1639 = vmatpush1.msra.mxu0 0.0
    %1640 = vmatprep.subr.mxu0 0.0
    %1641 = vmatpush1.msra.mxu0 0.0
    %1642 = vmatprep.subr.mxu0 0.0
    %1643 = vmatpush1.msra.mxu0 0.0
    %1644 = vmatprep.subr.mxu0 0.0
    %1645 = vmatpush1.msra.mxu0 0.0
    %1646 = vmatprep.subr.mxu0 0.0
    %1647 = vmatpush1.msra.mxu0 0.0
    %1648 = vmatprep.subr.mxu0 0.0
    %1649 = vmatpush1.msra.mxu0 0.0
    %1650 = vmatprep.subr.mxu0 0.0
    %1651 = vmatpush1.msra.mxu0 0.0
    %1652 = vmatprep.subr.mxu0 0.0
    %1653 = vmatpush1.msra.mxu0 0.0
    %1654 = vmatprep.subr.mxu0 0.0
    %1655 = vmatpush1.msra.mxu0 0.0
    %1656 = vmatprep.subr.mxu0 0.0
    %1657 = vmatpush1.msra.mxu0 0.0
    %1658 = vmatprep.subr.mxu0 0.0
    %1659 = vmatpush1.msra.mxu0 0.0
    %1660 = vmatprep.subr.mxu0 0.0
    %1661 = vmatpush1.msra.mxu0 0.0
    %1662 = vmatprep.subr.mxu0 0.0
    %1663 = vmatpush1.msra.mxu0 0.0
    %1664 = vmatprep.subr.mxu0 0.0
    %1665 = vmatpush1.msra.mxu0 0.0
    %1666 = vmatprep.subr.mxu0 0.0
    %1667 = vmatpush1.msra.mxu0 0.0
    %1668 = vmatprep.subr.mxu0 0.0
    %1669 = vmatpush1.msra.mxu0 0.0
    %1670 = vmatprep.subr.mxu0 0.0
    %1671 = vmatpush1.msra.mxu0 0.0
    %1672 = vmatprep.subr.mxu0 0.0
    %1673 = vmatpush1.msra.mxu0 0.0
    %1674 = vmatprep.mubr.f32.mxu0 0.0
    %1675 = vmatmul.mubr.f32.gmra.mrb[0].mxu0 %v1608
    %v1676 = vpop.f32.mrb[0].mxu0
    %v1677 = vadd.f32 %v144, %v1676
    %v1678 = vpop.f32.mrb[0].mxu0
    %1679 = vdwg.mxu0
    %v1680 = vmax.f32 %v1677, 0.0
    %v1681 = vadd.f32 %v1528, %v1604
    %v1682 = vmul.f32 %v1681, 2.0
    %v1683 = vadd.f32 %v1452, %v1682
    %v1684 = vadd.f32 %v1683, %v1680
    %v1685 = vmul.f32 %v1684, 0.018518522
    %v1686 = vadd.f32 %v1378, %v1685
    %v1688 = vsel %vm146, %v1686, 0
    %1690 = vmatprep.subr.mxu0 0.0
    %1691 = vmatpush1.msra.mxu0 %v135
    %1692 = vmatprep.subr.mxu0 0.0
    %1693 = vmatpush1.msra.mxu0 %v136
    %1694 = vmatprep.subr.mxu0 0.0
    %1695 = vmatpush1.msra.mxu0 %v137
    %1696 = vmatprep.subr.mxu0 0.0
    %1697 = vmatpush1.msra.mxu0 %v138
    %1698 = vmatprep.subr.mxu0 0.0
    %1699 = vmatpush1.msra.mxu0 0.0
    %1700 = vmatprep.subr.mxu0 0.0
    %1701 = vmatpush1.msra.mxu0 0.0
    %1702 = vmatprep.subr.mxu0 0.0
    %1703 = vmatpush1.msra.mxu0 0.0
    %1704 = vmatprep.subr.mxu0 0.0
    %1705 = vmatpush1.msra.mxu0 0.0
    %1706 = vmatprep.subr.mxu0 0.0
    %1707 = vmatpush1.msra.mxu0 0.0
    %1708 = vmatprep.subr.mxu0 0.0
    %1709 = vmatpush1.msra.mxu0 0.0
    %1710 = vmatprep.subr.mxu0 0.0
    %1711 = vmatpush1.msra.mxu0 0.0
    %1712 = vmatprep.subr.mxu0 0.0
    %1713 = vmatpush1.msra.mxu0 0.0
    %1714 = vmatprep.subr.mxu0 0.0
    %1715 = vmatpush1.msra.mxu0 0.0
    %1716 = vmatprep.subr.mxu0 0.0
    %1717 = vmatpush1.msra.mxu0 0.0
    %1718 = vmatprep.subr.mxu0 0.0
    %1719 = vmatpush1.msra.mxu0 0.0
    %1720 = vmatprep.subr.mxu0 0.0
    %1721 = vmatpush1.msra.mxu0 0.0
    %1722 = vmatprep.subr.mxu0 0.0
    %1723 = vmatpush1.msra.mxu0 0.0
    %1724 = vmatprep.subr.mxu0 0.0
    %1725 = vmatpush1.msra.mxu0 0.0
    %1726 = vmatprep.subr.mxu0 0.0
    %1727 = vmatpush1.msra.mxu0 0.0
    %1728 = vmatprep.subr.mxu0 0.0
    %1729 = vmatpush1.msra.mxu0 0.0
    %1730 = vmatprep.subr.mxu0 0.0
    %1731 = vmatpush1.msra.mxu0 0.0
    %1732 = vmatprep.subr.mxu0 0.0
    %1733 = vmatpush1.msra.mxu0 0.0
    %1734 = vmatprep.subr.mxu0 0.0
    %1735 = vmatpush1.msra.mxu0 0.0
    %1736 = vmatprep.subr.mxu0 0.0
    %1737 = vmatpush1.msra.mxu0 0.0
    %1738 = vmatprep.subr.mxu0 0.0
    %1739 = vmatpush1.msra.mxu0 0.0
    %1740 = vmatprep.subr.mxu0 0.0
    %1741 = vmatpush1.msra.mxu0 0.0
    %1742 = vmatprep.subr.mxu0 0.0
    %1743 = vmatpush1.msra.mxu0 0.0
    %1744 = vmatprep.subr.mxu0 0.0
    %1745 = vmatpush1.msra.mxu0 0.0
    %1746 = vmatprep.subr.mxu0 0.0
    %1747 = vmatpush1.msra.mxu0 0.0
    %1748 = vmatprep.subr.mxu0 0.0
    %1749 = vmatpush1.msra.mxu0 0.0
    %1750 = vmatprep.subr.mxu0 0.0
    %1751 = vmatpush1.msra.mxu0 0.0
    %1752 = vmatprep.subr.mxu0 0.0
    %1753 = vmatpush1.msra.mxu0 0.0
    %1754 = vmatprep.mubr.f32.mxu0 0.0
    %1755 = vmatmul.mubr.f32.gmra.mrb[0].mxu0 %v1688
    %v1756 = vpop.f32.mrb[0].mxu0
    %v1757 = vadd.f32 %v144, %v1756
    %v1758 = vpop.f32.mrb[0].mxu0
    %1759 = vdwg.mxu0
    %v1760 = vmax.f32 %v1757, 0.0
    %v1761 = vmul.f32 %v1760, 0.055555552
    %v1762 = vadd.f32 %v1686, %v1761
    %v1764 = vsel %vm146, %v1762, 0
    %1766 = vmatprep.subr.mxu0 0.0
    %1767 = vmatpush1.msra.mxu0 %v135
    %1768 = vmatprep.subr.mxu0 0.0
    %1769 = vmatpush1.msra.mxu0 %v136
    %1770 = vmatprep.subr.mxu0 0.0
    %1771 = vmatpush1.msra.mxu0 %v137
    %1772 = vmatprep.subr.mxu0 0.0
    %1773 = vmatpush1.msra.mxu0 %v138
    %1774 = vmatprep.subr.mxu0 0.0
    %1775 = vmatpush1.msra.mxu0 0.0
    %1776 = vmatprep.subr.mxu0 0.0
    %1777 = vmatpush1.msra.mxu0 0.0
    %1778 = vmatprep.subr.mxu0 0.0
    %1779 = vmatpush1.msra.mxu0 0.0
    %1780 = vmatprep.subr.mxu0 0.0
    %1781 = vmatpush1.msra.mxu0 0.0
    %1782 = vmatprep.subr.mxu0 0.0
    %1783 = vmatpush1.msra.mxu0 0.0
    %1784 = vmatprep.subr.mxu0 0.0
    %1785 = vmatpush1.msra.mxu0 0.0
    %1786 = vmatprep.subr.mxu0 0.0
    %1787 = vmatpush1.msra.mxu0 0.0
    %1788 = vmatprep.subr.mxu0 0.0
    %1789 = vmatpush1.msra.mxu0 0.0
    %1790 = vmatprep.subr.mxu0 0.0
    %1791 = vmatpush1.msra.mxu0 0.0
    %1792 = vmatprep.subr.mxu0 0.0
    %1793 = vmatpush1.msra.mxu0 0.0
    %1794 = vmatprep.subr.mxu0 0.0
    %1795 = vmatpush1.msra.mxu0 0.0
    %1796 = vmatprep.subr.mxu0 0.0
    %1797 = vmatpush1.msra.mxu0 0.0
    %1798 = vmatprep.subr.mxu0 0.0
    %1799 = vmatpush1.msra.mxu0 0.0
    %1800 = vmatprep.subr.mxu0 0.0
    %1801 = vmatpush1.msra.mxu0 0.0
    %1802 = vmatprep.subr.mxu0 0.0
    %1803 = vmatpush1.msra.mxu0 0.0
    %1804 = vmatprep.subr.mxu0 0.0
    %1805 = vmatpush1.msra.mxu0 0.0
    %1806 = vmatprep.subr.mxu0 0.0
    %1807 = vmatpush1.msra.mxu0 0.0
    %1808 = vmatprep.subr.mxu0 0.0
    %1809 = vmatpush1.msra.mxu0 0.0
    %1810 = vmatprep.subr.mxu0 0.0
    %1811 = vmatpush1.msra.mxu0 0.0
    %1812 = vmatprep.subr.mxu0 0.0
    %1813 = vmatpush1.msra.mxu0 0.0
    %1814 = vmatprep.subr.mxu0 0.0
    %1815 = vmatpush1.msra.mxu0 0.0
    %1816 = vmatprep.subr.mxu0 0.0
    %1817 = vmatpush1.msra.mxu0 0.0
    %1818 = vmatprep.subr.mxu0 0.0
    %1819 = vmatpush1.msra.mxu0 0.0
    %1820 = vmatprep.subr.mxu0 0.0
    %1821 = vmatpush1.msra.mxu0 0.0
    %1822 = vmatprep.subr.mxu0 0.0
    %1823 = vmatpush1.msra.mxu0 0.0
    %1824 = vmatprep.subr.mxu0 0.0
    %1825 = vmatpush1.msra.mxu0 0.0
    %1826 = vmatprep.subr.mxu0 0.0
    %1827 = vmatpush1.msra.mxu0 0.0
    %1828 = vmatprep.subr.mxu0 0.0
    %1829 = vmatpush1.msra.mxu0 0.0
    %1830 = vmatprep.mubr.f32.mxu0 0.0
    %1831 = vmatmul.mubr.f32.gmra.mrb[0].mxu0 %v1764
    %v1832 = vpop.f32.mrb[0].mxu0
    %v1833 = vadd.f32 %v144, %v1832
    %v1834 = vpop.f32.mrb[0].mxu0
    %1835 = vdwg.mxu0
    %v1836 = vmax.f32 %v1833, 0.0
    %v1837 = vmul.f32 %v1836, 0.055555552
    %v1838 = vadd.f32 %v1686, %v1837
    %v1840 = vsel %vm146, %v1838, 0
    %1842 = vmatprep.subr.mxu0 0.0
    %1843 = vmatpush1.msra.mxu0 %v135
    %1844 = vmatprep.subr.mxu0 0.0
    %1845 = vmatpush1.msra.mxu0 %v136
    %1846 = vmatprep.subr.mxu0 0.0
    %1847 = vmatpush1.msra.mxu0 %v137
    %1848 = vmatprep.subr.mxu0 0.0
    %1849 = vmatpush1.msra.mxu0 %v138
    %1850 = vmatprep.subr.mxu0 0.0
    %1851 = vmatpush1.msra.mxu0 0.0
    %1852 = vmatprep.subr.mxu0 0.0
    %1853 = vmatpush1.msra.mxu0 0.0
    %1854 = vmatprep.subr.mxu0 0.0
    %1855 = vmatpush1.msra.mxu0 0.0
    %1856 = vmatprep.subr.mxu0 0.0
    %1857 = vmatpush1.msra.mxu0 0.0
    %1858 = vmatprep.subr.mxu0 0.0
    %1859 = vmatpush1.msra.mxu0 0.0
    %1860 = vmatprep.subr.mxu0 0.0
    %1861 = vmatpush1.msra.mxu0 0.0
    %1862 = vmatprep.subr.mxu0 0.0
    %1863 = vmatpush1.msra.mxu0 0.0
    %1864 = vmatprep.subr.mxu0 0.0
    %1865 = vmatpush1.msra.mxu0 0.0
    %1866 = vmatprep.subr.mxu0 0.0
    %1867 = vmatpush1.msra.mxu0 0.0
    %1868 = vmatprep.subr.mxu0 0.0
    %1869 = vmatpush1.msra.mxu0 0.0
    %1870 = vmatprep.subr.mxu0 0.0
    %1871 = vmatpush1.msra.mxu0 0.0
    %1872 = vmatprep.subr.mxu0 0.0
    %1873 = vmatpush1.msra.mxu0 0.0
    %1874 = vmatprep.subr.mxu0 0.0
    %1875 = vmatpush1.msra.mxu0 0.0
    %1876 = vmatprep.subr.mxu0 0.0
    %1877 = vmatpush1.msra.mxu0 0.0
    %1878 = vmatprep.subr.mxu0 0.0
    %1879 = vmatpush1.msra.mxu0 0.0
    %1880 = vmatprep.subr.mxu0 0.0
    %1881 = vmatpush1.msra.mxu0 0.0
    %1882 = vmatprep.subr.mxu0 0.0
    %1883 = vmatpush1.msra.mxu0 0.0
    %1884 = vmatprep.subr.mxu0 0.0
    %1885 = vmatpush1.msra.mxu0 0.0
    %1886 = vmatprep.subr.mxu0 0.0
    %1887 = vmatpush1.msra.mxu0 0.0
    %1888 = vmatprep.subr.mxu0 0.0
    %1889 = vmatpush1.msra.mxu0 0.0
    %1890 = vmatprep.subr.mxu0 0.0
    %1891 = vmatpush1.msra.mxu0 0.0
    %1892 = vmatprep.subr.mxu0 0.0
    %1893 = vmatpush1.msra.mxu0 0.0
    %1894 = vmatprep.subr.mxu0 0.0
    %1895 = vmatpush1.msra.mxu0 0.0
    %1896 = vmatprep.subr.mxu0 0.0
    %1897 = vmatpush1.msra.mxu0 0.0
    %1898 = vmatprep.subr.mxu0 0.0
    %1899 = vmatpush1.msra.mxu0 0.0
    %1900 = vmatprep.subr.mxu0 0.0
    %1901 = vmatpush1.msra.mxu0 0.0
    %1902 = vmatprep.subr.mxu0 0.0
    %1903 = vmatpush1.msra.mxu0 0.0
    %1904 = vmatprep.subr.mxu0 0.0
    %1905 = vmatpush1.msra.mxu0 0.0
    %1906 = vmatprep.mubr.f32.mxu0 0.0
    %1907 = vmatmul.mubr.f32.gmra.mrb[0].mxu0 %v1840
    %v1908 = vpop.f32.mrb[0].mxu0
    %v1909 = vadd.f32 %v144, %v1908
    %v1910 = vpop.f32.mrb[0].mxu0
    %1911 = vdwg.mxu0
    %v1912 = vmax.f32 %v1909, 0.0
    %v1913 = vmul.f32 %v1912, 0.111111104
    %v1914 = vadd.f32 %v1686, %v1913
    %v1916 = vsel %vm146, %v1914, 0
    %1918 = vmatprep.subr.mxu0 0.0
    %1919 = vmatpush1.msra.mxu0 %v135
    %1920 = vmatprep.subr.mxu0 0.0
    %1921 = vmatpush1.msra.mxu0 %v136
    %1922 = vmatprep.subr.mxu0 0.0
    %1923 = vmatpush1.msra.mxu0 %v137
    %1924 = vmatprep.subr.mxu0 0.0
    %1925 = vmatpush1.msra.mxu0 %v138
    %1926 = vmatprep.subr.mxu0 0.0
    %1927 = vmatpush1.msra.mxu0 0.0
    %1928 = vmatprep.subr.mxu0 0.0
    %1929 = vmatpush1.msra.mxu0 0.0
    %1930 = vmatprep.subr.mxu0 0.0
    %1931 = vmatpush1.msra.mxu0 0.0
    %1932 = vmatprep.subr.mxu0 0.0
    %1933 = vmatpush1.msra.mxu0 0.0
    %1934 = vmatprep.subr.mxu0 0.0
    %1935 = vmatpush1.msra.mxu0 0.0
    %1936 = vmatprep.subr.mxu0 0.0
    %1937 = vmatpush1.msra.mxu0 0.0
    %1938 = vmatprep.subr.mxu0 0.0
    %1939 = vmatpush1.msra.mxu0 0.0
    %1940 = vmatprep.subr.mxu0 0.0
    %1941 = vmatpush1.msra.mxu0 0.0
    %1942 = vmatprep.subr.mxu0 0.0
    %1943 = vmatpush1.msra.mxu0 0.0
    %1944 = vmatprep.subr.mxu0 0.0
    %1945 = vmatpush1.msra.mxu0 0.0
    %1946 = vmatprep.subr.mxu0 0.0
    %1947 = vmatpush1.msra.mxu0 0.0
    %1948 = vmatprep.subr.mxu0 0.0
    %1949 = vmatpush1.msra.mxu0 0.0
    %1950 = vmatprep.subr.mxu0 0.0
    %1951 = vmatpush1.msra.mxu0 0.0
    %1952 = vmatprep.subr.mxu0 0.0
    %1953 = vmatpush1.msra.mxu0 0.0
    %1954 = vmatprep.subr.mxu0 0.0
    %1955 = vmatpush1.msra.mxu0 0.0
    %1956 = vmatprep.subr.mxu0 0.0
    %1957 = vmatpush1.msra.mxu0 0.0
    %1958 = vmatprep.subr.mxu0 0.0
    %1959 = vmatpush1.msra.mxu0 0.0
    %1960 = vmatprep.subr.mxu0 0.0
    %1961 = vmatpush1.msra.mxu0 0.0
    %1962 = vmatprep.subr.mxu0 0.0
    %1963 = vmatpush1.msra.mxu0 0.0
    %1964 = vmatprep.subr.mxu0 0.0
    %1965 = vmatpush1.msra.mxu0 0.0
    %1966 = vmatprep.subr.mxu0 0.0
    %1967 = vmatpush1.msra.mxu0 0.0
    %1968 = vmatprep.subr.mxu0 0.0
    %1969 = vmatpush1.msra.mxu0 0.0
    %1970 = vmatprep.subr.mxu0 0.0
    %1971 = vmatpush1.msra.mxu0 0.0
    %1972 = vmatprep.subr.mxu0 0.0
    %1973 = vmatpush1.msra.mxu0 0.0
    %1974 = vmatprep.subr.mxu0 0.0
    %1975 = vmatpush1.msra.mxu0 0.0
    %1976 = vmatprep.subr.mxu0 0.0
    %1977 = vmatpush1.msra.mxu0 0.0
    %1978 = vmatprep.subr.mxu0 0.0
    %1979 = vmatpush1.msra.mxu0 0.0
    %1980 = vmatprep.subr.mxu0 0.0
    %1981 = vmatpush1.msra.mxu0 0.0
    %1982 = vmatprep.mubr.f32.mxu0 0.0
    %1983 = vmatmul.mubr.f32.gmra.mrb[0].mxu0 %v1916
    %v1984 = vpop.f32.mrb[0].mxu0
    %v1985 = vadd.f32 %v144, %v1984
    %v1986 = vpop.f32.mrb[0].mxu0
    %1987 = vdwg.mxu0
    %v1988 = vmax.f32 %v1985, 0.0
    %v1989 = vadd.f32 %v1836, %v1912
    %v1990 = vmul.f32 %v1989, 2.0
    %v1991 = vadd.f32 %v1760, %v1990
    %v1992 = vadd.f32 %v1991, %v1988
    %v1993 = vmul.f32 %v1992, 0.018518517
    %v1994 = vadd.f32 %v1686, %v1993
    %v1996 = vsel %vm146, %v1994, 0
    %1998 = vmatprep.subr.mxu0 0.0
    %1999 = vmatpush1.msra.mxu0 %v135
    %2000 = vmatprep.subr.mxu0 0.0
    %2001 = vmatpush1.msra.mxu0 %v136
    %2002 = vmatprep.subr.mxu0 0.0
    %2003 = vmatpush1.msra.mxu0 %v137
    %2004 = vmatprep.subr.mxu0 0.0
    %2005 = vmatpush1.msra.mxu0 %v138
    %2006 = vmatprep.subr.mxu0 0.0
    %2007 = vmatpush1.msra.mxu0 0.0
    %2008 = vmatprep.subr.mxu0 0.0
    %2009 = vmatpush1.msra.mxu0 0.0
    %2010 = vmatprep.subr.mxu0 0.0
    %2011 = vmatpush1.msra.mxu0 0.0
    %2012 = vmatprep.subr.mxu0 0.0
    %2013 = vmatpush1.msra.mxu0 0.0
    %2014 = vmatprep.subr.mxu0 0.0
    %2015 = vmatpush1.msra.mxu0 0.0
    %2016 = vmatprep.subr.mxu0 0.0
    %2017 = vmatpush1.msra.mxu0 0.0
    %2018 = vmatprep.subr.mxu0 0.0
    %2019 = vmatpush1.msra.mxu0 0.0
    %2020 = vmatprep.subr.mxu0 0.0
    %2021 = vmatpush1.msra.mxu0 0.0
    %2022 = vmatprep.subr.mxu0 0.0
    %2023 = vmatpush1.msra.mxu0 0.0
    %2024 = vmatprep.subr.mxu0 0.0
    %2025 = vmatpush1.msra.mxu0 0.0
    %2026 = vmatprep.subr.mxu0 0.0
    %2027 = vmatpush1.msra.mxu0 0.0
    %2028 = vmatprep.subr.mxu0 0.0
    %2029 = vmatpush1.msra.mxu0 0.0
    %2030 = vmatprep.subr.mxu0 0.0
    %2031 = vmatpush1.msra.mxu0 0.0
    %2032 = vmatprep.subr.mxu0 0.0
    %2033 = vmatpush1.msra.mxu0 0.0
    %2034 = vmatprep.subr.mxu0 0.0
    %2035 = vmatpush1.msra.mxu0 0.0
    %2036 = vmatprep.subr.mxu0 0.0
    %2037 = vmatpush1.msra.mxu0 0.0
    %2038 = vmatprep.subr.mxu0 0.0
    %2039 = vmatpush1.msra.mxu0 0.0
    %2040 = vmatprep.subr.mxu0 0.0
    %2041 = vmatpush1.msra.mxu0 0.0
    %2042 = vmatprep.subr.mxu0 0.0
    %2043 = vmatpush1.msra.mxu0 0.0
    %2044 = vmatprep.subr.mxu0 0.0
    %2045 = vmatpush1.msra.mxu0 0.0
    %2046 = vmatprep.subr.mxu0 0.0
    %2047 = vmatpush1.msra.mxu0 0.0
    %2048 = vmatprep.subr.mxu0 0.0
    %2049 = vmatpush1.msra.mxu0 0.0
    %2050 = vmatprep.subr.mxu0 0.0
    %2051 = vmatpush1.msra.mxu0 0.0
    %2052 = vmatprep.subr.mxu0 0.0
    %2053 = vmatpush1.msra.mxu0 0.0
    %2054 = vmatprep.subr.mxu0 0.0
    %2055 = vmatpush1.msra.mxu0 0.0
    %2056 = vmatprep.subr.mxu0 0.0
    %2057 = vmatpush1.msra.mxu0 0.0
    %2058 = vmatprep.subr.mxu0 0.0
    %2059 = vmatpush1.msra.mxu0 0.0
    %2060 = vmatprep.subr.mxu0 0.0
    %2061 = vmatpush1.msra.mxu0 0.0
    %2062 = vmatprep.mubr.f32.mxu0 0.0
    %2063 = vmatmul.mubr.f32.gmra.mrb[0].mxu0 %v1996
    %v2064 = vpop.f32.mrb[0].mxu0
    %v2065 = vadd.f32 %v144, %v2064
    %v2066 = vpop.f32.mrb[0].mxu0
    %2067 = vdwg.mxu0
    %v2068 = vmax.f32 %v2065, 0.0
    %v2069 = vmul.f32 %v2068, 0.055555552
    %v2070 = vadd.f32 %v1994, %v2069
    %v2072 = vsel %vm146, %v2070, 0
    %2074 = vmatprep.subr.mxu0 0.0
    %2075 = vmatpush1.msra.mxu0 %v135
    %2076 = vmatprep.subr.mxu0 0.0
    %2077 = vmatpush1.msra.mxu0 %v136
    %2078 = vmatprep.subr.mxu0 0.0
    %2079 = vmatpush1.msra.mxu0 %v137
    %2080 = vmatprep.subr.mxu0 0.0
    %2081 = vmatpush1.msra.mxu0 %v138
    %2082 = vmatprep.subr.mxu0 0.0
    %2083 = vmatpush1.msra.mxu0 0.0
    %2084 = vmatprep.subr.mxu0 0.0
    %2085 = vmatpush1.msra.mxu0 0.0
    %2086 = vmatprep.subr.mxu0 0.0
    %2087 = vmatpush1.msra.mxu0 0.0
    %2088 = vmatprep.subr.mxu0 0.0
    %2089 = vmatpush1.msra.mxu0 0.0
    %2090 = vmatprep.subr.mxu0 0.0
    %2091 = vmatpush1.msra.mxu0 0.0
    %2092 = vmatprep.subr.mxu0 0.0
    %2093 = vmatpush1.msra.mxu0 0.0
    %2094 = vmatprep.subr.mxu0 0.0
    %2095 = vmatpush1.msra.mxu0 0.0
    %2096 = vmatprep.subr.mxu0 0.0
    %2097 = vmatpush1.msra.mxu0 0.0
    %2098 = vmatprep.subr.mxu0 0.0
    %2099 = vmatpush1.msra.mxu0 0.0
    %2100 = vmatprep.subr.mxu0 0.0
    %2101 = vmatpush1.msra.mxu0 0.0
    %2102 = vmatprep.subr.mxu0 0.0
    %2103 = vmatpush1.msra.mxu0 0.0
    %2104 = vmatprep.subr.mxu0 0.0
    %2105 = vmatpush1.msra.mxu0 0.0
    %2106 = vmatprep.subr.mxu0 0.0
    %2107 = vmatpush1.msra.mxu0 0.0
    %2108 = vmatprep.subr.mxu0 0.0
    %2109 = vmatpush1.msra.mxu0 0.0
    %2110 = vmatprep.subr.mxu0 0.0
    %2111 = vmatpush1.msra.mxu0 0.0
    %2112 = vmatprep.subr.mxu0 0.0
    %2113 = vmatpush1.msra.mxu0 0.0
    %2114 = vmatprep.subr.mxu0 0.0
    %2115 = vmatpush1.msra.mxu0 0.0
    %2116 = vmatprep.subr.mxu0 0.0
    %2117 = vmatpush1.msra.mxu0 0.0
    %2118 = vmatprep.subr.mxu0 0.0
    %2119 = vmatpush1.msra.mxu0 0.0
    %2120 = vmatprep.subr.mxu0 0.0
    %2121 = vmatpush1.msra.mxu0 0.0
    %2122 = vmatprep.subr.mxu0 0.0
    %2123 = vmatpush1.msra.mxu0 0.0
    %2124 = vmatprep.subr.mxu0 0.0
    %2125 = vmatpush1.msra.mxu0 0.0
    %2126 = vmatprep.subr.mxu0 0.0
    %2127 = vmatpush1.msra.mxu0 0.0
    %2128 = vmatprep.subr.mxu0 0.0
    %2129 = vmatpush1.msra.mxu0 0.0
    %2130 = vmatprep.subr.mxu0 0.0
    %2131 = vmatpush1.msra.mxu0 0.0
    %2132 = vmatprep.subr.mxu0 0.0
    %2133 = vmatpush1.msra.mxu0 0.0
    %2134 = vmatprep.subr.mxu0 0.0
    %2135 = vmatpush1.msra.mxu0 0.0
    %2136 = vmatprep.subr.mxu0 0.0
    %2137 = vmatpush1.msra.mxu0 0.0
    %2138 = vmatprep.mubr.f32.mxu0 0.0
    %2139 = vmatmul.mubr.f32.gmra.mrb[0].mxu0 %v2072
    %v2140 = vpop.f32.mrb[0].mxu0
    %v2141 = vadd.f32 %v144, %v2140
    %v2142 = vpop.f32.mrb[0].mxu0
    %2143 = vdwg.mxu0
    %v2144 = vmax.f32 %v2141, 0.0
    %v2145 = vmul.f32 %v2144, 0.055555552
    %v2146 = vadd.f32 %v1994, %v2145
    %v2148 = vsel %vm146, %v2146, 0
    %2150 = vmatprep.subr.mxu0 0.0
    %2151 = vmatpush1.msra.mxu0 %v135
    %2152 = vmatprep.subr.mxu0 0.0
    %2153 = vmatpush1.msra.mxu0 %v136
    %2154 = vmatprep.subr.mxu0 0.0
    %2155 = vmatpush1.msra.mxu0 %v137
    %2156 = vmatprep.subr.mxu0 0.0
    %2157 = vmatpush1.msra.mxu0 %v138
    %2158 = vmatprep.subr.mxu0 0.0
    %2159 = vmatpush1.msra.mxu0 0.0
    %2160 = vmatprep.subr.mxu0 0.0
    %2161 = vmatpush1.msra.mxu0 0.0
    %2162 = vmatprep.subr.mxu0 0.0
    %2163 = vmatpush1.msra.mxu0 0.0
    %2164 = vmatprep.subr.mxu0 0.0
    %2165 = vmatpush1.msra.mxu0 0.0
    %2166 = vmatprep.subr.mxu0 0.0
    %2167 = vmatpush1.msra.mxu0 0.0
    %2168 = vmatprep.subr.mxu0 0.0
    %2169 = vmatpush1.msra.mxu0 0.0
    %2170 = vmatprep.subr.mxu0 0.0
    %2171 = vmatpush1.msra.mxu0 0.0
    %2172 = vmatprep.subr.mxu0 0.0
    %2173 = vmatpush1.msra.mxu0 0.0
    %2174 = vmatprep.subr.mxu0 0.0
    %2175 = vmatpush1.msra.mxu0 0.0
    %2176 = vmatprep.subr.mxu0 0.0
    %2177 = vmatpush1.msra.mxu0 0.0
    %2178 = vmatprep.subr.mxu0 0.0
    %2179 = vmatpush1.msra.mxu0 0.0
    %2180 = vmatprep.subr.mxu0 0.0
    %2181 = vmatpush1.msra.mxu0 0.0
    %2182 = vmatprep.subr.mxu0 0.0
    %2183 = vmatpush1.msra.mxu0 0.0
    %2184 = vmatprep.subr.mxu0 0.0
    %2185 = vmatpush1.msra.mxu0 0.0
    %2186 = vmatprep.subr.mxu0 0.0
    %2187 = vmatpush1.msra.mxu0 0.0
    %2188 = vmatprep.subr.mxu0 0.0
    %2189 = vmatpush1.msra.mxu0 0.0
    %2190 = vmatprep.subr.mxu0 0.0
    %2191 = vmatpush1.msra.mxu0 0.0
    %2192 = vmatprep.subr.mxu0 0.0
    %2193 = vmatpush1.msra.mxu0 0.0
    %2194 = vmatprep.subr.mxu0 0.0
    %2195 = vmatpush1.msra.mxu0 0.0
    %2196 = vmatprep.subr.mxu0 0.0
    %2197 = vmatpush1.msra.mxu0 0.0
    %2198 = vmatprep.subr.mxu0 0.0
    %2199 = vmatpush1.msra.mxu0 0.0
    %2200 = vmatprep.subr.mxu0 0.0
    %2201 = vmatpush1.msra.mxu0 0.0
    %2202 = vmatprep.subr.mxu0 0.0
    %2203 = vmatpush1.msra.mxu0 0.0
    %2204 = vmatprep.subr.mxu0 0.0
    %2205 = vmatpush1.msra.mxu0 0.0
    %2206 = vmatprep.subr.mxu0 0.0
    %2207 = vmatpush1.msra.mxu0 0.0
    %2208 = vmatprep.subr.mxu0 0.0
    %2209 = vmatpush1.msra.mxu0 0.0
    %2210 = vmatprep.subr.mxu0 0.0
    %2211 = vmatpush1.msra.mxu0 0.0
    %2212 = vmatprep.subr.mxu0 0.0
    %2213 = vmatpush1.msra.mxu0 0.0
    %2214 = vmatprep.mubr.f32.mxu0 0.0
    %2215 = vmatmul.mubr.f32.gmra.mrb[0].mxu0 %v2148
    %v2216 = vpop.f32.mrb[0].mxu0
    %v2217 = vadd.f32 %v144, %v2216
    %v2218 = vpop.f32.mrb[0].mxu0
    %2219 = vdwg.mxu0
    %v2220 = vmax.f32 %v2217, 0.0
    %v2221 = vmul.f32 %v2220, 0.111111104
    %v2222 = vadd.f32 %v1994, %v2221
    %v2224 = vsel %vm146, %v2222, 0
    %2226 = vmatprep.subr.mxu0 0.0
    %2227 = vmatpush1.msra.mxu0 %v135
    %2228 = vmatprep.subr.mxu0 0.0
    %2229 = vmatpush1.msra.mxu0 %v136
    %2230 = vmatprep.subr.mxu0 0.0
    %2231 = vmatpush1.msra.mxu0 %v137
    %2232 = vmatprep.subr.mxu0 0.0
    %2233 = vmatpush1.msra.mxu0 %v138
    %2234 = vmatprep.subr.mxu0 0.0
    %2235 = vmatpush1.msra.mxu0 0.0
    %2236 = vmatprep.subr.mxu0 0.0
    %2237 = vmatpush1.msra.mxu0 0.0
    %2238 = vmatprep.subr.mxu0 0.0
    %2239 = vmatpush1.msra.mxu0 0.0
    %2240 = vmatprep.subr.mxu0 0.0
    %2241 = vmatpush1.msra.mxu0 0.0
    %2242 = vmatprep.subr.mxu0 0.0
    %2243 = vmatpush1.msra.mxu0 0.0
    %2244 = vmatprep.subr.mxu0 0.0
    %2245 = vmatpush1.msra.mxu0 0.0
    %2246 = vmatprep.subr.mxu0 0.0
    %2247 = vmatpush1.msra.mxu0 0.0
    %2248 = vmatprep.subr.mxu0 0.0
    %2249 = vmatpush1.msra.mxu0 0.0
    %2250 = vmatprep.subr.mxu0 0.0
    %2251 = vmatpush1.msra.mxu0 0.0
    %2252 = vmatprep.subr.mxu0 0.0
    %2253 = vmatpush1.msra.mxu0 0.0
    %2254 = vmatprep.subr.mxu0 0.0
    %2255 = vmatpush1.msra.mxu0 0.0
    %2256 = vmatprep.subr.mxu0 0.0
    %2257 = vmatpush1.msra.mxu0 0.0
    %2258 = vmatprep.subr.mxu0 0.0
    %2259 = vmatpush1.msra.mxu0 0.0
    %2260 = vmatprep.subr.mxu0 0.0
    %2261 = vmatpush1.msra.mxu0 0.0
    %2262 = vmatprep.subr.mxu0 0.0
    %2263 = vmatpush1.msra.mxu0 0.0
    %2264 = vmatprep.subr.mxu0 0.0
    %2265 = vmatpush1.msra.mxu0 0.0
    %2266 = vmatprep.subr.mxu0 0.0
    %2267 = vmatpush1.msra.mxu0 0.0
    %2268 = vmatprep.subr.mxu0 0.0
    %2269 = vmatpush1.msra.mxu0 0.0
    %2270 = vmatprep.subr.mxu0 0.0
    %2271 = vmatpush1.msra.mxu0 0.0
    %2272 = vmatprep.subr.mxu0 0.0
    %2273 = vmatpush1.msra.mxu0 0.0
    %2274 = vmatprep.subr.mxu0 0.0
    %2275 = vmatpush1.msra.mxu0 0.0
    %2276 = vmatprep.subr.mxu0 0.0
    %2277 = vmatpush1.msra.mxu0 0.0
    %2278 = vmatprep.subr.mxu0 0.0
    %2279 = vmatpush1.msra.mxu0 0.0
    %2280 = vmatprep.subr.mxu0 0.0
    %2281 = vmatpush1.msra.mxu0 0.0
    %2282 = vmatprep.subr.mxu0 0.0
    %2283 = vmatpush1.msra.mxu0 0.0
    %2284 = vmatprep.subr.mxu0 0.0
    %2285 = vmatpush1.msra.mxu0 0.0
    %2286 = vmatprep.subr.mxu0 0.0
    %2287 = vmatpush1.msra.mxu0 0.0
    %2288 = vmatprep.subr.mxu0 0.0
    %2289 = vmatpush1.msra.mxu0 0.0
    %2290 = vmatprep.mubr.f32.mxu0 0.0
    %2291 = vmatmul.mubr.f32.gmra.mrb[0].mxu0 %v2224
    %v2292 = vpop.f32.mrb[0].mxu0
    %v2293 = vadd.f32 %v144, %v2292
    %v2294 = vpop.f32.mrb[0].mxu0
    %2295 = vdwg.mxu0
    %v2296 = vmax.f32 %v2293, 0.0
    %v2297 = vadd.f32 %v2144, %v2220
    %v2298 = vmul.f32 %v2297, 2.0
    %v2299 = vadd.f32 %v2068, %v2298
    %v2300 = vadd.f32 %v2299, %v2296
    %v2301 = vmul.f32 %v2300, 0.018518517
    %v2302 = vadd.f32 %v1994, %v2301
    %v2304 = vsel %vm146, %v2302, 0
    %2306 = vmatprep.subr.mxu0 0.0
    %2307 = vmatpush1.msra.mxu0 %v135
    %2308 = vmatprep.subr.mxu0 0.0
    %2309 = vmatpush1.msra.mxu0 %v136
    %2310 = vmatprep.subr.mxu0 0.0
    %2311 = vmatpush1.msra.mxu0 %v137
    %2312 = vmatprep.subr.mxu0 0.0
    %2313 = vmatpush1.msra.mxu0 %v138
    %2314 = vmatprep.subr.mxu0 0.0
    %2315 = vmatpush1.msra.mxu0 0.0
    %2316 = vmatprep.subr.mxu0 0.0
    %2317 = vmatpush1.msra.mxu0 0.0
    %2318 = vmatprep.subr.mxu0 0.0
    %2319 = vmatpush1.msra.mxu0 0.0
    %2320 = vmatprep.subr.mxu0 0.0
    %2321 = vmatpush1.msra.mxu0 0.0
    %2322 = vmatprep.subr.mxu0 0.0
    %2323 = vmatpush1.msra.mxu0 0.0
    %2324 = vmatprep.subr.mxu0 0.0
    %2325 = vmatpush1.msra.mxu0 0.0
    %2326 = vmatprep.subr.mxu0 0.0
    %2327 = vmatpush1.msra.mxu0 0.0
    %2328 = vmatprep.subr.mxu0 0.0
    %2329 = vmatpush1.msra.mxu0 0.0
    %2330 = vmatprep.subr.mxu0 0.0
    %2331 = vmatpush1.msra.mxu0 0.0
    %2332 = vmatprep.subr.mxu0 0.0
    %2333 = vmatpush1.msra.mxu0 0.0
    %2334 = vmatprep.subr.mxu0 0.0
    %2335 = vmatpush1.msra.mxu0 0.0
    %2336 = vmatprep.subr.mxu0 0.0
    %2337 = vmatpush1.msra.mxu0 0.0
    %2338 = vmatprep.subr.mxu0 0.0
    %2339 = vmatpush1.msra.mxu0 0.0
    %2340 = vmatprep.subr.mxu0 0.0
    %2341 = vmatpush1.msra.mxu0 0.0
    %2342 = vmatprep.subr.mxu0 0.0
    %2343 = vmatpush1.msra.mxu0 0.0
    %2344 = vmatprep.subr.mxu0 0.0
    %2345 = vmatpush1.msra.mxu0 0.0
    %2346 = vmatprep.subr.mxu0 0.0
    %2347 = vmatpush1.msra.mxu0 0.0
    %2348 = vmatprep.subr.mxu0 0.0
    %2349 = vmatpush1.msra.mxu0 0.0
    %2350 = vmatprep.subr.mxu0 0.0
    %2351 = vmatpush1.msra.mxu0 0.0
    %2352 = vmatprep.subr.mxu0 0.0
    %2353 = vmatpush1.msra.mxu0 0.0
    %2354 = vmatprep.subr.mxu0 0.0
    %2355 = vmatpush1.msra.mxu0 0.0
    %2356 = vmatprep.subr.mxu0 0.0
    %2357 = vmatpush1.msra.mxu0 0.0
    %2358 = vmatprep.subr.mxu0 0.0
    %2359 = vmatpush1.msra.mxu0 0.0
    %2360 = vmatprep.subr.mxu0 0.0
    %2361 = vmatpush1.msra.mxu0 0.0
    %2362 = vmatprep.subr.mxu0 0.0
    %2363 = vmatpush1.msra.mxu0 0.0
    %2364 = vmatprep.subr.mxu0 0.0
    %2365 = vmatpush1.msra.mxu0 0.0
    %2366 = vmatprep.subr.mxu0 0.0
    %2367 = vmatpush1.msra.mxu0 0.0
    %2368 = vmatprep.subr.mxu0 0.0
    %2369 = vmatpush1.msra.mxu0 0.0
    %2370 = vmatprep.mubr.f32.mxu0 0.0
    %2371 = vmatmul.mubr.f32.gmra.mrb[0].mxu0 %v2304
    %v2372 = vpop.f32.mrb[0].mxu0
    %v2373 = vadd.f32 %v144, %v2372
    %v2374 = vpop.f32.mrb[0].mxu0
    %2375 = vdwg.mxu0
    %v2376 = vmax.f32 %v2373, 0.0
    %v2377 = vmul.f32 %v2376, 0.055555552
    %v2378 = vadd.f32 %v2302, %v2377
    %v2380 = vsel %vm146, %v2378, 0
    %2382 = vmatprep.subr.mxu0 0.0
    %2383 = vmatpush1.msra.mxu0 %v135
    %2384 = vmatprep.subr.mxu0 0.0
    %2385 = vmatpush1.msra.mxu0 %v136
    %2386 = vmatprep.subr.mxu0 0.0
    %2387 = vmatpush1.msra.mxu0 %v137
    %2388 = vmatprep.subr.mxu0 0.0
    %2389 = vmatpush1.msra.mxu0 %v138
    %2390 = vmatprep.subr.mxu0 0.0
    %2391 = vmatpush1.msra.mxu0 0.0
    %2392 = vmatprep.subr.mxu0 0.0
    %2393 = vmatpush1.msra.mxu0 0.0
    %2394 = vmatprep.subr.mxu0 0.0
    %2395 = vmatpush1.msra.mxu0 0.0
    %2396 = vmatprep.subr.mxu0 0.0
    %2397 = vmatpush1.msra.mxu0 0.0
    %2398 = vmatprep.subr.mxu0 0.0
    %2399 = vmatpush1.msra.mxu0 0.0
    %2400 = vmatprep.subr.mxu0 0.0
    %2401 = vmatpush1.msra.mxu0 0.0
    %2402 = vmatprep.subr.mxu0 0.0
    %2403 = vmatpush1.msra.mxu0 0.0
    %2404 = vmatprep.subr.mxu0 0.0
    %2405 = vmatpush1.msra.mxu0 0.0
    %2406 = vmatprep.subr.mxu0 0.0
    %2407 = vmatpush1.msra.mxu0 0.0
    %2408 = vmatprep.subr.mxu0 0.0
    %2409 = vmatpush1.msra.mxu0 0.0
    %2410 = vmatprep.subr.mxu0 0.0
    %2411 = vmatpush1.msra.mxu0 0.0
    %2412 = vmatprep.subr.mxu0 0.0
    %2413 = vmatpush1.msra.mxu0 0.0
    %2414 = vmatprep.subr.mxu0 0.0
    %2415 = vmatpush1.msra.mxu0 0.0
    %2416 = vmatprep.subr.mxu0 0.0
    %2417 = vmatpush1.msra.mxu0 0.0
    %2418 = vmatprep.subr.mxu0 0.0
    %2419 = vmatpush1.msra.mxu0 0.0
    %2420 = vmatprep.subr.mxu0 0.0
    %2421 = vmatpush1.msra.mxu0 0.0
    %2422 = vmatprep.subr.mxu0 0.0
    %2423 = vmatpush1.msra.mxu0 0.0
    %2424 = vmatprep.subr.mxu0 0.0
    %2425 = vmatpush1.msra.mxu0 0.0
    %2426 = vmatprep.subr.mxu0 0.0
    %2427 = vmatpush1.msra.mxu0 0.0
    %2428 = vmatprep.subr.mxu0 0.0
    %2429 = vmatpush1.msra.mxu0 0.0
    %2430 = vmatprep.subr.mxu0 0.0
    %2431 = vmatpush1.msra.mxu0 0.0
    %2432 = vmatprep.subr.mxu0 0.0
    %2433 = vmatpush1.msra.mxu0 0.0
    %2434 = vmatprep.subr.mxu0 0.0
    %2435 = vmatpush1.msra.mxu0 0.0
    %2436 = vmatprep.subr.mxu0 0.0
    %2437 = vmatpush1.msra.mxu0 0.0
    %2438 = vmatprep.subr.mxu0 0.0
    %2439 = vmatpush1.msra.mxu0 0.0
    %2440 = vmatprep.subr.mxu0 0.0
    %2441 = vmatpush1.msra.mxu0 0.0
    %2442 = vmatprep.subr.mxu0 0.0
    %2443 = vmatpush1.msra.mxu0 0.0
    %2444 = vmatprep.subr.mxu0 0.0
    %2445 = vmatpush1.msra.mxu0 0.0
    %2446 = vmatprep.mubr.f32.mxu0 0.0
    %2447 = vmatmul.mubr.f32.gmra.mrb[0].mxu0 %v2380
    %v2448 = vpop.f32.mrb[0].mxu0
    %v2449 = vadd.f32 %v144, %v2448
    %v2450 = vpop.f32.mrb[0].mxu0
    %2451 = vdwg.mxu0
    %v2452 = vmax.f32 %v2449, 0.0
    %v2453 = vmul.f32 %v2452, 0.055555552
    %v2454 = vadd.f32 %v2302, %v2453
    %v2456 = vsel %vm146, %v2454, 0
    %2458 = vmatprep.subr.mxu0 0.0
    %2459 = vmatpush1.msra.mxu0 %v135
    %2460 = vmatprep.subr.mxu0 0.0
    %2461 = vmatpush1.msra.mxu0 %v136
    %2462 = vmatprep.subr.mxu0 0.0
    %2463 = vmatpush1.msra.mxu0 %v137
    %2464 = vmatprep.subr.mxu0 0.0
    %2465 = vmatpush1.msra.mxu0 %v138
    %2466 = vmatprep.subr.mxu0 0.0
    %2467 = vmatpush1.msra.mxu0 0.0
    %2468 = vmatprep.subr.mxu0 0.0
    %2469 = vmatpush1.msra.mxu0 0.0
    %2470 = vmatprep.subr.mxu0 0.0
    %2471 = vmatpush1.msra.mxu0 0.0
    %2472 = vmatprep.subr.mxu0 0.0
    %2473 = vmatpush1.msra.mxu0 0.0
    %2474 = vmatprep.subr.mxu0 0.0
    %2475 = vmatpush1.msra.mxu0 0.0
    %2476 = vmatprep.subr.mxu0 0.0
    %2477 = vmatpush1.msra.mxu0 0.0
    %2478 = vmatprep.subr.mxu0 0.0
    %2479 = vmatpush1.msra.mxu0 0.0
    %2480 = vmatprep.subr.mxu0 0.0
    %2481 = vmatpush1.msra.mxu0 0.0
    %2482 = vmatprep.subr.mxu0 0.0
    %2483 = vmatpush1.msra.mxu0 0.0
    %2484 = vmatprep.subr.mxu0 0.0
    %2485 = vmatpush1.msra.mxu0 0.0
    %2486 = vmatprep.subr.mxu0 0.0
    %2487 = vmatpush1.msra.mxu0 0.0
    %2488 = vmatprep.subr.mxu0 0.0
    %2489 = vmatpush1.msra.mxu0 0.0
    %2490 = vmatprep.subr.mxu0 0.0
    %2491 = vmatpush1.msra.mxu0 0.0
    %2492 = vmatprep.subr.mxu0 0.0
    %2493 = vmatpush1.msra.mxu0 0.0
    %2494 = vmatprep.subr.mxu0 0.0
    %2495 = vmatpush1.msra.mxu0 0.0
    %2496 = vmatprep.subr.mxu0 0.0
    %2497 = vmatpush1.msra.mxu0 0.0
    %2498 = vmatprep.subr.mxu0 0.0
    %2499 = vmatpush1.msra.mxu0 0.0
    %2500 = vmatprep.subr.mxu0 0.0
    %2501 = vmatpush1.msra.mxu0 0.0
    %2502 = vmatprep.subr.mxu0 0.0
    %2503 = vmatpush1.msra.mxu0 0.0
    %2504 = vmatprep.subr.mxu0 0.0
    %2505 = vmatpush1.msra.mxu0 0.0
    %2506 = vmatprep.subr.mxu0 0.0
    %2507 = vmatpush1.msra.mxu0 0.0
    %2508 = vmatprep.subr.mxu0 0.0
    %2509 = vmatpush1.msra.mxu0 0.0
    %2510 = vmatprep.subr.mxu0 0.0
    %2511 = vmatpush1.msra.mxu0 0.0
    %2512 = vmatprep.subr.mxu0 0.0
    %2513 = vmatpush1.msra.mxu0 0.0
    %2514 = vmatprep.subr.mxu0 0.0
    %2515 = vmatpush1.msra.mxu0 0.0
    %2516 = vmatprep.subr.mxu0 0.0
    %2517 = vmatpush1.msra.mxu0 0.0
    %2518 = vmatprep.subr.mxu0 0.0
    %2519 = vmatpush1.msra.mxu0 0.0
    %2520 = vmatprep.subr.mxu0 0.0
    %2521 = vmatpush1.msra.mxu0 0.0
    %2522 = vmatprep.mubr.f32.mxu0 0.0
    %2523 = vmatmul.mubr.f32.gmra.mrb[0].mxu0 %v2456
    %v2524 = vpop.f32.mrb[0].mxu0
    %v2525 = vadd.f32 %v144, %v2524
    %v2526 = vpop.f32.mrb[0].mxu0
    %2527 = vdwg.mxu0
    %v2528 = vmax.f32 %v2525, 0.0
    %v2529 = vmul.f32 %v2528, 0.111111104
    %v2530 = vadd.f32 %v2302, %v2529
    %v2532 = vsel %vm146, %v2530, 0
    %2534 = vmatprep.subr.mxu0 0.0
    %2535 = vmatpush1.msra.mxu0 %v135
    %2536 = vmatprep.subr.mxu0 0.0
    %2537 = vmatpush1.msra.mxu0 %v136
    %2538 = vmatprep.subr.mxu0 0.0
    %2539 = vmatpush1.msra.mxu0 %v137
    %2540 = vmatprep.subr.mxu0 0.0
    %2541 = vmatpush1.msra.mxu0 %v138
    %2542 = vmatprep.subr.mxu0 0.0
    %2543 = vmatpush1.msra.mxu0 0.0
    %2544 = vmatprep.subr.mxu0 0.0
    %2545 = vmatpush1.msra.mxu0 0.0
    %2546 = vmatprep.subr.mxu0 0.0
    %2547 = vmatpush1.msra.mxu0 0.0
    %2548 = vmatprep.subr.mxu0 0.0
    %2549 = vmatpush1.msra.mxu0 0.0
    %2550 = vmatprep.subr.mxu0 0.0
    %2551 = vmatpush1.msra.mxu0 0.0
    %2552 = vmatprep.subr.mxu0 0.0
    %2553 = vmatpush1.msra.mxu0 0.0
    %2554 = vmatprep.subr.mxu0 0.0
    %2555 = vmatpush1.msra.mxu0 0.0
    %2556 = vmatprep.subr.mxu0 0.0
    %2557 = vmatpush1.msra.mxu0 0.0
    %2558 = vmatprep.subr.mxu0 0.0
    %2559 = vmatpush1.msra.mxu0 0.0
    %2560 = vmatprep.subr.mxu0 0.0
    %2561 = vmatpush1.msra.mxu0 0.0
    %2562 = vmatprep.subr.mxu0 0.0
    %2563 = vmatpush1.msra.mxu0 0.0
    %2564 = vmatprep.subr.mxu0 0.0
    %2565 = vmatpush1.msra.mxu0 0.0
    %2566 = vmatprep.subr.mxu0 0.0
    %2567 = vmatpush1.msra.mxu0 0.0
    %2568 = vmatprep.subr.mxu0 0.0
    %2569 = vmatpush1.msra.mxu0 0.0
    %2570 = vmatprep.subr.mxu0 0.0
    %2571 = vmatpush1.msra.mxu0 0.0
    %2572 = vmatprep.subr.mxu0 0.0
    %2573 = vmatpush1.msra.mxu0 0.0
    %2574 = vmatprep.subr.mxu0 0.0
    %2575 = vmatpush1.msra.mxu0 0.0
    %2576 = vmatprep.subr.mxu0 0.0
    %2577 = vmatpush1.msra.mxu0 0.0
    %2578 = vmatprep.subr.mxu0 0.0
    %2579 = vmatpush1.msra.mxu0 0.0
    %2580 = vmatprep.subr.mxu0 0.0
    %2581 = vmatpush1.msra.mxu0 0.0
    %2582 = vmatprep.subr.mxu0 0.0
    %2583 = vmatpush1.msra.mxu0 0.0
    %2584 = vmatprep.subr.mxu0 0.0
    %2585 = vmatpush1.msra.mxu0 0.0
    %2586 = vmatprep.subr.mxu0 0.0
    %2587 = vmatpush1.msra.mxu0 0.0
    %2588 = vmatprep.subr.mxu0 0.0
    %2589 = vmatpush1.msra.mxu0 0.0
    %2590 = vmatprep.subr.mxu0 0.0
    %2591 = vmatpush1.msra.mxu0 0.0
    %2592 = vmatprep.subr.mxu0 0.0
    %2593 = vmatpush1.msra.mxu0 0.0
    %2594 = vmatprep.subr.mxu0 0.0
    %2595 = vmatpush1.msra.mxu0 0.0
    %2596 = vmatprep.subr.mxu0 0.0
    %2597 = vmatpush1.msra.mxu0 0.0
    %2598 = vmatprep.mubr.f32.mxu0 0.0
    %2599 = vmatmul.mubr.f32.gmra.mrb[0].mxu0 %v2532
    %v2600 = vpop.f32.mrb[0].mxu0
    %v2601 = vadd.f32 %v144, %v2600
    %v2602 = vpop.f32.mrb[0].mxu0
    %2603 = vdwg.mxu0
    %v2604 = vmax.f32 %v2601, 0.0
    %v2605 = vadd.f32 %v2452, %v2528
    %v2606 = vmul.f32 %v2605, 2.0
    %v2607 = vadd.f32 %v2376, %v2606
    %v2608 = vadd.f32 %v2607, %v2604
    %v2609 = vmul.f32 %v2608, 0.018518517
    %v2610 = vadd.f32 %v2302, %v2609
    %v2612 = vsel %vm146, %v2610, 0
    %2614 = vmatprep.subr.mxu0 0.0
    %2615 = vmatpush1.msra.mxu0 %v135
    %2616 = vmatprep.subr.mxu0 0.0
    %2617 = vmatpush1.msra.mxu0 %v136
    %2618 = vmatprep.subr.mxu0 0.0
    %2619 = vmatpush1.msra.mxu0 %v137
    %2620 = vmatprep.subr.mxu0 0.0
    %2621 = vmatpush1.msra.mxu0 %v138
    %2622 = vmatprep.subr.mxu0 0.0
    %2623 = vmatpush1.msra.mxu0 0.0
    %2624 = vmatprep.subr.mxu0 0.0
    %2625 = vmatpush1.msra.mxu0 0.0
    %2626 = vmatprep.subr.mxu0 0.0
    %2627 = vmatpush1.msra.mxu0 0.0
    %2628 = vmatprep.subr.mxu0 0.0
    %2629 = vmatpush1.msra.mxu0 0.0
    %2630 = vmatprep.subr.mxu0 0.0
    %2631 = vmatpush1.msra.mxu0 0.0
    %2632 = vmatprep.subr.mxu0 0.0
    %2633 = vmatpush1.msra.mxu0 0.0
    %2634 = vmatprep.subr.mxu0 0.0
    %2635 = vmatpush1.msra.mxu0 0.0
    %2636 = vmatprep.subr.mxu0 0.0
    %2637 = vmatpush1.msra.mxu0 0.0
    %2638 = vmatprep.subr.mxu0 0.0
    %2639 = vmatpush1.msra.mxu0 0.0
    %2640 = vmatprep.subr.mxu0 0.0
    %2641 = vmatpush1.msra.mxu0 0.0
    %2642 = vmatprep.subr.mxu0 0.0
    %2643 = vmatpush1.msra.mxu0 0.0
    %2644 = vmatprep.subr.mxu0 0.0
    %2645 = vmatpush1.msra.mxu0 0.0
    %2646 = vmatprep.subr.mxu0 0.0
    %2647 = vmatpush1.msra.mxu0 0.0
    %2648 = vmatprep.subr.mxu0 0.0
    %2649 = vmatpush1.msra.mxu0 0.0
    %2650 = vmatprep.subr.mxu0 0.0
    %2651 = vmatpush1.msra.mxu0 0.0
    %2652 = vmatprep.subr.mxu0 0.0
    %2653 = vmatpush1.msra.mxu0 0.0
    %2654 = vmatprep.subr.mxu0 0.0
    %2655 = vmatpush1.msra.mxu0 0.0
    %2656 = vmatprep.subr.mxu0 0.0
    %2657 = vmatpush1.msra.mxu0 0.0
    %2658 = vmatprep.subr.mxu0 0.0
    %2659 = vmatpush1.msra.mxu0 0.0
    %2660 = vmatprep.subr.mxu0 0.0
    %2661 = vmatpush1.msra.mxu0 0.0
    %2662 = vmatprep.subr.mxu0 0.0
    %2663 = vmatpush1.msra.mxu0 0.0
    %2664 = vmatprep.subr.mxu0 0.0
    %2665 = vmatpush1.msra.mxu0 0.0
    %2666 = vmatprep.subr.mxu0 0.0
    %2667 = vmatpush1.msra.mxu0 0.0
    %2668 = vmatprep.subr.mxu0 0.0
    %2669 = vmatpush1.msra.mxu0 0.0
    %2670 = vmatprep.subr.mxu0 0.0
    %2671 = vmatpush1.msra.mxu0 0.0
    %2672 = vmatprep.subr.mxu0 0.0
    %2673 = vmatpush1.msra.mxu0 0.0
    %2674 = vmatprep.subr.mxu0 0.0
    %2675 = vmatpush1.msra.mxu0 0.0
    %2676 = vmatprep.subr.mxu0 0.0
    %2677 = vmatpush1.msra.mxu0 0.0
    %2678 = vmatprep.mubr.f32.mxu0 0.0
    %2679 = vmatmul.mubr.f32.gmra.mrb[0].mxu0 %v2612
    %v2680 = vpop.f32.mrb[0].mxu0
    %v2681 = vadd.f32 %v144, %v2680
    %v2682 = vpop.f32.mrb[0].mxu0
    %2683 = vdwg.mxu0
    %v2684 = vmax.f32 %v2681, 0.0
    %v2685 = vmul.f32 %v2684, 0.055555552
    %v2686 = vadd.f32 %v2610, %v2685
    %v2688 = vsel %vm146, %v2686, 0
    %2690 = vmatprep.subr.mxu0 0.0
    %2691 = vmatpush1.msra.mxu0 %v135
    %2692 = vmatprep.subr.mxu0 0.0
    %2693 = vmatpush1.msra.mxu0 %v136
    %2694 = vmatprep.subr.mxu0 0.0
    %2695 = vmatpush1.msra.mxu0 %v137
    %2696 = vmatprep.subr.mxu0 0.0
    %2697 = vmatpush1.msra.mxu0 %v138
    %2698 = vmatprep.subr.mxu0 0.0
    %2699 = vmatpush1.msra.mxu0 0.0
    %2700 = vmatprep.subr.mxu0 0.0
    %2701 = vmatpush1.msra.mxu0 0.0
    %2702 = vmatprep.subr.mxu0 0.0
    %2703 = vmatpush1.msra.mxu0 0.0
    %2704 = vmatprep.subr.mxu0 0.0
    %2705 = vmatpush1.msra.mxu0 0.0
    %2706 = vmatprep.subr.mxu0 0.0
    %2707 = vmatpush1.msra.mxu0 0.0
    %2708 = vmatprep.subr.mxu0 0.0
    %2709 = vmatpush1.msra.mxu0 0.0
    %2710 = vmatprep.subr.mxu0 0.0
    %2711 = vmatpush1.msra.mxu0 0.0
    %2712 = vmatprep.subr.mxu0 0.0
    %2713 = vmatpush1.msra.mxu0 0.0
    %2714 = vmatprep.subr.mxu0 0.0
    %2715 = vmatpush1.msra.mxu0 0.0
    %2716 = vmatprep.subr.mxu0 0.0
    %2717 = vmatpush1.msra.mxu0 0.0
    %2718 = vmatprep.subr.mxu0 0.0
    %2719 = vmatpush1.msra.mxu0 0.0
    %2720 = vmatprep.subr.mxu0 0.0
    %2721 = vmatpush1.msra.mxu0 0.0
    %2722 = vmatprep.subr.mxu0 0.0
    %2723 = vmatpush1.msra.mxu0 0.0
    %2724 = vmatprep.subr.mxu0 0.0
    %2725 = vmatpush1.msra.mxu0 0.0
    %2726 = vmatprep.subr.mxu0 0.0
    %2727 = vmatpush1.msra.mxu0 0.0
    %2728 = vmatprep.subr.mxu0 0.0
    %2729 = vmatpush1.msra.mxu0 0.0
    %2730 = vmatprep.subr.mxu0 0.0
    %2731 = vmatpush1.msra.mxu0 0.0
    %2732 = vmatprep.subr.mxu0 0.0
    %2733 = vmatpush1.msra.mxu0 0.0
    %2734 = vmatprep.subr.mxu0 0.0
    %2735 = vmatpush1.msra.mxu0 0.0
    %2736 = vmatprep.subr.mxu0 0.0
    %2737 = vmatpush1.msra.mxu0 0.0
    %2738 = vmatprep.subr.mxu0 0.0
    %2739 = vmatpush1.msra.mxu0 0.0
    %2740 = vmatprep.subr.mxu0 0.0
    %2741 = vmatpush1.msra.mxu0 0.0
    %2742 = vmatprep.subr.mxu0 0.0
    %2743 = vmatpush1.msra.mxu0 0.0
    %2744 = vmatprep.subr.mxu0 0.0
    %2745 = vmatpush1.msra.mxu0 0.0
    %2746 = vmatprep.subr.mxu0 0.0
    %2747 = vmatpush1.msra.mxu0 0.0
    %2748 = vmatprep.subr.mxu0 0.0
    %2749 = vmatpush1.msra.mxu0 0.0
    %2750 = vmatprep.subr.mxu0 0.0
    %2751 = vmatpush1.msra.mxu0 0.0
    %2752 = vmatprep.subr.mxu0 0.0
    %2753 = vmatpush1.msra.mxu0 0.0
    %2754 = vmatprep.mubr.f32.mxu0 0.0
    %2755 = vmatmul.mubr.f32.gmra.mrb[0].mxu0 %v2688
    %v2756 = vpop.f32.mrb[0].mxu0
    %v2757 = vadd.f32 %v144, %v2756
    %v2758 = vpop.f32.mrb[0].mxu0
    %2759 = vdwg.mxu0
    %v2760 = vmax.f32 %v2757, 0.0
    %v2761 = vmul.f32 %v2760, 0.055555552
    %v2762 = vadd.f32 %v2610, %v2761
    %v2764 = vsel %vm146, %v2762, 0
    %2766 = vmatprep.subr.mxu0 0.0
    %2767 = vmatpush1.msra.mxu0 %v135
    %2768 = vmatprep.subr.mxu0 0.0
    %2769 = vmatpush1.msra.mxu0 %v136
    %2770 = vmatprep.subr.mxu0 0.0
    %2771 = vmatpush1.msra.mxu0 %v137
    %2772 = vmatprep.subr.mxu0 0.0
    %2773 = vmatpush1.msra.mxu0 %v138
    %2774 = vmatprep.subr.mxu0 0.0
    %2775 = vmatpush1.msra.mxu0 0.0
    %2776 = vmatprep.subr.mxu0 0.0
    %2777 = vmatpush1.msra.mxu0 0.0
    %2778 = vmatprep.subr.mxu0 0.0
    %2779 = vmatpush1.msra.mxu0 0.0
    %2780 = vmatprep.subr.mxu0 0.0
    %2781 = vmatpush1.msra.mxu0 0.0
    %2782 = vmatprep.subr.mxu0 0.0
    %2783 = vmatpush1.msra.mxu0 0.0
    %2784 = vmatprep.subr.mxu0 0.0
    %2785 = vmatpush1.msra.mxu0 0.0
    %2786 = vmatprep.subr.mxu0 0.0
    %2787 = vmatpush1.msra.mxu0 0.0
    %2788 = vmatprep.subr.mxu0 0.0
    %2789 = vmatpush1.msra.mxu0 0.0
    %2790 = vmatprep.subr.mxu0 0.0
    %2791 = vmatpush1.msra.mxu0 0.0
    %2792 = vmatprep.subr.mxu0 0.0
    %2793 = vmatpush1.msra.mxu0 0.0
    %2794 = vmatprep.subr.mxu0 0.0
    %2795 = vmatpush1.msra.mxu0 0.0
    %2796 = vmatprep.subr.mxu0 0.0
    %2797 = vmatpush1.msra.mxu0 0.0
    %2798 = vmatprep.subr.mxu0 0.0
    %2799 = vmatpush1.msra.mxu0 0.0
    %2800 = vmatprep.subr.mxu0 0.0
    %2801 = vmatpush1.msra.mxu0 0.0
    %2802 = vmatprep.subr.mxu0 0.0
    %2803 = vmatpush1.msra.mxu0 0.0
    %2804 = vmatprep.subr.mxu0 0.0
    %2805 = vmatpush1.msra.mxu0 0.0
    %2806 = vmatprep.subr.mxu0 0.0
    %2807 = vmatpush1.msra.mxu0 0.0
    %2808 = vmatprep.subr.mxu0 0.0
    %2809 = vmatpush1.msra.mxu0 0.0
    %2810 = vmatprep.subr.mxu0 0.0
    %2811 = vmatpush1.msra.mxu0 0.0
    %2812 = vmatprep.subr.mxu0 0.0
    %2813 = vmatpush1.msra.mxu0 0.0
    %2814 = vmatprep.subr.mxu0 0.0
    %2815 = vmatpush1.msra.mxu0 0.0
    %2816 = vmatprep.subr.mxu0 0.0
    %2817 = vmatpush1.msra.mxu0 0.0
    %2818 = vmatprep.subr.mxu0 0.0
    %2819 = vmatpush1.msra.mxu0 0.0
    %2820 = vmatprep.subr.mxu0 0.0
    %2821 = vmatpush1.msra.mxu0 0.0
    %2822 = vmatprep.subr.mxu0 0.0
    %2823 = vmatpush1.msra.mxu0 0.0
    %2824 = vmatprep.subr.mxu0 0.0
    %2825 = vmatpush1.msra.mxu0 0.0
    %2826 = vmatprep.subr.mxu0 0.0
    %2827 = vmatpush1.msra.mxu0 0.0
    %2828 = vmatprep.subr.mxu0 0.0
    %2829 = vmatpush1.msra.mxu0 0.0
    %2830 = vmatprep.mubr.f32.mxu0 0.0
    %2831 = vmatmul.mubr.f32.gmra.mrb[0].mxu0 %v2764
    %v2832 = vpop.f32.mrb[0].mxu0
    %v2833 = vadd.f32 %v144, %v2832
    %v2834 = vpop.f32.mrb[0].mxu0
    %2835 = vdwg.mxu0
    %v2836 = vmax.f32 %v2833, 0.0
    %v2837 = vmul.f32 %v2836, 0.111111104
    %v2838 = vadd.f32 %v2610, %v2837
    %v2840 = vsel %vm146, %v2838, 0
    %2842 = vmatprep.subr.mxu0 0.0
    %2843 = vmatpush1.msra.mxu0 %v135
    %2844 = vmatprep.subr.mxu0 0.0
    %2845 = vmatpush1.msra.mxu0 %v136
    %2846 = vmatprep.subr.mxu0 0.0
    %2847 = vmatpush1.msra.mxu0 %v137
    %2848 = vmatprep.subr.mxu0 0.0
    %2849 = vmatpush1.msra.mxu0 %v138
    %2850 = vmatprep.subr.mxu0 0.0
    %2851 = vmatpush1.msra.mxu0 0.0
    %2852 = vmatprep.subr.mxu0 0.0
    %2853 = vmatpush1.msra.mxu0 0.0
    %2854 = vmatprep.subr.mxu0 0.0
    %2855 = vmatpush1.msra.mxu0 0.0
    %2856 = vmatprep.subr.mxu0 0.0
    %2857 = vmatpush1.msra.mxu0 0.0
    %2858 = vmatprep.subr.mxu0 0.0
    %2859 = vmatpush1.msra.mxu0 0.0
    %2860 = vmatprep.subr.mxu0 0.0
    %2861 = vmatpush1.msra.mxu0 0.0
    %2862 = vmatprep.subr.mxu0 0.0
    %2863 = vmatpush1.msra.mxu0 0.0
    %2864 = vmatprep.subr.mxu0 0.0
    %2865 = vmatpush1.msra.mxu0 0.0
    %2866 = vmatprep.subr.mxu0 0.0
    %2867 = vmatpush1.msra.mxu0 0.0
    %2868 = vmatprep.subr.mxu0 0.0
    %2869 = vmatpush1.msra.mxu0 0.0
    %2870 = vmatprep.subr.mxu0 0.0
    %2871 = vmatpush1.msra.mxu0 0.0
    %2872 = vmatprep.subr.mxu0 0.0
    %2873 = vmatpush1.msra.mxu0 0.0
    %2874 = vmatprep.subr.mxu0 0.0
    %2875 = vmatpush1.msra.mxu0 0.0
    %2876 = vmatprep.subr.mxu0 0.0
    %2877 = vmatpush1.msra.mxu0 0.0
    %2878 = vmatprep.subr.mxu0 0.0
    %2879 = vmatpush1.msra.mxu0 0.0
    %2880 = vmatprep.subr.mxu0 0.0
    %2881 = vmatpush1.msra.mxu0 0.0
    %2882 = vmatprep.subr.mxu0 0.0
    %2883 = vmatpush1.msra.mxu0 0.0
    %2884 = vmatprep.subr.mxu0 0.0
    %2885 = vmatpush1.msra.mxu0 0.0
    %2886 = vmatprep.subr.mxu0 0.0
    %2887 = vmatpush1.msra.mxu0 0.0
    %2888 = vmatprep.subr.mxu0 0.0
    %2889 = vmatpush1.msra.mxu0 0.0
    %2890 = vmatprep.subr.mxu0 0.0
    %2891 = vmatpush1.msra.mxu0 0.0
    %2892 = vmatprep.subr.mxu0 0.0
    %2893 = vmatpush1.msra.mxu0 0.0
    %2894 = vmatprep.subr.mxu0 0.0
    %2895 = vmatpush1.msra.mxu0 0.0
    %2896 = vmatprep.subr.mxu0 0.0
    %2897 = vmatpush1.msra.mxu0 0.0
    %2898 = vmatprep.subr.mxu0 0.0
    %2899 = vmatpush1.msra.mxu0 0.0
    %2900 = vmatprep.subr.mxu0 0.0
    %2901 = vmatpush1.msra.mxu0 0.0
    %2902 = vmatprep.subr.mxu0 0.0
    %2903 = vmatpush1.msra.mxu0 0.0
    %2904 = vmatprep.subr.mxu0 0.0
    %2905 = vmatpush1.msra.mxu0 0.0
    %2906 = vmatprep.mubr.f32.mxu0 0.0
    %2907 = vmatmul.mubr.f32.gmra.mrb[0].mxu0 %v2840
    %v2908 = vpop.f32.mrb[0].mxu0
    %v2909 = vadd.f32 %v144, %v2908
    %v2910 = vpop.f32.mrb[0].mxu0
    %2911 = vdwg.mxu0
    %v2912 = vmax.f32 %v2909, 0.0
    %v2913 = vadd.f32 %v2760, %v2836
    %v2914 = vmul.f32 %v2913, 2.0
    %v2915 = vadd.f32 %v2684, %v2914
    %v2916 = vadd.f32 %v2915, %v2912
    %v2917 = vmul.f32 %v2916, 0.018518517
    %v2918 = vadd.f32 %v2610, %v2917
    %v2919 = vld [vmem:[%s5] sm:$0xff]
    %v2920 = vld [vmem:[%s5 + $0x8] sm:$0xff]
    %v2921 = vld [vmem:[%s5 + $0x10] sm:$0xff]
    %v2922 = vld [vmem:[%s5 + $0x18] sm:$0xff]
    %v2923 = vld [vmem:[%s6] sm:$0x1]
    %v2925 = vlaneseq
    %v2926 = vshrl.u32 %v2925, 7
    %v2927 = vsub.s32 0, %v2926
    %v2928 = vrot.slane %v2923, %v2927
    %v2931 = vsel %vm146, %v2918, 0
    %2933 = vmatprep.subr.mxu0 0.0
    %2934 = vmatpush1.msra.mxu0 %v2919
    %2935 = vmatprep.subr.mxu0 0.0
    %2936 = vmatpush1.msra.mxu0 %v2920
    %2937 = vmatprep.subr.mxu0 0.0
    %2938 = vmatpush1.msra.mxu0 %v2921
    %2939 = vmatprep.subr.mxu0 0.0
    %2940 = vmatpush1.msra.mxu0 %v2922
    %2941 = vmatprep.subr.mxu0 0.0
    %2942 = vmatpush1.msra.mxu0 0.0
    %2943 = vmatprep.subr.mxu0 0.0
    %2944 = vmatpush1.msra.mxu0 0.0
    %2945 = vmatprep.subr.mxu0 0.0
    %2946 = vmatpush1.msra.mxu0 0.0
    %2947 = vmatprep.subr.mxu0 0.0
    %2948 = vmatpush1.msra.mxu0 0.0
    %2949 = vmatprep.subr.mxu0 0.0
    %2950 = vmatpush1.msra.mxu0 0.0
    %2951 = vmatprep.subr.mxu0 0.0
    %2952 = vmatpush1.msra.mxu0 0.0
    %2953 = vmatprep.subr.mxu0 0.0
    %2954 = vmatpush1.msra.mxu0 0.0
    %2955 = vmatprep.subr.mxu0 0.0
    %2956 = vmatpush1.msra.mxu0 0.0
    %2957 = vmatprep.subr.mxu0 0.0
    %2958 = vmatpush1.msra.mxu0 0.0
    %2959 = vmatprep.subr.mxu0 0.0
    %2960 = vmatpush1.msra.mxu0 0.0
    %2961 = vmatprep.subr.mxu0 0.0
    %2962 = vmatpush1.msra.mxu0 0.0
    %2963 = vmatprep.subr.mxu0 0.0
    %2964 = vmatpush1.msra.mxu0 0.0
    %2965 = vmatprep.subr.mxu0 0.0
    %2966 = vmatpush1.msra.mxu0 0.0
    %2967 = vmatprep.subr.mxu0 0.0
    %2968 = vmatpush1.msra.mxu0 0.0
    %2969 = vmatprep.subr.mxu0 0.0
    %2970 = vmatpush1.msra.mxu0 0.0
    %2971 = vmatprep.subr.mxu0 0.0
    %2972 = vmatpush1.msra.mxu0 0.0
    %2973 = vmatprep.subr.mxu0 0.0
    %2974 = vmatpush1.msra.mxu0 0.0
    %2975 = vmatprep.subr.mxu0 0.0
    %2976 = vmatpush1.msra.mxu0 0.0
    %2977 = vmatprep.subr.mxu0 0.0
    %2978 = vmatpush1.msra.mxu0 0.0
    %2979 = vmatprep.subr.mxu0 0.0
    %2980 = vmatpush1.msra.mxu0 0.0
    %2981 = vmatprep.subr.mxu0 0.0
    %2982 = vmatpush1.msra.mxu0 0.0
    %2983 = vmatprep.subr.mxu0 0.0
    %2984 = vmatpush1.msra.mxu0 0.0
    %2985 = vmatprep.subr.mxu0 0.0
    %2986 = vmatpush1.msra.mxu0 0.0
    %2987 = vmatprep.subr.mxu0 0.0
    %2988 = vmatpush1.msra.mxu0 0.0
    %2989 = vmatprep.subr.mxu0 0.0
    %2990 = vmatpush1.msra.mxu0 0.0
    %2991 = vmatprep.subr.mxu0 0.0
    %2992 = vmatpush1.msra.mxu0 0.0
    %2993 = vmatprep.subr.mxu0 0.0
    %2994 = vmatpush1.msra.mxu0 0.0
    %2995 = vmatprep.subr.mxu0 0.0
    %2996 = vmatpush1.msra.mxu0 0.0
    %2997 = vmatprep.mubr.f32.mxu0 0.0
    %2998 = vmatmul.mubr.f32.gmra.mrb[0].mxu0 %v2931
    %v2999 = vpop.f32.mrb[0].mxu0
    %v3000 = vadd.f32 %v2928, %v2999
    %v3001 = vpop.f32.mrb[0].mxu0
    %3002 = vdwg.mxu0
    %vm3003 = vcmask 58368
    %3004 = vst.msk [vmem:[#allocation7] sm:$0x3] %vm3003, %v3000
    // Predicated region
    $region38: #{tpu_custom_call.1} parent=1 // pred_check
      _
    $region39: #{tpu_custom_call.1} parent=1 // pred_check_branch
      %3006 = sbr.rel (0) target = $region41
    $region40: #{tpu_custom_call.1} parent=1 // pred_region
      %s3008 = ssub.s32 32, 32
      %3009 = vsyncadd [#allocation4], %s3008
      %s3011 = sshll.u32 [#allocation7], 4
      %s3012 = int_to_ptr.vmem [resolvable:$true] %s3011
      %3014 = dma.vmem_to_hbm [thread:$0]  %s3012, 32, %s7, [#allocation4]
    $region41: #{tpu_custom_call.1} parent=1 // pred_fallthru
      _
    // Predicated region
    $region42: #{tpu_custom_call.1} parent=1 // pred_check
      _
    $region43: #{tpu_custom_call.1} parent=1 // pred_check_branch
      %3016 = sbr.rel (0) target = $region45
    $region44: #{tpu_custom_call.1} parent=1 // pred_region
      %3017 = dma.done [#allocation4], 32
    $region45: #{tpu_custom_call.1} parent=1 // pred_fallthru
      _
    %3018 = vsyncpa [#allocation3], 1
    %3019 = vsyncpa [#allocation6], 1
    %3020 = vsyncpa [#allocation4], 1

</llo_original>
